<compile_context>
chip_gen: v6e
topology: v6e:2x2x1
jax: 0.10.0
libtpu: 0.0.40
codegen_flags: <defaults>
</compile_context>

<pallas_src>
import jax
import jax.numpy as jnp
from jax import lax
from jax.experimental import pallas as pl
from jax.experimental.pallas import tpu as pltpu


def _make_conv_kernel(KH, KW, OH, OW, Cin, Cout):
    def conv_kernel(x_ref, w_ref, b_ref, o_ref):
        # x_ref: (1, H, W, Cin)      one batch element (NHWC)
        # w_ref: (Cout, KH*KW*Cin)   flattened weights, (kh, kw, ci)-ordered cols
        # b_ref: (Cout, 1)
        # o_ref: (1, Cout, OH*OW)    lane-dense output tile (spatial on lanes)
        x = x_ref[0]                                         # (H, W, Cin)

        # im2col: build ONE (OH*OW, KH*KW*Cin) patch matrix.  Column order is
        # (kh, kw, ci), matching the flattened weight slab.
        pieces = []
        for kh in range(KH):
            for kw in range(KW):
                piece = x[kh:kh + OH, kw:kw + OW, :]         # (OH, OW, Cin)
                pieces.append(piece.reshape(OH * OW, Cin))   # (OH*OW, Cin)
        patches = jnp.concatenate(pieces, axis=1)            # (OH*OW, KH*KW*Cin)

        # Single GEMM, minor-minor contraction (same pattern as q @ k.T):
        # (Cout, K) x (OH*OW, K) -> (Cout, OH*OW); spatial (196) on lanes.
        out = lax.dot_general(
            w_ref[...], patches,
            dimension_numbers=(((1,), (1,)), ((), ())),
            preferred_element_type=jnp.float32,
        )
        out = out + b_ref[...]                               # (Cout, 1) lane-broadcast
        o_ref[0] = out.astype(o_ref.dtype)

    return conv_kernel


@jax.jit
def conv2d_pallas(x_nchw, weight, bias):
    """Conv2d, stride 1, no padding (PyTorch semantics).

    x_nchw : (N, Cin, H, W)       float32
    weight : (Cout, Cin, KH, KW)  PyTorch OIHW layout
    bias   : (Cout,)
    returns: (N, Cout, OH, OW)
    """
    N, Cin, H, W = x_nchw.shape
    Cout, _, KH, KW = weight.shape
    OH, OW = H - KH + 1, W - KW + 1

    # Tiny input relayout (6 KB) fused into the same XLA program by jit.
    x_nhwc = jnp.transpose(x_nchw, (0, 2, 3, 1))                       # (N, H, W, Cin)
    # Flatten weights to a single 2-D slab with (kh, kw, ci)-ordered columns.
    w2d = jnp.transpose(weight, (0, 2, 3, 1)).reshape(Cout, KH * KW * Cin)
    b2d = bias.reshape(Cout, 1)

    kernel = _make_conv_kernel(KH, KW, OH, OW, Cin, Cout)

    out_flat = pl.pallas_call(
        kernel,
        out_shape=jax.ShapeDtypeStruct((N, Cout, OH * OW), x_nchw.dtype),
        grid_spec=pltpu.PrefetchScalarGridSpec(
            num_scalar_prefetch=0,
            grid=(N,),
            in_specs=[
                pl.BlockSpec((1, H, W, Cin), lambda b: (b, 0, 0, 0)),
                pl.BlockSpec((Cout, KH * KW * Cin), lambda b: (0, 0)),
                pl.BlockSpec((Cout, 1), lambda b: (0, 0)),
            ],
            out_specs=pl.BlockSpec((1, Cout, OH * OW), lambda b: (b, 0, 0)),
        ),
        compiler_params=pltpu.CompilerParams(
            dimension_semantics=("parallel",),
        ),
    )(x_nhwc, w2d, b2d)

    # (N, Cout, OH*OW) -> (N, Cout, OH, OW): a free reshape, no transpose.
    return out_flat.reshape(N, Cout, OH, OW)


if __name__ == "__main__":
    key = jax.random.PRNGKey(0)
    k_x, k_w, k_b = jax.random.split(key, 3)

    # Shapes consistent with Conv2d(3, 5, (3, 3)): NCHW input (2, 3, 16, 16).
    N, Cin, H, W = 2, 3, 16, 16
    Cout, KH, KW = 5, 3, 3

    x = jax.random.normal(k_x, (N, Cin, H, W), dtype=jnp.float32)
    # Deterministic parameter init (PyTorch-like uniform scale, not a checkpoint).
    fan_in = Cin * KH * KW
    bound = 1.0 / (fan_in ** 0.5)
    weight = jax.random.uniform(k_w, (Cout, Cin, KH, KW),
                                minval=-bound, maxval=bound, dtype=jnp.float32)
    bias = jax.random.uniform(k_b, (Cout,),
                              minval=-bound, maxval=bound, dtype=jnp.float32)

    out = conv2d_pallas(x, weight, bias)
    out = jax.block_until_ready(out)
    assert out.shape == (N, Cout, H - KH + 1, W - KW + 1)

    # Sanity check against XLA's conv (same cross-correlation semantics).
    ref = lax.conv_general_dilated(
        x, weight, window_strides=(1, 1), padding="VALID",
        dimension_numbers=("NCHW", "OIHW", "NCHW"),
    ) + bias.reshape(1, Cout, 1, 1)
    assert jnp.allclose(out, ref, atol=1e-4, rtol=1e-4), "mismatch vs reference conv"

    print("KERNEL_OK")
</pallas_src>

<mosaic_0001>
module attributes {stable_mosaic.version = 11 : i64} {
  func.func @conv_kernel(%arg0: i32, %arg1: memref<1x16x16x3xf32, #tpu.memory_space<vmem>>, %arg2: memref<5x27xf32, #tpu.memory_space<vmem>>, %arg3: memref<5x1xf32, #tpu.memory_space<vmem>>, %arg4: memref<1x5x196xf32, #tpu.memory_space<vmem>>) attributes {dimension_semantics = [#tpu.dimension_semantics<parallel>], iteration_bounds = array<i64: 2>, scalar_prefetch = 0 : i64, scratch_operands = 0 : i64, tpu.core_type = #tpu.core_type<tc>, window_params = [{transform_indices = @transform_0, window_bounds = array<i64: 1, 16, 16, 3>}, {pipeline_mode = #tpu.pipeline_mode<synchronous>, transform_indices = @transform_1, window_bounds = array<i64: 5, 27>}, {pipeline_mode = #tpu.pipeline_mode<synchronous>, transform_indices = @transform_2, window_bounds = array<i64: 5, 1>}, {transform_indices = @transform_3, window_bounds = array<i64: 1, 5, 196>}]} {
    %c0 = arith.constant 0 : index
    %c0_0 = arith.constant 0 : index
    %c0_1 = arith.constant 0 : index
    %c0_2 = arith.constant 0 : index
    %0 = vector.load %arg1[%c0, %c0_0, %c0_1, %c0_2] : memref<1x16x16x3xf32, #tpu.memory_space<vmem>>, vector<1x16x16x3xf32>
    %1 = vector.shape_cast %0 : vector<1x16x16x3xf32> to vector<16x16x3xf32>
    %2 = vector.extract_strided_slice %1 {offsets = [0, 0, 0], sizes = [14, 14, 3], strides = [1, 1, 1]} : vector<16x16x3xf32> to vector<14x14x3xf32>
    %3 = vector.shape_cast %2 : vector<14x14x3xf32> to vector<196x3xf32>
    %4 = vector.extract_strided_slice %1 {offsets = [0, 1, 0], sizes = [14, 14, 3], strides = [1, 1, 1]} : vector<16x16x3xf32> to vector<14x14x3xf32>
    %5 = vector.shape_cast %4 : vector<14x14x3xf32> to vector<196x3xf32>
    %6 = vector.extract_strided_slice %1 {offsets = [0, 2, 0], sizes = [14, 14, 3], strides = [1, 1, 1]} : vector<16x16x3xf32> to vector<14x14x3xf32>
    %7 = vector.shape_cast %6 : vector<14x14x3xf32> to vector<196x3xf32>
    %8 = vector.extract_strided_slice %1 {offsets = [1, 0, 0], sizes = [14, 14, 3], strides = [1, 1, 1]} : vector<16x16x3xf32> to vector<14x14x3xf32>
    %9 = vector.shape_cast %8 : vector<14x14x3xf32> to vector<196x3xf32>
    %10 = vector.extract_strided_slice %1 {offsets = [1, 1, 0], sizes = [14, 14, 3], strides = [1, 1, 1]} : vector<16x16x3xf32> to vector<14x14x3xf32>
    %11 = vector.shape_cast %10 : vector<14x14x3xf32> to vector<196x3xf32>
    %12 = vector.extract_strided_slice %1 {offsets = [1, 2, 0], sizes = [14, 14, 3], strides = [1, 1, 1]} : vector<16x16x3xf32> to vector<14x14x3xf32>
    %13 = vector.shape_cast %12 : vector<14x14x3xf32> to vector<196x3xf32>
    %14 = vector.extract_strided_slice %1 {offsets = [2, 0, 0], sizes = [14, 14, 3], strides = [1, 1, 1]} : vector<16x16x3xf32> to vector<14x14x3xf32>
    %15 = vector.shape_cast %14 : vector<14x14x3xf32> to vector<196x3xf32>
    %16 = vector.extract_strided_slice %1 {offsets = [2, 1, 0], sizes = [14, 14, 3], strides = [1, 1, 1]} : vector<16x16x3xf32> to vector<14x14x3xf32>
    %17 = vector.shape_cast %16 : vector<14x14x3xf32> to vector<196x3xf32>
    %18 = vector.extract_strided_slice %1 {offsets = [2, 2, 0], sizes = [14, 14, 3], strides = [1, 1, 1]} : vector<16x16x3xf32> to vector<14x14x3xf32>
    %19 = vector.shape_cast %18 : vector<14x14x3xf32> to vector<196x3xf32>
    %20 = tpu.concatenate %3, %5, %7, %9, %11, %13, %15, %17, %19 in 1 : vector<196x3xf32>, vector<196x3xf32>, vector<196x3xf32>, vector<196x3xf32>, vector<196x3xf32>, vector<196x3xf32>, vector<196x3xf32>, vector<196x3xf32>, vector<196x3xf32> -> vector<196x27xf32>
    %c0_3 = arith.constant 0 : index
    %c0_4 = arith.constant 0 : index
    %21 = vector.load %arg2[%c0_3, %c0_4] : memref<5x27xf32, #tpu.memory_space<vmem>>, vector<5x27xf32>
    %cst = arith.constant dense<0.000000e+00> : vector<5x196xf32>
    %22 = tpu.matmul %21, %20, %cst {dimension_numbers = #tpu.dot_dimension_numbers<[1], [1], [0], [0], [0, 0, 1, 0], [], []>} : vector<5x27xf32>, vector<196x27xf32>, vector<5x196xf32> -> vector<5x196xf32>
    %c0_5 = arith.constant 0 : index
    %c0_6 = arith.constant 0 : index
    %23 = vector.load %arg3[%c0_5, %c0_6] : memref<5x1xf32, #tpu.memory_space<vmem>>, vector<5x1xf32>
    %24 = vector.broadcast %23 : vector<5x1xf32> to vector<5x196xf32>
    %25 = arith.addf %22, %24 : vector<5x196xf32>
    %c0_7 = arith.constant 0 : index
    %c0_8 = arith.constant 0 : index
    %c0_9 = arith.constant 0 : index
    %26 = vector.load %arg4[%c0_7, %c0_8, %c0_9] : memref<1x5x196xf32, #tpu.memory_space<vmem>>, vector<1x5x196xf32>
    %27 = vector.shape_cast %26 : vector<1x5x196xf32> to vector<5x196xf32>
    %28 = vector.shape_cast %25 : vector<5x196xf32> to vector<1x5x196xf32>
    tpu.vector_store %arg4[%c0_7, %c0_8, %c0_9], %28 {strides = array<i32>} : memref<1x5x196xf32, #tpu.memory_space<vmem>>, vector<1x5x196xf32>,
    return
  }
  func.func @transform_0(%arg0: i32) -> (i32, i32, i32, i32) {
    %c0_i32 = arith.constant 0 : i32
    %c0_i32_0 = arith.constant 0 : i32
    %c0_i32_1 = arith.constant 0 : i32
    %c0_i32_2 = arith.constant 0 : i32
    return %arg0, %c0_i32, %c0_i32_0, %c0_i32_1 : i32, i32, i32, i32
  }
  func.func @transform_1(%arg0: i32) -> (i32, i32) {
    %c0_i32 = arith.constant 0 : i32
    %c0_i32_0 = arith.constant 0 : i32
    %c0_i32_1 = arith.constant 0 : i32
    return %c0_i32, %c0_i32_0 : i32, i32
  }
  func.func @transform_2(%arg0: i32) -> (i32, i32) {
    %c0_i32 = arith.constant 0 : i32
    %c0_i32_0 = arith.constant 0 : i32
    %c0_i32_1 = arith.constant 0 : i32
    return %c0_i32, %c0_i32_0 : i32, i32
  }
  func.func @transform_3(%arg0: i32) -> (i32, i32, i32) {
    %c0_i32 = arith.constant 0 : i32
    %c0_i32_0 = arith.constant 0 : i32
    %c0_i32_1 = arith.constant 0 : i32
    return %arg0, %c0_i32, %c0_i32_0 : i32, i32, i32
  }
}

</mosaic_0001>

<llo_original>
// kernel: conv2d_pallas.1
$region0: #{conv2d_pallas.1}
  #allocation0 [shape = 'u32[]', space=smem, size = 0x4, offset = 0x4, fixed_abs, tag = 'smem constant byte address 0x4 - core index']
  #allocation1 [shape = 'u32[144,128]{1,0:T(1,128)}', space=vmem, size = 0x12000, scoped, tag = 'internal scratch']
  %s0 = inlined_call_operand.vmem [shape: f32[2,16,16,3], index: 0, kind: input, shape index: {}]
  %s1 = inlined_call_operand.vmem [shape: f32[5,27], index: 1, kind: input, shape index: {}]
  %s2 = inlined_call_operand.vmem [shape: f32[5,1], index: 2, kind: input, shape index: {}]
  %s3 = inlined_call_operand.vmem [shape: f32[2,5,196], index: 3, kind: output, shape index: {}]
  %s4 = sld [smem:[#allocation0]]
  $region45: #{conv2d_pallas.1} parent=0
    _
  %s6 = ssub.s32 1, %s4
  %s7 = scalar_select 0, %s6, %s4
  loop: start=0, step=1, limit=4
  $region2: #{conv2d_pallas.1} parent=0 // loop_pre_header
    _
  $region3: #{conv2d_pallas.1} parent=0 // loop_header
    %s9 = sphi 0, %s13
    %p10 = scmp.ge.s32.totalorder %s9, 4
    %s19 = sphi 0, %s21
    %s22 = sphi 0, %s19
    %s23 = sphi 0, %s22
    %s39 = sphi 0, %s23
    %s43 = sphi 0, %s43
    %s45 = sphi 0, %s43
    %s46 = sphi 0, %s45
    %s60 = sphi 0, %s46
    %s64 = sphi 0, %s64
    %s66 = sphi 0, %s64
    %s67 = sphi 0, %s66
    %s81 = sphi 0, %s67
    %s87 = sphi 0, %s89
    %s90 = sphi 0, %s87
    %s91 = sphi 0, %s90
    %s107 = sphi 0, %s91
  $region4: #{conv2d_pallas.1} parent=0 // loop_header_branch
    %12 = sbr.rel (%p10) target = $region8
  $region5: #{conv2d_pallas.1} parent=0 // loop_body
    %s14 = ssub.s32 %s9, 1
    %s15 = ssub.s32 %s9, 2
    %s16 = sadd.s32 %s9, 1
    %s17 = ssub.s32 %s9, %s16
    %p18 = scmp.eq.s32.totalorder %s17, 0
    %s20 = sadd.s32 %s19, 1
    %s21 = scalar_select %p18, %s19, %s20
    %p24 = pneg %p18
    %p25 = scmp.eq.s32.totalorder %s9, 1
    %p26 = por %p24, %p25
    %p27 = scmp.ne.s32.totalorder %s19, %s22
    %p28 = scmp.eq.s32.totalorder %s9, 0
    %p29 = por %p27, %p28
    %p30 = scmp.ne.s32.totalorder %s19, %s22
    %p31 = scmp.eq.s32.totalorder %s14, 1
    %p32 = por %p30, %p31
    %p33 = scmp.ne.s32.totalorder %s22, %s23
    %p34 = scmp.eq.s32.totalorder %s14, 0
    %p35 = por %p33, %p34
    %p36 = scmp.ne.s32.totalorder %s22, %s23
    %p37 = scmp.eq.s32.totalorder %s15, 1
    %p38 = por %p36, %p37
    %p40 = scmp.ne.s32.totalorder %s23, %s39
    %p41 = scmp.eq.s32.totalorder %s15, 0
    %p42 = por %p40, %p41
    %s44 = sadd.s32 %s43, 1
    %p47 = scmp.eq.s32.totalorder %s9, 1
    %p48 = scmp.ne.s32.totalorder %s43, %s45
    %p49 = scmp.eq.s32.totalorder %s9, 0
    %p50 = por %p48, %p49
    %p51 = scmp.ne.s32.totalorder %s43, %s45
    %p52 = scmp.eq.s32.totalorder %s14, 1
    %p53 = por %p51, %p52
    %p54 = scmp.ne.s32.totalorder %s45, %s46
    %p55 = scmp.eq.s32.totalorder %s14, 0
    %p56 = por %p54, %p55
    %p57 = scmp.ne.s32.totalorder %s45, %s46
    %p58 = scmp.eq.s32.totalorder %s15, 1
    %p59 = por %p57, %p58
    %p61 = scmp.ne.s32.totalorder %s46, %s60
    %p62 = scmp.eq.s32.totalorder %s15, 0
    %p63 = por %p61, %p62
    %s65 = sadd.s32 %s64, 1
    %p68 = scmp.eq.s32.totalorder %s9, 1
    %p69 = scmp.ne.s32.totalorder %s64, %s66
    %p70 = scmp.eq.s32.totalorder %s9, 0
    %p71 = por %p69, %p70
    %p72 = scmp.ne.s32.totalorder %s64, %s66
    %p73 = scmp.eq.s32.totalorder %s14, 1
    %p74 = por %p72, %p73
    %p75 = scmp.ne.s32.totalorder %s66, %s67
    %p76 = scmp.eq.s32.totalorder %s14, 0
    %p77 = por %p75, %p76
    %p78 = scmp.ne.s32.totalorder %s66, %s67
    %p79 = scmp.eq.s32.totalorder %s15, 1
    %p80 = por %p78, %p79
    %p82 = scmp.ne.s32.totalorder %s67, %s81
    %p83 = scmp.eq.s32.totalorder %s15, 0
    %p84 = por %p82, %p83
    %s85 = ssub.s32 %s9, %s16
    %p86 = scmp.eq.s32.totalorder %s85, 0
    %s88 = sadd.s32 %s87, 1
    %s89 = scalar_select %p86, %s87, %s88
    %p92 = pneg %p86
    %p93 = scmp.eq.s32.totalorder %s9, 1
    %p94 = por %p92, %p93
    %p95 = scmp.ne.s32.totalorder %s87, %s90
    %p96 = scmp.eq.s32.totalorder %s9, 0
    %p97 = por %p95, %p96
    %p98 = scmp.ne.s32.totalorder %s87, %s90
    %p99 = scmp.eq.s32.totalorder %s14, 1
    %p100 = por %p98, %p99
    %p101 = scmp.ne.s32.totalorder %s90, %s91
    %p102 = scmp.eq.s32.totalorder %s14, 0
    %p103 = por %p101, %p102
    %p104 = scmp.ne.s32.totalorder %s90, %s91
    %p105 = scmp.eq.s32.totalorder %s15, 1
    %p106 = por %p104, %p105
    %p108 = scmp.ne.s32.totalorder %s91, %s107
    %p109 = scmp.eq.s32.totalorder %s15, 0
    %p110 = por %p108, %p109
    %p111 = scmp.le.s32.totalorder 1, %s9
    %p112 = scmp.lt.s32.totalorder %s9, 3
    %p113 = pnand %p111, %p112
    %p114 = pneg %p113
    // Predicated region
    $region9: #{conv2d_pallas.1} parent=5 // pred_check
      _
    $region10: #{conv2d_pallas.1} parent=5 // pred_check_branch
      %116 = sbr.rel (%p113) target = $region12
    $region11: #{conv2d_pallas.1} parent=5 // pred_region
      %s117 = ssub.s32 %s9, 1
      // Predicated region
      $region13: #{conv2d_pallas.1} parent=11 // pred_check
        %p118 = pneg %p56
      $region14: #{conv2d_pallas.1} parent=11 // pred_check_branch
        %120 = sbr.rel (%p118) target = $region16
      $region15: #{conv2d_pallas.1} parent=11 // pred_region
        _
      $region16: #{conv2d_pallas.1} parent=11 // pred_fallthru
        _
      // Predicated region
      $region17: #{conv2d_pallas.1} parent=11 // pred_check
        %p121 = pneg %p77
      $region18: #{conv2d_pallas.1} parent=11 // pred_check_branch
        %123 = sbr.rel (%p121) target = $region20
      $region19: #{conv2d_pallas.1} parent=11 // pred_region
        _
      $region20: #{conv2d_pallas.1} parent=11 // pred_fallthru
        _
    $region12: #{conv2d_pallas.1} parent=5 // pred_fallthru
      _
    %p124 = scmp.lt.s32.totalorder %s9, 2
    // Predicated region
    $region21: #{conv2d_pallas.1} parent=5 // pred_check
      %p125 = pneg %p124
    $region22: #{conv2d_pallas.1} parent=5 // pred_check_branch
      %127 = sbr.rel (%p125) target = $region24
    $region23: #{conv2d_pallas.1} parent=5 // pred_region
      // Predicated region
      $region25: #{conv2d_pallas.1} parent=23 // pred_check
        %p128 = pneg %p29
      $region26: #{conv2d_pallas.1} parent=23 // pred_check_branch
        %130 = sbr.rel (%p128) target = $region28
      $region27: #{conv2d_pallas.1} parent=23 // pred_region
        %p131 = scmp.lt.s32.totalorder %s9, 1
        %s132 = scalar_select %p131, %s9, 1
        %s133 = smul.addr %s132, 32
        %s134 = smul.addr %s133, 8
        %s135 = scalar_lea.vmem %s0, %s134
      $region28: #{conv2d_pallas.1} parent=23 // pred_fallthru
        _
    $region24: #{conv2d_pallas.1} parent=5 // pred_fallthru
      _
    %p136 = scmp.le.s32.totalorder 1, %s9
    %p137 = scmp.lt.s32.totalorder %s9, 3
    %p138 = pnand %p136, %p137
    %p139 = pneg %p138
    // Predicated region
    $region29: #{conv2d_pallas.1} parent=5 // pred_check
      _
    $region30: #{conv2d_pallas.1} parent=5 // pred_check_branch
      %141 = sbr.rel (%p138) target = $region32
    $region31: #{conv2d_pallas.1} parent=5 // pred_region
      %s142 = ssub.s32 %s9, 1
      %p143 = scmp.lt.s32.totalorder %s14, 1
      %s144 = scalar_select %p143, %s14, 1
      %s145 = smul.addr %s144, 32
      %s146 = smul.addr %s145, 8
      %s147 = scalar_lea.vmem %s0, %s146
      %p148 = pneg %p35
      %p149 = pneg %p32
      %p150 = pneg %p56
      %p151 = pneg %p53
      %p152 = pneg %p77
      %p153 = pneg %p74
      %p154 = pneg %p103
      %p155 = pneg %p100
      %p156 = scmp.lt.s32.totalorder %s14, 1
      %s157 = scalar_select %p156, %s14, 1
      %s158 = smul.addr %s157, 2
      %s159 = smul.addr %s158, 8
      %s160 = scalar_lea.vmem %s3, %s159
      %p161 = scmp.lt.s32.totalorder %s14, 1
      %s162 = scalar_select %p161, %s14, 1
      %s163 = smul.addr %s162, 32
      %s164 = smul.addr %s163, 8
      %s165 = scalar_lea.vmem %s0, %s164
      %p166 = scmp.lt.s32.totalorder %s14, 1
      %s167 = scalar_select %p166, %s14, 1
      %s168 = smul.addr %s167, 2
      %s169 = smul.addr %s168, 8
      %s170 = scalar_lea.vmem %s3, %s169
      %v171 = vld [vmem:[%s165] sm:$0xff]
      %v172 = vld [vmem:[%s165 + $0x8] sm:$0xff]
      %v173 = vld [vmem:[%s165 + $0x10] sm:$0xff]
      %v174 = vld [vmem:[%s165 + $0x18] sm:$0xff]
      %v175 = vld [vmem:[%s165 + $0x20] sm:$0xff]
      %v176 = vld [vmem:[%s165 + $0x28] sm:$0xff]
      %v177 = vld [vmem:[%s165 + $0x30] sm:$0xff]
      %v178 = vld [vmem:[%s165 + $0x38] sm:$0xff]
      %v179 = vld [vmem:[%s165 + $0x40] sm:$0xff]
      %v180 = vld [vmem:[%s165 + $0x48] sm:$0xff]
      %v181 = vld [vmem:[%s165 + $0x50] sm:$0xff]
      %v182 = vld [vmem:[%s165 + $0x58] sm:$0xff]
      %v183 = vld [vmem:[%s165 + $0x60] sm:$0xff]
      %v184 = vld [vmem:[%s165 + $0x68] sm:$0xff]
      %v185 = vld [vmem:[%s165 + $0x70] sm:$0xff]
      %v186 = vld [vmem:[%s165 + $0x78] sm:$0xff]
      %v187 = vld [vmem:[%s165 + $0x80] sm:$0xff]
      %v188 = vld [vmem:[%s165 + $0x88] sm:$0xff]
      %v189 = vld [vmem:[%s165 + $0x90] sm:$0xff]
      %v190 = vld [vmem:[%s165 + $0x98] sm:$0xff]
      %v191 = vld [vmem:[%s165 + $0xa0] sm:$0xff]
      %v192 = vld [vmem:[%s165 + $0xa8] sm:$0xff]
      %v193 = vld [vmem:[%s165 + $0xb0] sm:$0xff]
      %v194 = vld [vmem:[%s165 + $0xb8] sm:$0xff]
      %v195 = vld [vmem:[%s165 + $0xc0] sm:$0xff]
      %v196 = vld [vmem:[%s165 + $0xc8] sm:$0xff]
      %v197 = vld [vmem:[%s165 + $0xd0] sm:$0xff]
      %v198 = vld [vmem:[%s165 + $0xd8] sm:$0xff]
      %v199 = vld [vmem:[%s165 + $0xe0] sm:$0xff]
      %v200 = vld [vmem:[%s165 + $0xe8] sm:$0xff]
      %v201 = vld [vmem:[%s165 + $0xf0] sm:$0xff]
      %v202 = vld [vmem:[%s165 + $0xf8] sm:$0xff]
      %v231 = vcombine.high %v171, %v171
      %v233 = vunpack.c.l.s4 1983009808
      %v234 = vunpack.c.0.s8 %v233
      %v235 = vlaneseq
      %v236 = vshrl.u32 %v235, 7
      %v237 = vsub.s32 %v234, %v236
      %v238 = vrot.slane %v171, %v237
      %v240 = vunpack.c.l.s4 1983009808
      %v241 = vunpack.c.0.s8 %v240
      %v242 = vlaneseq
      %v243 = vshrl.u32 %v242, 7
      %v244 = vsub.s32 %v241, %v243
      %v245 = vrot.slane %v231, %v244
      %v246 = vcombine.high %v238, %v238
      %v247 = vcombine.high %v245, %v245
      %v248 = vcombine.high %v172, %v172
      %v250 = vunpack.c.l.s4 1983009808
      %v251 = vunpack.c.0.s8 %v250
      %v252 = vlaneseq
      %v253 = vshrl.u32 %v252, 7
      %v254 = vsub.s32 %v251, %v253
      %v255 = vrot.slane %v172, %v254
      %v257 = vunpack.c.l.s4 1983009808
      %v258 = vunpack.c.0.s8 %v257
      %v259 = vlaneseq
      %v260 = vshrl.u32 %v259, 7
      %v261 = vsub.s32 %v258, %v260
      %v262 = vrot.slane %v248, %v261
      %v263 = vcombine.high %v255, %v255
      %v264 = vcombine.high %v173, %v173
      %v266 = vunpack.c.l.s4 1983009808
      %v267 = vunpack.c.0.s8 %v266
      %v268 = vlaneseq
      %v269 = vshrl.u32 %v268, 7
      %v270 = vsub.s32 %v267, %v269
      %v271 = vrot.slane %v173, %v270
      %v273 = vunpack.c.l.s4 1983009808
      %v274 = vunpack.c.0.s8 %v273
      %v275 = vlaneseq
      %v276 = vshrl.u32 %v275, 7
      %v277 = vsub.s32 %v274, %v276
      %v278 = vrot.slane %v264, %v277
      %v279 = vcombine.high %v271, %v271
      %v280 = vcombine.high %v278, %v278
      %v281 = vcombine.high %v174, %v174
      %v283 = vunpack.c.l.s4 1983009808
      %v284 = vunpack.c.0.s8 %v283
      %v285 = vlaneseq
      %v286 = vshrl.u32 %v285, 7
      %v287 = vsub.s32 %v284, %v286
      %v288 = vrot.slane %v174, %v287
      %v290 = vunpack.c.l.s4 1983009808
      %v291 = vunpack.c.0.s8 %v290
      %v292 = vlaneseq
      %v293 = vshrl.u32 %v292, 7
      %v294 = vsub.s32 %v291, %v293
      %v295 = vrot.slane %v281, %v294
      %v296 = vcombine.high %v288, %v288
      %v297 = vcombine.high %v175, %v175
      %v299 = vunpack.c.l.s4 1983009808
      %v300 = vunpack.c.0.s8 %v299
      %v301 = vlaneseq
      %v302 = vshrl.u32 %v301, 7
      %v303 = vsub.s32 %v300, %v302
      %v304 = vrot.slane %v175, %v303
      %v306 = vunpack.c.l.s4 1983009808
      %v307 = vunpack.c.0.s8 %v306
      %v308 = vlaneseq
      %v309 = vshrl.u32 %v308, 7
      %v310 = vsub.s32 %v307, %v309
      %v311 = vrot.slane %v297, %v310
      %v312 = vcombine.high %v304, %v304
      %v313 = vcombine.high %v311, %v311
      %v314 = vcombine.high %v176, %v176
      %v316 = vunpack.c.l.s4 1983009808
      %v317 = vunpack.c.0.s8 %v316
      %v318 = vlaneseq
      %v319 = vshrl.u32 %v318, 7
      %v320 = vsub.s32 %v317, %v319
      %v321 = vrot.slane %v176, %v320
      %v323 = vunpack.c.l.s4 1983009808
      %v324 = vunpack.c.0.s8 %v323
      %v325 = vlaneseq
      %v326 = vshrl.u32 %v325, 7
      %v327 = vsub.s32 %v324, %v326
      %v328 = vrot.slane %v314, %v327
      %v329 = vcombine.high %v321, %v321
      %v330 = vcombine.high %v177, %v177
      %v332 = vunpack.c.l.s4 1983009808
      %v333 = vunpack.c.0.s8 %v332
      %v334 = vlaneseq
      %v335 = vshrl.u32 %v334, 7
      %v336 = vsub.s32 %v333, %v335
      %v337 = vrot.slane %v177, %v336
      %v339 = vunpack.c.l.s4 1983009808
      %v340 = vunpack.c.0.s8 %v339
      %v341 = vlaneseq
      %v342 = vshrl.u32 %v341, 7
      %v343 = vsub.s32 %v340, %v342
      %v344 = vrot.slane %v330, %v343
      %v345 = vcombine.high %v337, %v337
      %v346 = vcombine.high %v344, %v344
      %v347 = vcombine.high %v178, %v178
      %v349 = vunpack.c.l.s4 1983009808
      %v350 = vunpack.c.0.s8 %v349
      %v351 = vlaneseq
      %v352 = vshrl.u32 %v351, 7
      %v353 = vsub.s32 %v350, %v352
      %v354 = vrot.slane %v178, %v353
      %v356 = vunpack.c.l.s4 1983009808
      %v357 = vunpack.c.0.s8 %v356
      %v358 = vlaneseq
      %v359 = vshrl.u32 %v358, 7
      %v360 = vsub.s32 %v357, %v359
      %v361 = vrot.slane %v347, %v360
      %v362 = vcombine.high %v354, %v354
      %v363 = vcombine.high %v179, %v179
      %v365 = vunpack.c.l.s4 1983009808
      %v366 = vunpack.c.0.s8 %v365
      %v367 = vlaneseq
      %v368 = vshrl.u32 %v367, 7
      %v369 = vsub.s32 %v366, %v368
      %v370 = vrot.slane %v179, %v369
      %v372 = vunpack.c.l.s4 1983009808
      %v373 = vunpack.c.0.s8 %v372
      %v374 = vlaneseq
      %v375 = vshrl.u32 %v374, 7
      %v376 = vsub.s32 %v373, %v375
      %v377 = vrot.slane %v363, %v376
      %v378 = vcombine.high %v370, %v370
      %v379 = vcombine.high %v377, %v377
      %v380 = vcombine.high %v180, %v180
      %v382 = vunpack.c.l.s4 1983009808
      %v383 = vunpack.c.0.s8 %v382
      %v384 = vlaneseq
      %v385 = vshrl.u32 %v384, 7
      %v386 = vsub.s32 %v383, %v385
      %v387 = vrot.slane %v180, %v386
      %v389 = vunpack.c.l.s4 1983009808
      %v390 = vunpack.c.0.s8 %v389
      %v391 = vlaneseq
      %v392 = vshrl.u32 %v391, 7
      %v393 = vsub.s32 %v390, %v392
      %v394 = vrot.slane %v380, %v393
      %v395 = vcombine.high %v387, %v387
      %v396 = vcombine.high %v181, %v181
      %v398 = vunpack.c.l.s4 1983009808
      %v399 = vunpack.c.0.s8 %v398
      %v400 = vlaneseq
      %v401 = vshrl.u32 %v400, 7
      %v402 = vsub.s32 %v399, %v401
      %v403 = vrot.slane %v181, %v402
      %v405 = vunpack.c.l.s4 1983009808
      %v406 = vunpack.c.0.s8 %v405
      %v407 = vlaneseq
      %v408 = vshrl.u32 %v407, 7
      %v409 = vsub.s32 %v406, %v408
      %v410 = vrot.slane %v396, %v409
      %v411 = vcombine.high %v403, %v403
      %v412 = vcombine.high %v410, %v410
      %v413 = vcombine.high %v182, %v182
      %v415 = vunpack.c.l.s4 1983009808
      %v416 = vunpack.c.0.s8 %v415
      %v417 = vlaneseq
      %v418 = vshrl.u32 %v417, 7
      %v419 = vsub.s32 %v416, %v418
      %v420 = vrot.slane %v182, %v419
      %v422 = vunpack.c.l.s4 1983009808
      %v423 = vunpack.c.0.s8 %v422
      %v424 = vlaneseq
      %v425 = vshrl.u32 %v424, 7
      %v426 = vsub.s32 %v423, %v425
      %v427 = vrot.slane %v413, %v426
      %v428 = vcombine.high %v420, %v420
      %v429 = vcombine.high %v183, %v183
      %v431 = vunpack.c.l.s4 1983009808
      %v432 = vunpack.c.0.s8 %v431
      %v433 = vlaneseq
      %v434 = vshrl.u32 %v433, 7
      %v435 = vsub.s32 %v432, %v434
      %v436 = vrot.slane %v183, %v435
      %v438 = vunpack.c.l.s4 1983009808
      %v439 = vunpack.c.0.s8 %v438
      %v440 = vlaneseq
      %v441 = vshrl.u32 %v440, 7
      %v442 = vsub.s32 %v439, %v441
      %v443 = vrot.slane %v429, %v442
      %v444 = vcombine.high %v436, %v436
      %v445 = vcombine.high %v443, %v443
      %v446 = vcombine.high %v184, %v184
      %v448 = vunpack.c.l.s4 1983009808
      %v449 = vunpack.c.0.s8 %v448
      %v450 = vlaneseq
      %v451 = vshrl.u32 %v450, 7
      %v452 = vsub.s32 %v449, %v451
      %v453 = vrot.slane %v184, %v452
      %v455 = vunpack.c.l.s4 1983009808
      %v456 = vunpack.c.0.s8 %v455
      %v457 = vlaneseq
      %v458 = vshrl.u32 %v457, 7
      %v459 = vsub.s32 %v456, %v458
      %v460 = vrot.slane %v446, %v459
      %v461 = vcombine.high %v453, %v453
      %v462 = vcombine.high %v185, %v185
      %v464 = vunpack.c.l.s4 1983009808
      %v465 = vunpack.c.0.s8 %v464
      %v466 = vlaneseq
      %v467 = vshrl.u32 %v466, 7
      %v468 = vsub.s32 %v465, %v467
      %v469 = vrot.slane %v185, %v468
      %v471 = vunpack.c.l.s4 1983009808
      %v472 = vunpack.c.0.s8 %v471
      %v473 = vlaneseq
      %v474 = vshrl.u32 %v473, 7
      %v475 = vsub.s32 %v472, %v474
      %v476 = vrot.slane %v462, %v475
      %v477 = vcombine.high %v469, %v469
      %v478 = vcombine.high %v476, %v476
      %v479 = vcombine.high %v186, %v186
      %v481 = vunpack.c.l.s4 1983009808
      %v482 = vunpack.c.0.s8 %v481
      %v483 = vlaneseq
      %v484 = vshrl.u32 %v483, 7
      %v485 = vsub.s32 %v482, %v484
      %v486 = vrot.slane %v186, %v485
      %v488 = vunpack.c.l.s4 1983009808
      %v489 = vunpack.c.0.s8 %v488
      %v490 = vlaneseq
      %v491 = vshrl.u32 %v490, 7
      %v492 = vsub.s32 %v489, %v491
      %v493 = vrot.slane %v479, %v492
      %v494 = vcombine.high %v486, %v486
      %v495 = vcombine.high %v187, %v187
      %v497 = vunpack.c.l.s4 1983009808
      %v498 = vunpack.c.0.s8 %v497
      %v499 = vlaneseq
      %v500 = vshrl.u32 %v499, 7
      %v501 = vsub.s32 %v498, %v500
      %v502 = vrot.slane %v187, %v501
      %v504 = vunpack.c.l.s4 1983009808
      %v505 = vunpack.c.0.s8 %v504
      %v506 = vlaneseq
      %v507 = vshrl.u32 %v506, 7
      %v508 = vsub.s32 %v505, %v507
      %v509 = vrot.slane %v495, %v508
      %v510 = vcombine.high %v502, %v502
      %v511 = vcombine.high %v509, %v509
      %v512 = vcombine.high %v188, %v188
      %v514 = vunpack.c.l.s4 1983009808
      %v515 = vunpack.c.0.s8 %v514
      %v516 = vlaneseq
      %v517 = vshrl.u32 %v516, 7
      %v518 = vsub.s32 %v515, %v517
      %v519 = vrot.slane %v188, %v518
      %v521 = vunpack.c.l.s4 1983009808
      %v522 = vunpack.c.0.s8 %v521
      %v523 = vlaneseq
      %v524 = vshrl.u32 %v523, 7
      %v525 = vsub.s32 %v522, %v524
      %v526 = vrot.slane %v512, %v525
      %v527 = vcombine.high %v519, %v519
      %v528 = vcombine.high %v189, %v189
      %v530 = vunpack.c.l.s4 1983009808
      %v531 = vunpack.c.0.s8 %v530
      %v532 = vlaneseq
      %v533 = vshrl.u32 %v532, 7
      %v534 = vsub.s32 %v531, %v533
      %v535 = vrot.slane %v189, %v534
      %v537 = vunpack.c.l.s4 1983009808
      %v538 = vunpack.c.0.s8 %v537
      %v539 = vlaneseq
      %v540 = vshrl.u32 %v539, 7
      %v541 = vsub.s32 %v538, %v540
      %v542 = vrot.slane %v528, %v541
      %v543 = vcombine.high %v535, %v535
      %v544 = vcombine.high %v542, %v542
      %v545 = vcombine.high %v190, %v190
      %v547 = vunpack.c.l.s4 1983009808
      %v548 = vunpack.c.0.s8 %v547
      %v549 = vlaneseq
      %v550 = vshrl.u32 %v549, 7
      %v551 = vsub.s32 %v548, %v550
      %v552 = vrot.slane %v190, %v551
      %v554 = vunpack.c.l.s4 1983009808
      %v555 = vunpack.c.0.s8 %v554
      %v556 = vlaneseq
      %v557 = vshrl.u32 %v556, 7
      %v558 = vsub.s32 %v555, %v557
      %v559 = vrot.slane %v545, %v558
      %v560 = vcombine.high %v552, %v552
      %v561 = vcombine.high %v191, %v191
      %v563 = vunpack.c.l.s4 1983009808
      %v564 = vunpack.c.0.s8 %v563
      %v565 = vlaneseq
      %v566 = vshrl.u32 %v565, 7
      %v567 = vsub.s32 %v564, %v566
      %v568 = vrot.slane %v191, %v567
      %v570 = vunpack.c.l.s4 1983009808
      %v571 = vunpack.c.0.s8 %v570
      %v572 = vlaneseq
      %v573 = vshrl.u32 %v572, 7
      %v574 = vsub.s32 %v571, %v573
      %v575 = vrot.slane %v561, %v574
      %v576 = vcombine.high %v568, %v568
      %v577 = vcombine.high %v575, %v575
      %v578 = vcombine.high %v192, %v192
      %v580 = vunpack.c.l.s4 1983009808
      %v581 = vunpack.c.0.s8 %v580
      %v582 = vlaneseq
      %v583 = vshrl.u32 %v582, 7
      %v584 = vsub.s32 %v581, %v583
      %v585 = vrot.slane %v192, %v584
      %v587 = vunpack.c.l.s4 1983009808
      %v588 = vunpack.c.0.s8 %v587
      %v589 = vlaneseq
      %v590 = vshrl.u32 %v589, 7
      %v591 = vsub.s32 %v588, %v590
      %v592 = vrot.slane %v578, %v591
      %v593 = vcombine.high %v585, %v585
      %v594 = vcombine.high %v193, %v193
      %v596 = vunpack.c.l.s4 1983009808
      %v597 = vunpack.c.0.s8 %v596
      %v598 = vlaneseq
      %v599 = vshrl.u32 %v598, 7
      %v600 = vsub.s32 %v597, %v599
      %v601 = vrot.slane %v193, %v600
      %v603 = vunpack.c.l.s4 1983009808
      %v604 = vunpack.c.0.s8 %v603
      %v605 = vlaneseq
      %v606 = vshrl.u32 %v605, 7
      %v607 = vsub.s32 %v604, %v606
      %v608 = vrot.slane %v594, %v607
      %v609 = vcombine.high %v601, %v601
      %v610 = vcombine.high %v608, %v608
      %v611 = vcombine.high %v194, %v194
      %v613 = vunpack.c.l.s4 1983009808
      %v614 = vunpack.c.0.s8 %v613
      %v615 = vlaneseq
      %v616 = vshrl.u32 %v615, 7
      %v617 = vsub.s32 %v614, %v616
      %v618 = vrot.slane %v194, %v617
      %v620 = vunpack.c.l.s4 1983009808
      %v621 = vunpack.c.0.s8 %v620
      %v622 = vlaneseq
      %v623 = vshrl.u32 %v622, 7
      %v624 = vsub.s32 %v621, %v623
      %v625 = vrot.slane %v611, %v624
      %v626 = vcombine.high %v618, %v618
      %v627 = vcombine.high %v195, %v195
      %v629 = vunpack.c.l.s4 1983009808
      %v630 = vunpack.c.0.s8 %v629
      %v631 = vlaneseq
      %v632 = vshrl.u32 %v631, 7
      %v633 = vsub.s32 %v630, %v632
      %v634 = vrot.slane %v195, %v633
      %v636 = vunpack.c.l.s4 1983009808
      %v637 = vunpack.c.0.s8 %v636
      %v638 = vlaneseq
      %v639 = vshrl.u32 %v638, 7
      %v640 = vsub.s32 %v637, %v639
      %v641 = vrot.slane %v627, %v640
      %v642 = vcombine.high %v634, %v634
      %v643 = vcombine.high %v641, %v641
      %v644 = vcombine.high %v196, %v196
      %v646 = vunpack.c.l.s4 1983009808
      %v647 = vunpack.c.0.s8 %v646
      %v648 = vlaneseq
      %v649 = vshrl.u32 %v648, 7
      %v650 = vsub.s32 %v647, %v649
      %v651 = vrot.slane %v196, %v650
      %v653 = vunpack.c.l.s4 1983009808
      %v654 = vunpack.c.0.s8 %v653
      %v655 = vlaneseq
      %v656 = vshrl.u32 %v655, 7
      %v657 = vsub.s32 %v654, %v656
      %v658 = vrot.slane %v644, %v657
      %v659 = vcombine.high %v651, %v651
      %v660 = vcombine.high %v197, %v197
      %v662 = vunpack.c.l.s4 1983009808
      %v663 = vunpack.c.0.s8 %v662
      %v664 = vlaneseq
      %v665 = vshrl.u32 %v664, 7
      %v666 = vsub.s32 %v663, %v665
      %v667 = vrot.slane %v197, %v666
      %v669 = vunpack.c.l.s4 1983009808
      %v670 = vunpack.c.0.s8 %v669
      %v671 = vlaneseq
      %v672 = vshrl.u32 %v671, 7
      %v673 = vsub.s32 %v670, %v672
      %v674 = vrot.slane %v660, %v673
      %v675 = vcombine.high %v667, %v667
      %v676 = vcombine.high %v674, %v674
      %v677 = vcombine.high %v198, %v198
      %v679 = vunpack.c.l.s4 1983009808
      %v680 = vunpack.c.0.s8 %v679
      %v681 = vlaneseq
      %v682 = vshrl.u32 %v681, 7
      %v683 = vsub.s32 %v680, %v682
      %v684 = vrot.slane %v198, %v683
      %v686 = vunpack.c.l.s4 1983009808
      %v687 = vunpack.c.0.s8 %v686
      %v688 = vlaneseq
      %v689 = vshrl.u32 %v688, 7
      %v690 = vsub.s32 %v687, %v689
      %v691 = vrot.slane %v677, %v690
      %v692 = vcombine.high %v684, %v684
      %v693 = vcombine.high %v262, %v262
      %v694 = vcombine.high %v295, %v295
      %v695 = vcombine.high %v328, %v328
      %v696 = vcombine.high %v361, %v361
      %v697 = vcombine.high %v394, %v394
      %v698 = vcombine.high %v427, %v427
      %v699 = vcombine.high %v460, %v460
      %v700 = vcombine.high %v493, %v493
      %v701 = vcombine.high %v526, %v526
      %v702 = vcombine.high %v559, %v559
      %v703 = vcombine.high %v592, %v592
      %v704 = vcombine.high %v625, %v625
      %v705 = vcombine.high %v658, %v658
      %v706 = vcombine.high %v691, %v691
      %vm707 = vcmask 1040384
      %vm708 = vcmask 1042434
      %vm709 = vmor %vm707, %vm708
      %vm710 = vcmask 1044484
      %vm711 = vmor %vm709, %vm710
      %vm712 = vcmask 1046534
      %vm713 = vmor %vm711, %vm712
      %v714 = vrot.slane %v238, 7
      %v715 = vrot.slane %v714, 2
      %v716 = vrot.slane %v246, 7
      %v717 = vsel %vm713, %v715, %v716
      %v718 = vrot.slane %v716, 2
      %v719 = vrot.slane %v245, 7
      %v720 = vsel %vm713, %v718, %v719
      %v721 = vrot.slane %v719, 2
      %v722 = vrot.slane %v247, 7
      %v723 = vsel %vm713, %v721, %v722
      %v724 = vrot.slane %v722, 2
      %v725 = vrot.slane %v255, 7
      %v726 = vsel %vm713, %v724, %v725
      %v727 = vrot.slane %v725, 2
      %v728 = vrot.slane %v263, 7
      %v729 = vsel %vm713, %v727, %v728
      %v730 = vrot.slane %v728, 2
      %v731 = vrot.slane %v262, 7
      %v732 = vsel %vm713, %v730, %v731
      %v733 = vrot.slane %v731, 2
      %v734 = vrot.slane %v693, 7
      %v735 = vsel %vm713, %v733, %v734
      %v736 = vrot.slane %v271, 7
      %v737 = vrot.slane %v736, 2
      %v738 = vrot.slane %v279, 7
      %v739 = vsel %vm713, %v737, %v738
      %v740 = vrot.slane %v738, 2
      %v741 = vrot.slane %v278, 7
      %v742 = vsel %vm713, %v740, %v741
      %v743 = vrot.slane %v741, 2
      %v744 = vrot.slane %v280, 7
      %v745 = vsel %vm713, %v743, %v744
      %v746 = vrot.slane %v744, 2
      %v747 = vrot.slane %v288, 7
      %v748 = vsel %vm713, %v746, %v747
      %v749 = vrot.slane %v747, 2
      %v750 = vrot.slane %v296, 7
      %v751 = vsel %vm713, %v749, %v750
      %v752 = vrot.slane %v750, 2
      %v753 = vrot.slane %v295, 7
      %v754 = vsel %vm713, %v752, %v753
      %v755 = vrot.slane %v753, 2
      %v756 = vrot.slane %v694, 7
      %v757 = vsel %vm713, %v755, %v756
      %v758 = vrot.slane %v304, 7
      %v759 = vrot.slane %v758, 2
      %v760 = vrot.slane %v312, 7
      %v761 = vsel %vm713, %v759, %v760
      %v762 = vrot.slane %v760, 2
      %v763 = vrot.slane %v311, 7
      %v764 = vsel %vm713, %v762, %v763
      %v765 = vrot.slane %v763, 2
      %v766 = vrot.slane %v313, 7
      %v767 = vsel %vm713, %v765, %v766
      %v768 = vrot.slane %v766, 2
      %v769 = vrot.slane %v321, 7
      %v770 = vsel %vm713, %v768, %v769
      %v771 = vrot.slane %v769, 2
      %v772 = vrot.slane %v329, 7
      %v773 = vsel %vm713, %v771, %v772
      %v774 = vrot.slane %v772, 2
      %v775 = vrot.slane %v328, 7
      %v776 = vsel %vm713, %v774, %v775
      %v777 = vrot.slane %v775, 2
      %v778 = vrot.slane %v695, 7
      %v779 = vsel %vm713, %v777, %v778
      %v780 = vrot.slane %v337, 7
      %v781 = vrot.slane %v780, 2
      %v782 = vrot.slane %v345, 7
      %v783 = vsel %vm713, %v781, %v782
      %v784 = vrot.slane %v782, 2
      %v785 = vrot.slane %v344, 7
      %v786 = vsel %vm713, %v784, %v785
      %v787 = vrot.slane %v785, 2
      %v788 = vrot.slane %v346, 7
      %v789 = vsel %vm713, %v787, %v788
      %v790 = vrot.slane %v788, 2
      %v791 = vrot.slane %v354, 7
      %v792 = vsel %vm713, %v790, %v791
      %v793 = vrot.slane %v791, 2
      %v794 = vrot.slane %v362, 7
      %v795 = vsel %vm713, %v793, %v794
      %v796 = vrot.slane %v794, 2
      %v797 = vrot.slane %v361, 7
      %v798 = vsel %vm713, %v796, %v797
      %v799 = vrot.slane %v797, 2
      %v800 = vrot.slane %v696, 7
      %v801 = vsel %vm713, %v799, %v800
      %v802 = vrot.slane %v370, 7
      %v803 = vrot.slane %v802, 2
      %v804 = vrot.slane %v378, 7
      %v805 = vsel %vm713, %v803, %v804
      %v806 = vrot.slane %v804, 2
      %v807 = vrot.slane %v377, 7
      %v808 = vsel %vm713, %v806, %v807
      %v809 = vrot.slane %v807, 2
      %v810 = vrot.slane %v379, 7
      %v811 = vsel %vm713, %v809, %v810
      %v812 = vrot.slane %v810, 2
      %v813 = vrot.slane %v387, 7
      %v814 = vsel %vm713, %v812, %v813
      %v815 = vrot.slane %v813, 2
      %v816 = vrot.slane %v395, 7
      %v817 = vsel %vm713, %v815, %v816
      %v818 = vrot.slane %v816, 2
      %v819 = vrot.slane %v394, 7
      %v820 = vsel %vm713, %v818, %v819
      %v821 = vrot.slane %v819, 2
      %v822 = vrot.slane %v697, 7
      %v823 = vsel %vm713, %v821, %v822
      %v824 = vrot.slane %v403, 7
      %v825 = vrot.slane %v824, 2
      %v826 = vrot.slane %v411, 7
      %v827 = vsel %vm713, %v825, %v826
      %v828 = vrot.slane %v826, 2
      %v829 = vrot.slane %v410, 7
      %v830 = vsel %vm713, %v828, %v829
      %v831 = vrot.slane %v829, 2
      %v832 = vrot.slane %v412, 7
      %v833 = vsel %vm713, %v831, %v832
      %v834 = vrot.slane %v832, 2
      %v835 = vrot.slane %v420, 7
      %v836 = vsel %vm713, %v834, %v835
      %v837 = vrot.slane %v835, 2
      %v838 = vrot.slane %v428, 7
      %v839 = vsel %vm713, %v837, %v838
      %v840 = vrot.slane %v838, 2
      %v841 = vrot.slane %v427, 7
      %v842 = vsel %vm713, %v840, %v841
      %v843 = vrot.slane %v841, 2
      %v844 = vrot.slane %v698, 7
      %v845 = vsel %vm713, %v843, %v844
      %v846 = vrot.slane %v436, 7
      %v847 = vrot.slane %v846, 2
      %v848 = vrot.slane %v444, 7
      %v849 = vsel %vm713, %v847, %v848
      %v850 = vrot.slane %v848, 2
      %v851 = vrot.slane %v443, 7
      %v852 = vsel %vm713, %v850, %v851
      %v853 = vrot.slane %v851, 2
      %v854 = vrot.slane %v445, 7
      %v855 = vsel %vm713, %v853, %v854
      %v856 = vrot.slane %v854, 2
      %v857 = vrot.slane %v453, 7
      %v858 = vsel %vm713, %v856, %v857
      %v859 = vrot.slane %v857, 2
      %v860 = vrot.slane %v461, 7
      %v861 = vsel %vm713, %v859, %v860
      %v862 = vrot.slane %v860, 2
      %v863 = vrot.slane %v460, 7
      %v864 = vsel %vm713, %v862, %v863
      %v865 = vrot.slane %v863, 2
      %v866 = vrot.slane %v699, 7
      %v867 = vsel %vm713, %v865, %v866
      %v868 = vrot.slane %v469, 7
      %v869 = vrot.slane %v868, 2
      %v870 = vrot.slane %v477, 7
      %v871 = vsel %vm713, %v869, %v870
      %v872 = vrot.slane %v870, 2
      %v873 = vrot.slane %v476, 7
      %v874 = vsel %vm713, %v872, %v873
      %v875 = vrot.slane %v873, 2
      %v876 = vrot.slane %v478, 7
      %v877 = vsel %vm713, %v875, %v876
      %v878 = vrot.slane %v876, 2
      %v879 = vrot.slane %v486, 7
      %v880 = vsel %vm713, %v878, %v879
      %v881 = vrot.slane %v879, 2
      %v882 = vrot.slane %v494, 7
      %v883 = vsel %vm713, %v881, %v882
      %v884 = vrot.slane %v882, 2
      %v885 = vrot.slane %v493, 7
      %v886 = vsel %vm713, %v884, %v885
      %v887 = vrot.slane %v885, 2
      %v888 = vrot.slane %v700, 7
      %v889 = vsel %vm713, %v887, %v888
      %v890 = vrot.slane %v502, 7
      %v891 = vrot.slane %v890, 2
      %v892 = vrot.slane %v510, 7
      %v893 = vsel %vm713, %v891, %v892
      %v894 = vrot.slane %v892, 2
      %v895 = vrot.slane %v509, 7
      %v896 = vsel %vm713, %v894, %v895
      %v897 = vrot.slane %v895, 2
      %v898 = vrot.slane %v511, 7
      %v899 = vsel %vm713, %v897, %v898
      %v900 = vrot.slane %v898, 2
      %v901 = vrot.slane %v519, 7
      %v902 = vsel %vm713, %v900, %v901
      %v903 = vrot.slane %v901, 2
      %v904 = vrot.slane %v527, 7
      %v905 = vsel %vm713, %v903, %v904
      %v906 = vrot.slane %v904, 2
      %v907 = vrot.slane %v526, 7
      %v908 = vsel %vm713, %v906, %v907
      %v909 = vrot.slane %v907, 2
      %v910 = vrot.slane %v701, 7
      %v911 = vsel %vm713, %v909, %v910
      %v912 = vrot.slane %v535, 7
      %v913 = vrot.slane %v912, 2
      %v914 = vrot.slane %v543, 7
      %v915 = vsel %vm713, %v913, %v914
      %v916 = vrot.slane %v914, 2
      %v917 = vrot.slane %v542, 7
      %v918 = vsel %vm713, %v916, %v917
      %v919 = vrot.slane %v917, 2
      %v920 = vrot.slane %v544, 7
      %v921 = vsel %vm713, %v919, %v920
      %v922 = vrot.slane %v920, 2
      %v923 = vrot.slane %v552, 7
      %v924 = vsel %vm713, %v922, %v923
      %v925 = vrot.slane %v923, 2
      %v926 = vrot.slane %v560, 7
      %v927 = vsel %vm713, %v925, %v926
      %v928 = vrot.slane %v926, 2
      %v929 = vrot.slane %v559, 7
      %v930 = vsel %vm713, %v928, %v929
      %v931 = vrot.slane %v929, 2
      %v932 = vrot.slane %v702, 7
      %v933 = vsel %vm713, %v931, %v932
      %v934 = vrot.slane %v568, 7
      %v935 = vrot.slane %v934, 2
      %v936 = vrot.slane %v576, 7
      %v937 = vsel %vm713, %v935, %v936
      %v938 = vrot.slane %v936, 2
      %v939 = vrot.slane %v575, 7
      %v940 = vsel %vm713, %v938, %v939
      %v941 = vrot.slane %v939, 2
      %v942 = vrot.slane %v577, 7
      %v943 = vsel %vm713, %v941, %v942
      %v944 = vrot.slane %v942, 2
      %v945 = vrot.slane %v585, 7
      %v946 = vsel %vm713, %v944, %v945
      %v947 = vrot.slane %v945, 2
      %v948 = vrot.slane %v593, 7
      %v949 = vsel %vm713, %v947, %v948
      %v950 = vrot.slane %v948, 2
      %v951 = vrot.slane %v592, 7
      %v952 = vsel %vm713, %v950, %v951
      %v953 = vrot.slane %v951, 2
      %v954 = vrot.slane %v703, 7
      %v955 = vsel %vm713, %v953, %v954
      %v956 = vrot.slane %v601, 7
      %v957 = vrot.slane %v956, 2
      %v958 = vrot.slane %v609, 7
      %v959 = vsel %vm713, %v957, %v958
      %v960 = vrot.slane %v958, 2
      %v961 = vrot.slane %v608, 7
      %v962 = vsel %vm713, %v960, %v961
      %v963 = vrot.slane %v961, 2
      %v964 = vrot.slane %v610, 7
      %v965 = vsel %vm713, %v963, %v964
      %v966 = vrot.slane %v964, 2
      %v967 = vrot.slane %v618, 7
      %v968 = vsel %vm713, %v966, %v967
      %v969 = vrot.slane %v967, 2
      %v970 = vrot.slane %v626, 7
      %v971 = vsel %vm713, %v969, %v970
      %v972 = vrot.slane %v970, 2
      %v973 = vrot.slane %v625, 7
      %v974 = vsel %vm713, %v972, %v973
      %v975 = vrot.slane %v973, 2
      %v976 = vrot.slane %v704, 7
      %v977 = vsel %vm713, %v975, %v976
      %v978 = vrot.slane %v634, 7
      %v979 = vrot.slane %v978, 2
      %v980 = vrot.slane %v642, 7
      %v981 = vsel %vm713, %v979, %v980
      %v982 = vrot.slane %v980, 2
      %v983 = vrot.slane %v641, 7
      %v984 = vsel %vm713, %v982, %v983
      %v985 = vrot.slane %v983, 2
      %v986 = vrot.slane %v643, 7
      %v987 = vsel %vm713, %v985, %v986
      %v988 = vrot.slane %v986, 2
      %v989 = vrot.slane %v651, 7
      %v990 = vsel %vm713, %v988, %v989
      %v991 = vrot.slane %v989, 2
      %v992 = vrot.slane %v659, 7
      %v993 = vsel %vm713, %v991, %v992
      %v994 = vrot.slane %v992, 2
      %v995 = vrot.slane %v658, 7
      %v996 = vsel %vm713, %v994, %v995
      %v997 = vrot.slane %v995, 2
      %v998 = vrot.slane %v705, 7
      %v999 = vsel %vm713, %v997, %v998
      %v1000 = vrot.slane %v667, 7
      %v1001 = vrot.slane %v1000, 2
      %v1002 = vrot.slane %v675, 7
      %v1003 = vsel %vm713, %v1001, %v1002
      %v1004 = vrot.slane %v1002, 2
      %v1005 = vrot.slane %v674, 7
      %v1006 = vsel %vm713, %v1004, %v1005
      %v1007 = vrot.slane %v1005, 2
      %v1008 = vrot.slane %v676, 7
      %v1009 = vsel %vm713, %v1007, %v1008
      %v1010 = vrot.slane %v1008, 2
      %v1011 = vrot.slane %v684, 7
      %v1012 = vsel %vm713, %v1010, %v1011
      %v1013 = vrot.slane %v1011, 2
      %v1014 = vrot.slane %v692, 7
      %v1015 = vsel %vm713, %v1013, %v1014
      %v1016 = vrot.slane %v1014, 2
      %v1017 = vrot.slane %v691, 7
      %v1018 = vsel %vm713, %v1016, %v1017
      %v1019 = vrot.slane %v1017, 2
      %v1020 = vrot.slane %v706, 7
      %v1021 = vsel %vm713, %v1019, %v1020
      %v1024 = vcombine.high %v199, %v199
      %v1026 = vunpack.c.l.s4 1983009808
      %v1027 = vunpack.c.0.s8 %v1026
      %v1028 = vlaneseq
      %v1029 = vshrl.u32 %v1028, 7
      %v1030 = vsub.s32 %v1027, %v1029
      %v1031 = vrot.slane %v199, %v1030
      %v1033 = vunpack.c.l.s4 1983009808
      %v1034 = vunpack.c.0.s8 %v1033
      %v1035 = vlaneseq
      %v1036 = vshrl.u32 %v1035, 7
      %v1037 = vsub.s32 %v1034, %v1036
      %v1038 = vrot.slane %v1024, %v1037
      %v1039 = vcombine.high %v1031, %v1031
      %v1040 = vcombine.high %v1038, %v1038
      %v1041 = vcombine.high %v200, %v200
      %v1043 = vunpack.c.l.s4 1983009808
      %v1044 = vunpack.c.0.s8 %v1043
      %v1045 = vlaneseq
      %v1046 = vshrl.u32 %v1045, 7
      %v1047 = vsub.s32 %v1044, %v1046
      %v1048 = vrot.slane %v200, %v1047
      %v1050 = vunpack.c.l.s4 1983009808
      %v1051 = vunpack.c.0.s8 %v1050
      %v1052 = vlaneseq
      %v1053 = vshrl.u32 %v1052, 7
      %v1054 = vsub.s32 %v1051, %v1053
      %v1055 = vrot.slane %v1041, %v1054
      %v1056 = vcombine.high %v1048, %v1048
      %v1057 = vcombine.high %v1055, %v1055
      %v1058 = vrot.slane %v1031, 7
      %v1059 = vrot.slane %v1058, 2
      %v1060 = vrot.slane %v1039, 7
      %v1061 = vsel %vm713, %v1059, %v1060
      %v1062 = vrot.slane %v1060, 2
      %v1063 = vrot.slane %v1038, 7
      %v1064 = vsel %vm713, %v1062, %v1063
      %v1065 = vrot.slane %v1063, 2
      %v1066 = vrot.slane %v1040, 7
      %v1067 = vsel %vm713, %v1065, %v1066
      %v1068 = vrot.slane %v1066, 2
      %v1069 = vrot.slane %v1048, 7
      %v1070 = vsel %vm713, %v1068, %v1069
      %v1071 = vrot.slane %v1069, 2
      %v1072 = vrot.slane %v1056, 7
      %v1073 = vsel %vm713, %v1071, %v1072
      %v1074 = vrot.slane %v1072, 2
      %v1075 = vrot.slane %v1055, 7
      %v1076 = vsel %vm713, %v1074, %v1075
      %v1077 = vrot.slane %v1075, 2
      %v1078 = vrot.slane %v1057, 7
      %v1079 = vsel %vm713, %v1077, %v1078
      %v1082 = vcombine.high %v201, %v201
      %v1084 = vunpack.c.l.s4 1983009808
      %v1085 = vunpack.c.0.s8 %v1084
      %v1086 = vlaneseq
      %v1087 = vshrl.u32 %v1086, 7
      %v1088 = vsub.s32 %v1085, %v1087
      %v1089 = vrot.slane %v201, %v1088
      %v1091 = vunpack.c.l.s4 1983009808
      %v1092 = vunpack.c.0.s8 %v1091
      %v1093 = vlaneseq
      %v1094 = vshrl.u32 %v1093, 7
      %v1095 = vsub.s32 %v1092, %v1094
      %v1096 = vrot.slane %v1082, %v1095
      %v1097 = vcombine.high %v1089, %v1089
      %v1098 = vcombine.high %v1096, %v1096
      %v1099 = vcombine.high %v202, %v202
      %v1101 = vunpack.c.l.s4 1983009808
      %v1102 = vunpack.c.0.s8 %v1101
      %v1103 = vlaneseq
      %v1104 = vshrl.u32 %v1103, 7
      %v1105 = vsub.s32 %v1102, %v1104
      %v1106 = vrot.slane %v202, %v1105
      %v1108 = vunpack.c.l.s4 1983009808
      %v1109 = vunpack.c.0.s8 %v1108
      %v1110 = vlaneseq
      %v1111 = vshrl.u32 %v1110, 7
      %v1112 = vsub.s32 %v1109, %v1111
      %v1113 = vrot.slane %v1099, %v1112
      %v1114 = vcombine.high %v1106, %v1106
      %v1115 = vcombine.high %v1113, %v1113
      %v1116 = vrot.slane %v1089, 7
      %v1117 = vrot.slane %v1116, 2
      %v1118 = vrot.slane %v1097, 7
      %v1119 = vsel %vm713, %v1117, %v1118
      %v1120 = vrot.slane %v1118, 2
      %v1121 = vrot.slane %v1096, 7
      %v1122 = vsel %vm713, %v1120, %v1121
      %v1123 = vrot.slane %v1121, 2
      %v1124 = vrot.slane %v1098, 7
      %v1125 = vsel %vm713, %v1123, %v1124
      %v1126 = vrot.slane %v1124, 2
      %v1127 = vrot.slane %v1106, 7
      %v1128 = vsel %vm713, %v1126, %v1127
      %v1129 = vrot.slane %v1127, 2
      %v1130 = vrot.slane %v1114, 7
      %v1131 = vsel %vm713, %v1129, %v1130
      %v1132 = vrot.slane %v1130, 2
      %v1133 = vrot.slane %v1113, 7
      %v1134 = vsel %vm713, %v1132, %v1133
      %v1135 = vrot.slane %v1133, 2
      %v1136 = vrot.slane %v1115, 7
      %v1137 = vsel %vm713, %v1135, %v1136
      %v1138 = vcombine.low %v238, %v246
      %v1139 = vcombine.low %v245, %v247
      %v1141 = vunpack.c.l.s4 1983009808
      %v1142 = vunpack.c.0.s8 %v1141
      %v1143 = vlaneseq
      %v1144 = vshrl.u32 %v1143, 7
      %v1145 = vsub.s32 %v1142, %v1144
      %v1146 = vrot.slane %v1138, %v1145
      %v1148 = vunpack.c.l.s4 1983009808
      %v1149 = vunpack.c.0.s8 %v1148
      %v1150 = vlaneseq
      %v1151 = vshrl.u32 %v1150, 7
      %v1152 = vsub.s32 %v1149, %v1151
      %v1153 = vrot.slane %v1139, %v1152
      %v1154 = vcombine.low %v1146, %v1153
      %v1155 = vcombine.low %v255, %v263
      %v1156 = vcombine.low %v262, %v271
      %v1158 = vunpack.c.l.s4 1983009808
      %v1159 = vunpack.c.0.s8 %v1158
      %v1160 = vlaneseq
      %v1161 = vshrl.u32 %v1160, 7
      %v1162 = vsub.s32 %v1159, %v1161
      %v1163 = vrot.slane %v1155, %v1162
      %v1165 = vunpack.c.l.s4 1983009808
      %v1166 = vunpack.c.0.s8 %v1165
      %v1167 = vlaneseq
      %v1168 = vshrl.u32 %v1167, 7
      %v1169 = vsub.s32 %v1166, %v1168
      %v1170 = vrot.slane %v1156, %v1169
      %v1171 = vcombine.low %v1163, %v1170
      %v1172 = vcombine.low %v279, %v278
      %v1173 = vcombine.low %v280, %v288
      %v1175 = vunpack.c.l.s4 1983009808
      %v1176 = vunpack.c.0.s8 %v1175
      %v1177 = vlaneseq
      %v1178 = vshrl.u32 %v1177, 7
      %v1179 = vsub.s32 %v1176, %v1178
      %v1180 = vrot.slane %v1172, %v1179
      %v1182 = vunpack.c.l.s4 1983009808
      %v1183 = vunpack.c.0.s8 %v1182
      %v1184 = vlaneseq
      %v1185 = vshrl.u32 %v1184, 7
      %v1186 = vsub.s32 %v1183, %v1185
      %v1187 = vrot.slane %v1173, %v1186
      %v1188 = vcombine.low %v1180, %v1187
      %v1189 = vcombine.low %v296, %v295
      %v1190 = vcombine.low %v304, %v312
      %v1192 = vunpack.c.l.s4 1983009808
      %v1193 = vunpack.c.0.s8 %v1192
      %v1194 = vlaneseq
      %v1195 = vshrl.u32 %v1194, 7
      %v1196 = vsub.s32 %v1193, %v1195
      %v1197 = vrot.slane %v1189, %v1196
      %v1199 = vunpack.c.l.s4 1983009808
      %v1200 = vunpack.c.0.s8 %v1199
      %v1201 = vlaneseq
      %v1202 = vshrl.u32 %v1201, 7
      %v1203 = vsub.s32 %v1200, %v1202
      %v1204 = vrot.slane %v1190, %v1203
      %v1205 = vcombine.low %v1197, %v1204
      %v1206 = vcombine.low %v311, %v313
      %v1207 = vcombine.low %v321, %v329
      %v1209 = vunpack.c.l.s4 1983009808
      %v1210 = vunpack.c.0.s8 %v1209
      %v1211 = vlaneseq
      %v1212 = vshrl.u32 %v1211, 7
      %v1213 = vsub.s32 %v1210, %v1212
      %v1214 = vrot.slane %v1206, %v1213
      %v1216 = vunpack.c.l.s4 1983009808
      %v1217 = vunpack.c.0.s8 %v1216
      %v1218 = vlaneseq
      %v1219 = vshrl.u32 %v1218, 7
      %v1220 = vsub.s32 %v1217, %v1219
      %v1221 = vrot.slane %v1207, %v1220
      %v1222 = vcombine.low %v1214, %v1221
      %v1223 = vcombine.low %v328, %v337
      %v1224 = vcombine.low %v345, %v344
      %v1226 = vunpack.c.l.s4 1983009808
      %v1227 = vunpack.c.0.s8 %v1226
      %v1228 = vlaneseq
      %v1229 = vshrl.u32 %v1228, 7
      %v1230 = vsub.s32 %v1227, %v1229
      %v1231 = vrot.slane %v1223, %v1230
      %v1233 = vunpack.c.l.s4 1983009808
      %v1234 = vunpack.c.0.s8 %v1233
      %v1235 = vlaneseq
      %v1236 = vshrl.u32 %v1235, 7
      %v1237 = vsub.s32 %v1234, %v1236
      %v1238 = vrot.slane %v1224, %v1237
      %v1239 = vcombine.low %v1231, %v1238
      %v1240 = vcombine.low %v346, %v354
      %v1241 = vcombine.low %v362, %v361
      %v1243 = vunpack.c.l.s4 1983009808
      %v1244 = vunpack.c.0.s8 %v1243
      %v1245 = vlaneseq
      %v1246 = vshrl.u32 %v1245, 7
      %v1247 = vsub.s32 %v1244, %v1246
      %v1248 = vrot.slane %v1240, %v1247
      %v1250 = vunpack.c.l.s4 1983009808
      %v1251 = vunpack.c.0.s8 %v1250
      %v1252 = vlaneseq
      %v1253 = vshrl.u32 %v1252, 7
      %v1254 = vsub.s32 %v1251, %v1253
      %v1255 = vrot.slane %v1241, %v1254
      %v1256 = vcombine.low %v1248, %v1255
      %v1257 = vcombine.low %v370, %v378
      %v1258 = vcombine.low %v377, %v379
      %v1260 = vunpack.c.l.s4 1983009808
      %v1261 = vunpack.c.0.s8 %v1260
      %v1262 = vlaneseq
      %v1263 = vshrl.u32 %v1262, 7
      %v1264 = vsub.s32 %v1261, %v1263
      %v1265 = vrot.slane %v1257, %v1264
      %v1267 = vunpack.c.l.s4 1983009808
      %v1268 = vunpack.c.0.s8 %v1267
      %v1269 = vlaneseq
      %v1270 = vshrl.u32 %v1269, 7
      %v1271 = vsub.s32 %v1268, %v1270
      %v1272 = vrot.slane %v1258, %v1271
      %v1273 = vcombine.low %v1265, %v1272
      %v1274 = vcombine.low %v387, %v395
      %v1275 = vcombine.low %v394, %v403
      %v1277 = vunpack.c.l.s4 1983009808
      %v1278 = vunpack.c.0.s8 %v1277
      %v1279 = vlaneseq
      %v1280 = vshrl.u32 %v1279, 7
      %v1281 = vsub.s32 %v1278, %v1280
      %v1282 = vrot.slane %v1274, %v1281
      %v1284 = vunpack.c.l.s4 1983009808
      %v1285 = vunpack.c.0.s8 %v1284
      %v1286 = vlaneseq
      %v1287 = vshrl.u32 %v1286, 7
      %v1288 = vsub.s32 %v1285, %v1287
      %v1289 = vrot.slane %v1275, %v1288
      %v1290 = vcombine.low %v1282, %v1289
      %v1291 = vcombine.low %v411, %v410
      %v1292 = vcombine.low %v412, %v420
      %v1294 = vunpack.c.l.s4 1983009808
      %v1295 = vunpack.c.0.s8 %v1294
      %v1296 = vlaneseq
      %v1297 = vshrl.u32 %v1296, 7
      %v1298 = vsub.s32 %v1295, %v1297
      %v1299 = vrot.slane %v1291, %v1298
      %v1301 = vunpack.c.l.s4 1983009808
      %v1302 = vunpack.c.0.s8 %v1301
      %v1303 = vlaneseq
      %v1304 = vshrl.u32 %v1303, 7
      %v1305 = vsub.s32 %v1302, %v1304
      %v1306 = vrot.slane %v1292, %v1305
      %v1307 = vcombine.low %v1299, %v1306
      %v1308 = vcombine.low %v428, %v427
      %v1309 = vcombine.low %v436, %v444
      %v1311 = vunpack.c.l.s4 1983009808
      %v1312 = vunpack.c.0.s8 %v1311
      %v1313 = vlaneseq
      %v1314 = vshrl.u32 %v1313, 7
      %v1315 = vsub.s32 %v1312, %v1314
      %v1316 = vrot.slane %v1308, %v1315
      %v1318 = vunpack.c.l.s4 1983009808
      %v1319 = vunpack.c.0.s8 %v1318
      %v1320 = vlaneseq
      %v1321 = vshrl.u32 %v1320, 7
      %v1322 = vsub.s32 %v1319, %v1321
      %v1323 = vrot.slane %v1309, %v1322
      %v1324 = vcombine.low %v1316, %v1323
      %v1325 = vcombine.low %v443, %v445
      %v1326 = vcombine.low %v453, %v461
      %v1328 = vunpack.c.l.s4 1983009808
      %v1329 = vunpack.c.0.s8 %v1328
      %v1330 = vlaneseq
      %v1331 = vshrl.u32 %v1330, 7
      %v1332 = vsub.s32 %v1329, %v1331
      %v1333 = vrot.slane %v1325, %v1332
      %v1335 = vunpack.c.l.s4 1983009808
      %v1336 = vunpack.c.0.s8 %v1335
      %v1337 = vlaneseq
      %v1338 = vshrl.u32 %v1337, 7
      %v1339 = vsub.s32 %v1336, %v1338
      %v1340 = vrot.slane %v1326, %v1339
      %v1341 = vcombine.low %v1333, %v1340
      %v1342 = vcombine.low %v460, %v469
      %v1343 = vcombine.low %v477, %v476
      %v1345 = vunpack.c.l.s4 1983009808
      %v1346 = vunpack.c.0.s8 %v1345
      %v1347 = vlaneseq
      %v1348 = vshrl.u32 %v1347, 7
      %v1349 = vsub.s32 %v1346, %v1348
      %v1350 = vrot.slane %v1342, %v1349
      %v1352 = vunpack.c.l.s4 1983009808
      %v1353 = vunpack.c.0.s8 %v1352
      %v1354 = vlaneseq
      %v1355 = vshrl.u32 %v1354, 7
      %v1356 = vsub.s32 %v1353, %v1355
      %v1357 = vrot.slane %v1343, %v1356
      %v1358 = vcombine.low %v1350, %v1357
      %v1359 = vcombine.low %v478, %v486
      %v1360 = vcombine.low %v494, %v493
      %v1362 = vunpack.c.l.s4 1983009808
      %v1363 = vunpack.c.0.s8 %v1362
      %v1364 = vlaneseq
      %v1365 = vshrl.u32 %v1364, 7
      %v1366 = vsub.s32 %v1363, %v1365
      %v1367 = vrot.slane %v1359, %v1366
      %v1369 = vunpack.c.l.s4 1983009808
      %v1370 = vunpack.c.0.s8 %v1369
      %v1371 = vlaneseq
      %v1372 = vshrl.u32 %v1371, 7
      %v1373 = vsub.s32 %v1370, %v1372
      %v1374 = vrot.slane %v1360, %v1373
      %v1375 = vcombine.low %v1367, %v1374
      %v1376 = vcombine.low %v502, %v510
      %v1377 = vcombine.low %v509, %v511
      %v1379 = vunpack.c.l.s4 1983009808
      %v1380 = vunpack.c.0.s8 %v1379
      %v1381 = vlaneseq
      %v1382 = vshrl.u32 %v1381, 7
      %v1383 = vsub.s32 %v1380, %v1382
      %v1384 = vrot.slane %v1376, %v1383
      %v1386 = vunpack.c.l.s4 1983009808
      %v1387 = vunpack.c.0.s8 %v1386
      %v1388 = vlaneseq
      %v1389 = vshrl.u32 %v1388, 7
      %v1390 = vsub.s32 %v1387, %v1389
      %v1391 = vrot.slane %v1377, %v1390
      %v1392 = vcombine.low %v1384, %v1391
      %v1393 = vcombine.low %v519, %v527
      %v1394 = vcombine.low %v526, %v535
      %v1396 = vunpack.c.l.s4 1983009808
      %v1397 = vunpack.c.0.s8 %v1396
      %v1398 = vlaneseq
      %v1399 = vshrl.u32 %v1398, 7
      %v1400 = vsub.s32 %v1397, %v1399
      %v1401 = vrot.slane %v1393, %v1400
      %v1403 = vunpack.c.l.s4 1983009808
      %v1404 = vunpack.c.0.s8 %v1403
      %v1405 = vlaneseq
      %v1406 = vshrl.u32 %v1405, 7
      %v1407 = vsub.s32 %v1404, %v1406
      %v1408 = vrot.slane %v1394, %v1407
      %v1409 = vcombine.low %v1401, %v1408
      %v1410 = vcombine.low %v543, %v542
      %v1411 = vcombine.low %v544, %v552
      %v1413 = vunpack.c.l.s4 1983009808
      %v1414 = vunpack.c.0.s8 %v1413
      %v1415 = vlaneseq
      %v1416 = vshrl.u32 %v1415, 7
      %v1417 = vsub.s32 %v1414, %v1416
      %v1418 = vrot.slane %v1410, %v1417
      %v1420 = vunpack.c.l.s4 1983009808
      %v1421 = vunpack.c.0.s8 %v1420
      %v1422 = vlaneseq
      %v1423 = vshrl.u32 %v1422, 7
      %v1424 = vsub.s32 %v1421, %v1423
      %v1425 = vrot.slane %v1411, %v1424
      %v1426 = vcombine.low %v1418, %v1425
      %v1427 = vcombine.low %v560, %v559
      %v1428 = vcombine.low %v568, %v576
      %v1430 = vunpack.c.l.s4 1983009808
      %v1431 = vunpack.c.0.s8 %v1430
      %v1432 = vlaneseq
      %v1433 = vshrl.u32 %v1432, 7
      %v1434 = vsub.s32 %v1431, %v1433
      %v1435 = vrot.slane %v1427, %v1434
      %v1437 = vunpack.c.l.s4 1983009808
      %v1438 = vunpack.c.0.s8 %v1437
      %v1439 = vlaneseq
      %v1440 = vshrl.u32 %v1439, 7
      %v1441 = vsub.s32 %v1438, %v1440
      %v1442 = vrot.slane %v1428, %v1441
      %v1443 = vcombine.low %v1435, %v1442
      %v1444 = vcombine.low %v575, %v577
      %v1445 = vcombine.low %v585, %v593
      %v1447 = vunpack.c.l.s4 1983009808
      %v1448 = vunpack.c.0.s8 %v1447
      %v1449 = vlaneseq
      %v1450 = vshrl.u32 %v1449, 7
      %v1451 = vsub.s32 %v1448, %v1450
      %v1452 = vrot.slane %v1444, %v1451
      %v1454 = vunpack.c.l.s4 1983009808
      %v1455 = vunpack.c.0.s8 %v1454
      %v1456 = vlaneseq
      %v1457 = vshrl.u32 %v1456, 7
      %v1458 = vsub.s32 %v1455, %v1457
      %v1459 = vrot.slane %v1445, %v1458
      %v1460 = vcombine.low %v1452, %v1459
      %v1461 = vcombine.low %v592, %v601
      %v1462 = vcombine.low %v609, %v608
      %v1464 = vunpack.c.l.s4 1983009808
      %v1465 = vunpack.c.0.s8 %v1464
      %v1466 = vlaneseq
      %v1467 = vshrl.u32 %v1466, 7
      %v1468 = vsub.s32 %v1465, %v1467
      %v1469 = vrot.slane %v1461, %v1468
      %v1471 = vunpack.c.l.s4 1983009808
      %v1472 = vunpack.c.0.s8 %v1471
      %v1473 = vlaneseq
      %v1474 = vshrl.u32 %v1473, 7
      %v1475 = vsub.s32 %v1472, %v1474
      %v1476 = vrot.slane %v1462, %v1475
      %v1477 = vcombine.low %v1469, %v1476
      %v1478 = vcombine.low %v610, %v618
      %v1479 = vcombine.low %v626, %v625
      %v1481 = vunpack.c.l.s4 1983009808
      %v1482 = vunpack.c.0.s8 %v1481
      %v1483 = vlaneseq
      %v1484 = vshrl.u32 %v1483, 7
      %v1485 = vsub.s32 %v1482, %v1484
      %v1486 = vrot.slane %v1478, %v1485
      %v1488 = vunpack.c.l.s4 1983009808
      %v1489 = vunpack.c.0.s8 %v1488
      %v1490 = vlaneseq
      %v1491 = vshrl.u32 %v1490, 7
      %v1492 = vsub.s32 %v1489, %v1491
      %v1493 = vrot.slane %v1479, %v1492
      %v1494 = vcombine.low %v1486, %v1493
      %v1495 = vcombine.low %v634, %v642
      %v1496 = vcombine.low %v641, %v643
      %v1498 = vunpack.c.l.s4 1983009808
      %v1499 = vunpack.c.0.s8 %v1498
      %v1500 = vlaneseq
      %v1501 = vshrl.u32 %v1500, 7
      %v1502 = vsub.s32 %v1499, %v1501
      %v1503 = vrot.slane %v1495, %v1502
      %v1505 = vunpack.c.l.s4 1983009808
      %v1506 = vunpack.c.0.s8 %v1505
      %v1507 = vlaneseq
      %v1508 = vshrl.u32 %v1507, 7
      %v1509 = vsub.s32 %v1506, %v1508
      %v1510 = vrot.slane %v1496, %v1509
      %v1511 = vcombine.low %v1503, %v1510
      %v1512 = vcombine.low %v651, %v659
      %v1513 = vcombine.low %v658, %v667
      %v1515 = vunpack.c.l.s4 1983009808
      %v1516 = vunpack.c.0.s8 %v1515
      %v1517 = vlaneseq
      %v1518 = vshrl.u32 %v1517, 7
      %v1519 = vsub.s32 %v1516, %v1518
      %v1520 = vrot.slane %v1512, %v1519
      %v1522 = vunpack.c.l.s4 1983009808
      %v1523 = vunpack.c.0.s8 %v1522
      %v1524 = vlaneseq
      %v1525 = vshrl.u32 %v1524, 7
      %v1526 = vsub.s32 %v1523, %v1525
      %v1527 = vrot.slane %v1513, %v1526
      %v1528 = vcombine.low %v1520, %v1527
      %v1529 = vcombine.low %v675, %v674
      %v1530 = vcombine.low %v676, %v684
      %v1532 = vunpack.c.l.s4 1983009808
      %v1533 = vunpack.c.0.s8 %v1532
      %v1534 = vlaneseq
      %v1535 = vshrl.u32 %v1534, 7
      %v1536 = vsub.s32 %v1533, %v1535
      %v1537 = vrot.slane %v1529, %v1536
      %v1539 = vunpack.c.l.s4 1983009808
      %v1540 = vunpack.c.0.s8 %v1539
      %v1541 = vlaneseq
      %v1542 = vshrl.u32 %v1541, 7
      %v1543 = vsub.s32 %v1540, %v1542
      %v1544 = vrot.slane %v1530, %v1543
      %v1545 = vcombine.low %v1537, %v1544
      %v1546 = vcombine.low %v692, %v691
      %v1548 = vunpack.c.l.s4 1983009808
      %v1549 = vunpack.c.0.s8 %v1548
      %v1550 = vlaneseq
      %v1551 = vshrl.u32 %v1550, 7
      %v1552 = vsub.s32 %v1549, %v1551
      %v1553 = vrot.slane %v1546, %v1552
      %v1579 = vcombine.low %v717, %v720
      %v1580 = vcombine.low %v723, %v726
      %v1582 = vunpack.c.l.s4 1983009808
      %v1583 = vunpack.c.0.s8 %v1582
      %v1584 = vlaneseq
      %v1585 = vshrl.u32 %v1584, 7
      %v1586 = vsub.s32 %v1583, %v1585
      %v1587 = vrot.slane %v1579, %v1586
      %v1589 = vunpack.c.l.s4 1983009808
      %v1590 = vunpack.c.0.s8 %v1589
      %v1591 = vlaneseq
      %v1592 = vshrl.u32 %v1591, 7
      %v1593 = vsub.s32 %v1590, %v1592
      %v1594 = vrot.slane %v1580, %v1593
      %v1595 = vcombine.low %v1587, %v1594
      %v1596 = vcombine.low %v729, %v732
      %v1597 = vcombine.low %v735, %v739
      %v1599 = vunpack.c.l.s4 1983009808
      %v1600 = vunpack.c.0.s8 %v1599
      %v1601 = vlaneseq
      %v1602 = vshrl.u32 %v1601, 7
      %v1603 = vsub.s32 %v1600, %v1602
      %v1604 = vrot.slane %v1596, %v1603
      %v1606 = vunpack.c.l.s4 1983009808
      %v1607 = vunpack.c.0.s8 %v1606
      %v1608 = vlaneseq
      %v1609 = vshrl.u32 %v1608, 7
      %v1610 = vsub.s32 %v1607, %v1609
      %v1611 = vrot.slane %v1597, %v1610
      %v1612 = vcombine.low %v1604, %v1611
      %v1613 = vcombine.low %v742, %v745
      %v1614 = vcombine.low %v748, %v751
      %v1616 = vunpack.c.l.s4 1983009808
      %v1617 = vunpack.c.0.s8 %v1616
      %v1618 = vlaneseq
      %v1619 = vshrl.u32 %v1618, 7
      %v1620 = vsub.s32 %v1617, %v1619
      %v1621 = vrot.slane %v1613, %v1620
      %v1623 = vunpack.c.l.s4 1983009808
      %v1624 = vunpack.c.0.s8 %v1623
      %v1625 = vlaneseq
      %v1626 = vshrl.u32 %v1625, 7
      %v1627 = vsub.s32 %v1624, %v1626
      %v1628 = vrot.slane %v1614, %v1627
      %v1629 = vcombine.low %v1621, %v1628
      %v1630 = vcombine.low %v754, %v757
      %v1631 = vcombine.low %v761, %v764
      %v1633 = vunpack.c.l.s4 1983009808
      %v1634 = vunpack.c.0.s8 %v1633
      %v1635 = vlaneseq
      %v1636 = vshrl.u32 %v1635, 7
      %v1637 = vsub.s32 %v1634, %v1636
      %v1638 = vrot.slane %v1630, %v1637
      %v1640 = vunpack.c.l.s4 1983009808
      %v1641 = vunpack.c.0.s8 %v1640
      %v1642 = vlaneseq
      %v1643 = vshrl.u32 %v1642, 7
      %v1644 = vsub.s32 %v1641, %v1643
      %v1645 = vrot.slane %v1631, %v1644
      %v1646 = vcombine.low %v1638, %v1645
      %v1647 = vcombine.low %v767, %v770
      %v1648 = vcombine.low %v773, %v776
      %v1650 = vunpack.c.l.s4 1983009808
      %v1651 = vunpack.c.0.s8 %v1650
      %v1652 = vlaneseq
      %v1653 = vshrl.u32 %v1652, 7
      %v1654 = vsub.s32 %v1651, %v1653
      %v1655 = vrot.slane %v1647, %v1654
      %v1657 = vunpack.c.l.s4 1983009808
      %v1658 = vunpack.c.0.s8 %v1657
      %v1659 = vlaneseq
      %v1660 = vshrl.u32 %v1659, 7
      %v1661 = vsub.s32 %v1658, %v1660
      %v1662 = vrot.slane %v1648, %v1661
      %v1663 = vcombine.low %v1655, %v1662
      %v1664 = vcombine.low %v779, %v783
      %v1665 = vcombine.low %v786, %v789
      %v1667 = vunpack.c.l.s4 1983009808
      %v1668 = vunpack.c.0.s8 %v1667
      %v1669 = vlaneseq
      %v1670 = vshrl.u32 %v1669, 7
      %v1671 = vsub.s32 %v1668, %v1670
      %v1672 = vrot.slane %v1664, %v1671
      %v1674 = vunpack.c.l.s4 1983009808
      %v1675 = vunpack.c.0.s8 %v1674
      %v1676 = vlaneseq
      %v1677 = vshrl.u32 %v1676, 7
      %v1678 = vsub.s32 %v1675, %v1677
      %v1679 = vrot.slane %v1665, %v1678
      %v1680 = vcombine.low %v1672, %v1679
      %v1681 = vcombine.low %v792, %v795
      %v1682 = vcombine.low %v798, %v801
      %v1684 = vunpack.c.l.s4 1983009808
      %v1685 = vunpack.c.0.s8 %v1684
      %v1686 = vlaneseq
      %v1687 = vshrl.u32 %v1686, 7
      %v1688 = vsub.s32 %v1685, %v1687
      %v1689 = vrot.slane %v1681, %v1688
      %v1691 = vunpack.c.l.s4 1983009808
      %v1692 = vunpack.c.0.s8 %v1691
      %v1693 = vlaneseq
      %v1694 = vshrl.u32 %v1693, 7
      %v1695 = vsub.s32 %v1692, %v1694
      %v1696 = vrot.slane %v1682, %v1695
      %v1697 = vcombine.low %v1689, %v1696
      %v1698 = vcombine.low %v805, %v808
      %v1699 = vcombine.low %v811, %v814
      %v1701 = vunpack.c.l.s4 1983009808
      %v1702 = vunpack.c.0.s8 %v1701
      %v1703 = vlaneseq
      %v1704 = vshrl.u32 %v1703, 7
      %v1705 = vsub.s32 %v1702, %v1704
      %v1706 = vrot.slane %v1698, %v1705
      %v1708 = vunpack.c.l.s4 1983009808
      %v1709 = vunpack.c.0.s8 %v1708
      %v1710 = vlaneseq
      %v1711 = vshrl.u32 %v1710, 7
      %v1712 = vsub.s32 %v1709, %v1711
      %v1713 = vrot.slane %v1699, %v1712
      %v1714 = vcombine.low %v1706, %v1713
      %v1715 = vcombine.low %v817, %v820
      %v1716 = vcombine.low %v823, %v827
      %v1718 = vunpack.c.l.s4 1983009808
      %v1719 = vunpack.c.0.s8 %v1718
      %v1720 = vlaneseq
      %v1721 = vshrl.u32 %v1720, 7
      %v1722 = vsub.s32 %v1719, %v1721
      %v1723 = vrot.slane %v1715, %v1722
      %v1725 = vunpack.c.l.s4 1983009808
      %v1726 = vunpack.c.0.s8 %v1725
      %v1727 = vlaneseq
      %v1728 = vshrl.u32 %v1727, 7
      %v1729 = vsub.s32 %v1726, %v1728
      %v1730 = vrot.slane %v1716, %v1729
      %v1731 = vcombine.low %v1723, %v1730
      %v1732 = vcombine.low %v830, %v833
      %v1733 = vcombine.low %v836, %v839
      %v1735 = vunpack.c.l.s4 1983009808
      %v1736 = vunpack.c.0.s8 %v1735
      %v1737 = vlaneseq
      %v1738 = vshrl.u32 %v1737, 7
      %v1739 = vsub.s32 %v1736, %v1738
      %v1740 = vrot.slane %v1732, %v1739
      %v1742 = vunpack.c.l.s4 1983009808
      %v1743 = vunpack.c.0.s8 %v1742
      %v1744 = vlaneseq
      %v1745 = vshrl.u32 %v1744, 7
      %v1746 = vsub.s32 %v1743, %v1745
      %v1747 = vrot.slane %v1733, %v1746
      %v1748 = vcombine.low %v1740, %v1747
      %v1749 = vcombine.low %v842, %v845
      %v1750 = vcombine.low %v849, %v852
      %v1752 = vunpack.c.l.s4 1983009808
      %v1753 = vunpack.c.0.s8 %v1752
      %v1754 = vlaneseq
      %v1755 = vshrl.u32 %v1754, 7
      %v1756 = vsub.s32 %v1753, %v1755
      %v1757 = vrot.slane %v1749, %v1756
      %v1759 = vunpack.c.l.s4 1983009808
      %v1760 = vunpack.c.0.s8 %v1759
      %v1761 = vlaneseq
      %v1762 = vshrl.u32 %v1761, 7
      %v1763 = vsub.s32 %v1760, %v1762
      %v1764 = vrot.slane %v1750, %v1763
      %v1765 = vcombine.low %v1757, %v1764
      %v1766 = vcombine.low %v855, %v858
      %v1767 = vcombine.low %v861, %v864
      %v1769 = vunpack.c.l.s4 1983009808
      %v1770 = vunpack.c.0.s8 %v1769
      %v1771 = vlaneseq
      %v1772 = vshrl.u32 %v1771, 7
      %v1773 = vsub.s32 %v1770, %v1772
      %v1774 = vrot.slane %v1766, %v1773
      %v1776 = vunpack.c.l.s4 1983009808
      %v1777 = vunpack.c.0.s8 %v1776
      %v1778 = vlaneseq
      %v1779 = vshrl.u32 %v1778, 7
      %v1780 = vsub.s32 %v1777, %v1779
      %v1781 = vrot.slane %v1767, %v1780
      %v1782 = vcombine.low %v1774, %v1781
      %v1783 = vcombine.low %v867, %v871
      %v1784 = vcombine.low %v874, %v877
      %v1786 = vunpack.c.l.s4 1983009808
      %v1787 = vunpack.c.0.s8 %v1786
      %v1788 = vlaneseq
      %v1789 = vshrl.u32 %v1788, 7
      %v1790 = vsub.s32 %v1787, %v1789
      %v1791 = vrot.slane %v1783, %v1790
      %v1793 = vunpack.c.l.s4 1983009808
      %v1794 = vunpack.c.0.s8 %v1793
      %v1795 = vlaneseq
      %v1796 = vshrl.u32 %v1795, 7
      %v1797 = vsub.s32 %v1794, %v1796
      %v1798 = vrot.slane %v1784, %v1797
      %v1799 = vcombine.low %v1791, %v1798
      %v1800 = vcombine.low %v880, %v883
      %v1801 = vcombine.low %v886, %v889
      %v1803 = vunpack.c.l.s4 1983009808
      %v1804 = vunpack.c.0.s8 %v1803
      %v1805 = vlaneseq
      %v1806 = vshrl.u32 %v1805, 7
      %v1807 = vsub.s32 %v1804, %v1806
      %v1808 = vrot.slane %v1800, %v1807
      %v1810 = vunpack.c.l.s4 1983009808
      %v1811 = vunpack.c.0.s8 %v1810
      %v1812 = vlaneseq
      %v1813 = vshrl.u32 %v1812, 7
      %v1814 = vsub.s32 %v1811, %v1813
      %v1815 = vrot.slane %v1801, %v1814
      %v1816 = vcombine.low %v1808, %v1815
      %v1817 = vcombine.low %v893, %v896
      %v1818 = vcombine.low %v899, %v902
      %v1820 = vunpack.c.l.s4 1983009808
      %v1821 = vunpack.c.0.s8 %v1820
      %v1822 = vlaneseq
      %v1823 = vshrl.u32 %v1822, 7
      %v1824 = vsub.s32 %v1821, %v1823
      %v1825 = vrot.slane %v1817, %v1824
      %v1827 = vunpack.c.l.s4 1983009808
      %v1828 = vunpack.c.0.s8 %v1827
      %v1829 = vlaneseq
      %v1830 = vshrl.u32 %v1829, 7
      %v1831 = vsub.s32 %v1828, %v1830
      %v1832 = vrot.slane %v1818, %v1831
      %v1833 = vcombine.low %v1825, %v1832
      %v1834 = vcombine.low %v905, %v908
      %v1835 = vcombine.low %v911, %v915
      %v1837 = vunpack.c.l.s4 1983009808
      %v1838 = vunpack.c.0.s8 %v1837
      %v1839 = vlaneseq
      %v1840 = vshrl.u32 %v1839, 7
      %v1841 = vsub.s32 %v1838, %v1840
      %v1842 = vrot.slane %v1834, %v1841
      %v1844 = vunpack.c.l.s4 1983009808
      %v1845 = vunpack.c.0.s8 %v1844
      %v1846 = vlaneseq
      %v1847 = vshrl.u32 %v1846, 7
      %v1848 = vsub.s32 %v1845, %v1847
      %v1849 = vrot.slane %v1835, %v1848
      %v1850 = vcombine.low %v1842, %v1849
      %v1851 = vcombine.low %v918, %v921
      %v1852 = vcombine.low %v924, %v927
      %v1854 = vunpack.c.l.s4 1983009808
      %v1855 = vunpack.c.0.s8 %v1854
      %v1856 = vlaneseq
      %v1857 = vshrl.u32 %v1856, 7
      %v1858 = vsub.s32 %v1855, %v1857
      %v1859 = vrot.slane %v1851, %v1858
      %v1861 = vunpack.c.l.s4 1983009808
      %v1862 = vunpack.c.0.s8 %v1861
      %v1863 = vlaneseq
      %v1864 = vshrl.u32 %v1863, 7
      %v1865 = vsub.s32 %v1862, %v1864
      %v1866 = vrot.slane %v1852, %v1865
      %v1867 = vcombine.low %v1859, %v1866
      %v1868 = vcombine.low %v930, %v933
      %v1869 = vcombine.low %v937, %v940
      %v1871 = vunpack.c.l.s4 1983009808
      %v1872 = vunpack.c.0.s8 %v1871
      %v1873 = vlaneseq
      %v1874 = vshrl.u32 %v1873, 7
      %v1875 = vsub.s32 %v1872, %v1874
      %v1876 = vrot.slane %v1868, %v1875
      %v1878 = vunpack.c.l.s4 1983009808
      %v1879 = vunpack.c.0.s8 %v1878
      %v1880 = vlaneseq
      %v1881 = vshrl.u32 %v1880, 7
      %v1882 = vsub.s32 %v1879, %v1881
      %v1883 = vrot.slane %v1869, %v1882
      %v1884 = vcombine.low %v1876, %v1883
      %v1885 = vcombine.low %v943, %v946
      %v1886 = vcombine.low %v949, %v952
      %v1888 = vunpack.c.l.s4 1983009808
      %v1889 = vunpack.c.0.s8 %v1888
      %v1890 = vlaneseq
      %v1891 = vshrl.u32 %v1890, 7
      %v1892 = vsub.s32 %v1889, %v1891
      %v1893 = vrot.slane %v1885, %v1892
      %v1895 = vunpack.c.l.s4 1983009808
      %v1896 = vunpack.c.0.s8 %v1895
      %v1897 = vlaneseq
      %v1898 = vshrl.u32 %v1897, 7
      %v1899 = vsub.s32 %v1896, %v1898
      %v1900 = vrot.slane %v1886, %v1899
      %v1901 = vcombine.low %v1893, %v1900
      %v1902 = vcombine.low %v955, %v959
      %v1903 = vcombine.low %v962, %v965
      %v1905 = vunpack.c.l.s4 1983009808
      %v1906 = vunpack.c.0.s8 %v1905
      %v1907 = vlaneseq
      %v1908 = vshrl.u32 %v1907, 7
      %v1909 = vsub.s32 %v1906, %v1908
      %v1910 = vrot.slane %v1902, %v1909
      %v1912 = vunpack.c.l.s4 1983009808
      %v1913 = vunpack.c.0.s8 %v1912
      %v1914 = vlaneseq
      %v1915 = vshrl.u32 %v1914, 7
      %v1916 = vsub.s32 %v1913, %v1915
      %v1917 = vrot.slane %v1903, %v1916
      %v1918 = vcombine.low %v1910, %v1917
      %v1919 = vcombine.low %v968, %v971
      %v1920 = vcombine.low %v974, %v977
      %v1922 = vunpack.c.l.s4 1983009808
      %v1923 = vunpack.c.0.s8 %v1922
      %v1924 = vlaneseq
      %v1925 = vshrl.u32 %v1924, 7
      %v1926 = vsub.s32 %v1923, %v1925
      %v1927 = vrot.slane %v1919, %v1926
      %v1929 = vunpack.c.l.s4 1983009808
      %v1930 = vunpack.c.0.s8 %v1929
      %v1931 = vlaneseq
      %v1932 = vshrl.u32 %v1931, 7
      %v1933 = vsub.s32 %v1930, %v1932
      %v1934 = vrot.slane %v1920, %v1933
      %v1935 = vcombine.low %v1927, %v1934
      %v1936 = vcombine.low %v981, %v984
      %v1937 = vcombine.low %v987, %v990
      %v1939 = vunpack.c.l.s4 1983009808
      %v1940 = vunpack.c.0.s8 %v1939
      %v1941 = vlaneseq
      %v1942 = vshrl.u32 %v1941, 7
      %v1943 = vsub.s32 %v1940, %v1942
      %v1944 = vrot.slane %v1936, %v1943
      %v1946 = vunpack.c.l.s4 1983009808
      %v1947 = vunpack.c.0.s8 %v1946
      %v1948 = vlaneseq
      %v1949 = vshrl.u32 %v1948, 7
      %v1950 = vsub.s32 %v1947, %v1949
      %v1951 = vrot.slane %v1937, %v1950
      %v1952 = vcombine.low %v1944, %v1951
      %v1953 = vcombine.low %v993, %v996
      %v1954 = vcombine.low %v999, %v1003
      %v1956 = vunpack.c.l.s4 1983009808
      %v1957 = vunpack.c.0.s8 %v1956
      %v1958 = vlaneseq
      %v1959 = vshrl.u32 %v1958, 7
      %v1960 = vsub.s32 %v1957, %v1959
      %v1961 = vrot.slane %v1953, %v1960
      %v1963 = vunpack.c.l.s4 1983009808
      %v1964 = vunpack.c.0.s8 %v1963
      %v1965 = vlaneseq
      %v1966 = vshrl.u32 %v1965, 7
      %v1967 = vsub.s32 %v1964, %v1966
      %v1968 = vrot.slane %v1954, %v1967
      %v1969 = vcombine.low %v1961, %v1968
      %v1970 = vcombine.low %v1006, %v1009
      %v1971 = vcombine.low %v1012, %v1015
      %v1973 = vunpack.c.l.s4 1983009808
      %v1974 = vunpack.c.0.s8 %v1973
      %v1975 = vlaneseq
      %v1976 = vshrl.u32 %v1975, 7
      %v1977 = vsub.s32 %v1974, %v1976
      %v1978 = vrot.slane %v1970, %v1977
      %v1980 = vunpack.c.l.s4 1983009808
      %v1981 = vunpack.c.0.s8 %v1980
      %v1982 = vlaneseq
      %v1983 = vshrl.u32 %v1982, 7
      %v1984 = vsub.s32 %v1981, %v1983
      %v1985 = vrot.slane %v1971, %v1984
      %v1986 = vcombine.low %v1978, %v1985
      %v1987 = vcombine.low %v1018, %v1021
      %v1989 = vunpack.c.l.s4 1983009808
      %v1990 = vunpack.c.0.s8 %v1989
      %v1991 = vlaneseq
      %v1992 = vshrl.u32 %v1991, 7
      %v1993 = vsub.s32 %v1990, %v1992
      %v1994 = vrot.slane %v1987, %v1993
      %1995 = vrot.lane.b32.xlu0 %v1595, 3
      %v1996 = vpop.permute.xlu0 %1995
      %1997 = vrot.lane.b32.xlu0 %v1612, 3
      %v1998 = vpop.permute.xlu0 %1997
      %1999 = vrot.lane.b32.xlu0 %v1629, 3
      %v2000 = vpop.permute.xlu0 %1999
      %2001 = vrot.lane.b32.xlu0 %v1646, 3
      %v2002 = vpop.permute.xlu0 %2001
      %2003 = vrot.lane.b32.xlu0 %v1663, 3
      %v2004 = vpop.permute.xlu0 %2003
      %2005 = vrot.lane.b32.xlu0 %v1680, 3
      %v2006 = vpop.permute.xlu0 %2005
      %2007 = vrot.lane.b32.xlu0 %v1697, 3
      %v2008 = vpop.permute.xlu0 %2007
      %2009 = vrot.lane.b32.xlu0 %v1714, 3
      %v2010 = vpop.permute.xlu0 %2009
      %2011 = vrot.lane.b32.xlu0 %v1731, 3
      %v2012 = vpop.permute.xlu0 %2011
      %2013 = vrot.lane.b32.xlu0 %v1748, 3
      %v2014 = vpop.permute.xlu0 %2013
      %2015 = vrot.lane.b32.xlu0 %v1765, 3
      %v2016 = vpop.permute.xlu0 %2015
      %2017 = vrot.lane.b32.xlu0 %v1782, 3
      %v2018 = vpop.permute.xlu0 %2017
      %2019 = vrot.lane.b32.xlu0 %v1799, 3
      %v2020 = vpop.permute.xlu0 %2019
      %2021 = vrot.lane.b32.xlu0 %v1816, 3
      %v2022 = vpop.permute.xlu0 %2021
      %2023 = vrot.lane.b32.xlu0 %v1833, 3
      %v2024 = vpop.permute.xlu0 %2023
      %2025 = vrot.lane.b32.xlu0 %v1850, 3
      %v2026 = vpop.permute.xlu0 %2025
      %2027 = vrot.lane.b32.xlu0 %v1867, 3
      %v2028 = vpop.permute.xlu0 %2027
      %2029 = vrot.lane.b32.xlu0 %v1884, 3
      %v2030 = vpop.permute.xlu0 %2029
      %2031 = vrot.lane.b32.xlu0 %v1901, 3
      %v2032 = vpop.permute.xlu0 %2031
      %2033 = vrot.lane.b32.xlu0 %v1918, 3
      %v2034 = vpop.permute.xlu0 %2033
      %2035 = vrot.lane.b32.xlu0 %v1935, 3
      %v2036 = vpop.permute.xlu0 %2035
      %2037 = vrot.lane.b32.xlu0 %v1952, 3
      %v2038 = vpop.permute.xlu0 %2037
      %2039 = vrot.lane.b32.xlu0 %v1969, 3
      %v2040 = vpop.permute.xlu0 %2039
      %2041 = vrot.lane.b32.xlu0 %v1986, 3
      %v2042 = vpop.permute.xlu0 %2041
      %2043 = vrot.lane.b32.xlu0 %v1994, 3
      %v2044 = vpop.permute.xlu0 %2043
      %v2070 = vcombine.low %v246, %v245
      %v2071 = vcombine.low %v247, %v255
      %v2073 = vunpack.c.l.s4 1983009808
      %v2074 = vunpack.c.0.s8 %v2073
      %v2075 = vlaneseq
      %v2076 = vshrl.u32 %v2075, 7
      %v2077 = vsub.s32 %v2074, %v2076
      %v2078 = vrot.slane %v2070, %v2077
      %v2080 = vunpack.c.l.s4 1983009808
      %v2081 = vunpack.c.0.s8 %v2080
      %v2082 = vlaneseq
      %v2083 = vshrl.u32 %v2082, 7
      %v2084 = vsub.s32 %v2081, %v2083
      %v2085 = vrot.slane %v2071, %v2084
      %v2086 = vcombine.low %v2078, %v2085
      %v2087 = vcombine.low %v263, %v262
      %v2088 = vcombine.low %v693, %v279
      %v2090 = vunpack.c.l.s4 1983009808
      %v2091 = vunpack.c.0.s8 %v2090
      %v2092 = vlaneseq
      %v2093 = vshrl.u32 %v2092, 7
      %v2094 = vsub.s32 %v2091, %v2093
      %v2095 = vrot.slane %v2087, %v2094
      %v2097 = vunpack.c.l.s4 1983009808
      %v2098 = vunpack.c.0.s8 %v2097
      %v2099 = vlaneseq
      %v2100 = vshrl.u32 %v2099, 7
      %v2101 = vsub.s32 %v2098, %v2100
      %v2102 = vrot.slane %v2088, %v2101
      %v2103 = vcombine.low %v2095, %v2102
      %v2104 = vcombine.low %v278, %v280
      %v2105 = vcombine.low %v288, %v296
      %v2107 = vunpack.c.l.s4 1983009808
      %v2108 = vunpack.c.0.s8 %v2107
      %v2109 = vlaneseq
      %v2110 = vshrl.u32 %v2109, 7
      %v2111 = vsub.s32 %v2108, %v2110
      %v2112 = vrot.slane %v2104, %v2111
      %v2114 = vunpack.c.l.s4 1983009808
      %v2115 = vunpack.c.0.s8 %v2114
      %v2116 = vlaneseq
      %v2117 = vshrl.u32 %v2116, 7
      %v2118 = vsub.s32 %v2115, %v2117
      %v2119 = vrot.slane %v2105, %v2118
      %v2120 = vcombine.low %v2112, %v2119
      %v2121 = vcombine.low %v295, %v694
      %v2122 = vcombine.low %v312, %v311
      %v2124 = vunpack.c.l.s4 1983009808
      %v2125 = vunpack.c.0.s8 %v2124
      %v2126 = vlaneseq
      %v2127 = vshrl.u32 %v2126, 7
      %v2128 = vsub.s32 %v2125, %v2127
      %v2129 = vrot.slane %v2121, %v2128
      %v2131 = vunpack.c.l.s4 1983009808
      %v2132 = vunpack.c.0.s8 %v2131
      %v2133 = vlaneseq
      %v2134 = vshrl.u32 %v2133, 7
      %v2135 = vsub.s32 %v2132, %v2134
      %v2136 = vrot.slane %v2122, %v2135
      %v2137 = vcombine.low %v2129, %v2136
      %v2138 = vcombine.low %v313, %v321
      %v2139 = vcombine.low %v329, %v328
      %v2141 = vunpack.c.l.s4 1983009808
      %v2142 = vunpack.c.0.s8 %v2141
      %v2143 = vlaneseq
      %v2144 = vshrl.u32 %v2143, 7
      %v2145 = vsub.s32 %v2142, %v2144
      %v2146 = vrot.slane %v2138, %v2145
      %v2148 = vunpack.c.l.s4 1983009808
      %v2149 = vunpack.c.0.s8 %v2148
      %v2150 = vlaneseq
      %v2151 = vshrl.u32 %v2150, 7
      %v2152 = vsub.s32 %v2149, %v2151
      %v2153 = vrot.slane %v2139, %v2152
      %v2154 = vcombine.low %v2146, %v2153
      %v2155 = vcombine.low %v695, %v345
      %v2156 = vcombine.low %v344, %v346
      %v2158 = vunpack.c.l.s4 1983009808
      %v2159 = vunpack.c.0.s8 %v2158
      %v2160 = vlaneseq
      %v2161 = vshrl.u32 %v2160, 7
      %v2162 = vsub.s32 %v2159, %v2161
      %v2163 = vrot.slane %v2155, %v2162
      %v2165 = vunpack.c.l.s4 1983009808
      %v2166 = vunpack.c.0.s8 %v2165
      %v2167 = vlaneseq
      %v2168 = vshrl.u32 %v2167, 7
      %v2169 = vsub.s32 %v2166, %v2168
      %v2170 = vrot.slane %v2156, %v2169
      %v2171 = vcombine.low %v2163, %v2170
      %v2172 = vcombine.low %v354, %v362
      %v2173 = vcombine.low %v361, %v696
      %v2175 = vunpack.c.l.s4 1983009808
      %v2176 = vunpack.c.0.s8 %v2175
      %v2177 = vlaneseq
      %v2178 = vshrl.u32 %v2177, 7
      %v2179 = vsub.s32 %v2176, %v2178
      %v2180 = vrot.slane %v2172, %v2179
      %v2182 = vunpack.c.l.s4 1983009808
      %v2183 = vunpack.c.0.s8 %v2182
      %v2184 = vlaneseq
      %v2185 = vshrl.u32 %v2184, 7
      %v2186 = vsub.s32 %v2183, %v2185
      %v2187 = vrot.slane %v2173, %v2186
      %v2188 = vcombine.low %v2180, %v2187
      %v2189 = vcombine.low %v378, %v377
      %v2190 = vcombine.low %v379, %v387
      %v2192 = vunpack.c.l.s4 1983009808
      %v2193 = vunpack.c.0.s8 %v2192
      %v2194 = vlaneseq
      %v2195 = vshrl.u32 %v2194, 7
      %v2196 = vsub.s32 %v2193, %v2195
      %v2197 = vrot.slane %v2189, %v2196
      %v2199 = vunpack.c.l.s4 1983009808
      %v2200 = vunpack.c.0.s8 %v2199
      %v2201 = vlaneseq
      %v2202 = vshrl.u32 %v2201, 7
      %v2203 = vsub.s32 %v2200, %v2202
      %v2204 = vrot.slane %v2190, %v2203
      %v2205 = vcombine.low %v2197, %v2204
      %v2206 = vcombine.low %v395, %v394
      %v2207 = vcombine.low %v697, %v411
      %v2209 = vunpack.c.l.s4 1983009808
      %v2210 = vunpack.c.0.s8 %v2209
      %v2211 = vlaneseq
      %v2212 = vshrl.u32 %v2211, 7
      %v2213 = vsub.s32 %v2210, %v2212
      %v2214 = vrot.slane %v2206, %v2213
      %v2216 = vunpack.c.l.s4 1983009808
      %v2217 = vunpack.c.0.s8 %v2216
      %v2218 = vlaneseq
      %v2219 = vshrl.u32 %v2218, 7
      %v2220 = vsub.s32 %v2217, %v2219
      %v2221 = vrot.slane %v2207, %v2220
      %v2222 = vcombine.low %v2214, %v2221
      %v2223 = vcombine.low %v410, %v412
      %v2224 = vcombine.low %v420, %v428
      %v2226 = vunpack.c.l.s4 1983009808
      %v2227 = vunpack.c.0.s8 %v2226
      %v2228 = vlaneseq
      %v2229 = vshrl.u32 %v2228, 7
      %v2230 = vsub.s32 %v2227, %v2229
      %v2231 = vrot.slane %v2223, %v2230
      %v2233 = vunpack.c.l.s4 1983009808
      %v2234 = vunpack.c.0.s8 %v2233
      %v2235 = vlaneseq
      %v2236 = vshrl.u32 %v2235, 7
      %v2237 = vsub.s32 %v2234, %v2236
      %v2238 = vrot.slane %v2224, %v2237
      %v2239 = vcombine.low %v2231, %v2238
      %v2240 = vcombine.low %v427, %v698
      %v2241 = vcombine.low %v444, %v443
      %v2243 = vunpack.c.l.s4 1983009808
      %v2244 = vunpack.c.0.s8 %v2243
      %v2245 = vlaneseq
      %v2246 = vshrl.u32 %v2245, 7
      %v2247 = vsub.s32 %v2244, %v2246
      %v2248 = vrot.slane %v2240, %v2247
      %v2250 = vunpack.c.l.s4 1983009808
      %v2251 = vunpack.c.0.s8 %v2250
      %v2252 = vlaneseq
      %v2253 = vshrl.u32 %v2252, 7
      %v2254 = vsub.s32 %v2251, %v2253
      %v2255 = vrot.slane %v2241, %v2254
      %v2256 = vcombine.low %v2248, %v2255
      %v2257 = vcombine.low %v445, %v453
      %v2258 = vcombine.low %v461, %v460
      %v2260 = vunpack.c.l.s4 1983009808
      %v2261 = vunpack.c.0.s8 %v2260
      %v2262 = vlaneseq
      %v2263 = vshrl.u32 %v2262, 7
      %v2264 = vsub.s32 %v2261, %v2263
      %v2265 = vrot.slane %v2257, %v2264
      %v2267 = vunpack.c.l.s4 1983009808
      %v2268 = vunpack.c.0.s8 %v2267
      %v2269 = vlaneseq
      %v2270 = vshrl.u32 %v2269, 7
      %v2271 = vsub.s32 %v2268, %v2270
      %v2272 = vrot.slane %v2258, %v2271
      %v2273 = vcombine.low %v2265, %v2272
      %v2274 = vcombine.low %v699, %v477
      %v2275 = vcombine.low %v476, %v478
      %v2277 = vunpack.c.l.s4 1983009808
      %v2278 = vunpack.c.0.s8 %v2277
      %v2279 = vlaneseq
      %v2280 = vshrl.u32 %v2279, 7
      %v2281 = vsub.s32 %v2278, %v2280
      %v2282 = vrot.slane %v2274, %v2281
      %v2284 = vunpack.c.l.s4 1983009808
      %v2285 = vunpack.c.0.s8 %v2284
      %v2286 = vlaneseq
      %v2287 = vshrl.u32 %v2286, 7
      %v2288 = vsub.s32 %v2285, %v2287
      %v2289 = vrot.slane %v2275, %v2288
      %v2290 = vcombine.low %v2282, %v2289
      %v2291 = vcombine.low %v486, %v494
      %v2292 = vcombine.low %v493, %v700
      %v2294 = vunpack.c.l.s4 1983009808
      %v2295 = vunpack.c.0.s8 %v2294
      %v2296 = vlaneseq
      %v2297 = vshrl.u32 %v2296, 7
      %v2298 = vsub.s32 %v2295, %v2297
      %v2299 = vrot.slane %v2291, %v2298
      %v2301 = vunpack.c.l.s4 1983009808
      %v2302 = vunpack.c.0.s8 %v2301
      %v2303 = vlaneseq
      %v2304 = vshrl.u32 %v2303, 7
      %v2305 = vsub.s32 %v2302, %v2304
      %v2306 = vrot.slane %v2292, %v2305
      %v2307 = vcombine.low %v2299, %v2306
      %v2308 = vcombine.low %v510, %v509
      %v2309 = vcombine.low %v511, %v519
      %v2311 = vunpack.c.l.s4 1983009808
      %v2312 = vunpack.c.0.s8 %v2311
      %v2313 = vlaneseq
      %v2314 = vshrl.u32 %v2313, 7
      %v2315 = vsub.s32 %v2312, %v2314
      %v2316 = vrot.slane %v2308, %v2315
      %v2318 = vunpack.c.l.s4 1983009808
      %v2319 = vunpack.c.0.s8 %v2318
      %v2320 = vlaneseq
      %v2321 = vshrl.u32 %v2320, 7
      %v2322 = vsub.s32 %v2319, %v2321
      %v2323 = vrot.slane %v2309, %v2322
      %v2324 = vcombine.low %v2316, %v2323
      %v2325 = vcombine.low %v527, %v526
      %v2326 = vcombine.low %v701, %v543
      %v2328 = vunpack.c.l.s4 1983009808
      %v2329 = vunpack.c.0.s8 %v2328
      %v2330 = vlaneseq
      %v2331 = vshrl.u32 %v2330, 7
      %v2332 = vsub.s32 %v2329, %v2331
      %v2333 = vrot.slane %v2325, %v2332
      %v2335 = vunpack.c.l.s4 1983009808
      %v2336 = vunpack.c.0.s8 %v2335
      %v2337 = vlaneseq
      %v2338 = vshrl.u32 %v2337, 7
      %v2339 = vsub.s32 %v2336, %v2338
      %v2340 = vrot.slane %v2326, %v2339
      %v2341 = vcombine.low %v2333, %v2340
      %v2342 = vcombine.low %v542, %v544
      %v2343 = vcombine.low %v552, %v560
      %v2345 = vunpack.c.l.s4 1983009808
      %v2346 = vunpack.c.0.s8 %v2345
      %v2347 = vlaneseq
      %v2348 = vshrl.u32 %v2347, 7
      %v2349 = vsub.s32 %v2346, %v2348
      %v2350 = vrot.slane %v2342, %v2349
      %v2352 = vunpack.c.l.s4 1983009808
      %v2353 = vunpack.c.0.s8 %v2352
      %v2354 = vlaneseq
      %v2355 = vshrl.u32 %v2354, 7
      %v2356 = vsub.s32 %v2353, %v2355
      %v2357 = vrot.slane %v2343, %v2356
      %v2358 = vcombine.low %v2350, %v2357
      %v2359 = vcombine.low %v559, %v702
      %v2360 = vcombine.low %v576, %v575
      %v2362 = vunpack.c.l.s4 1983009808
      %v2363 = vunpack.c.0.s8 %v2362
      %v2364 = vlaneseq
      %v2365 = vshrl.u32 %v2364, 7
      %v2366 = vsub.s32 %v2363, %v2365
      %v2367 = vrot.slane %v2359, %v2366
      %v2369 = vunpack.c.l.s4 1983009808
      %v2370 = vunpack.c.0.s8 %v2369
      %v2371 = vlaneseq
      %v2372 = vshrl.u32 %v2371, 7
      %v2373 = vsub.s32 %v2370, %v2372
      %v2374 = vrot.slane %v2360, %v2373
      %v2375 = vcombine.low %v2367, %v2374
      %v2376 = vcombine.low %v577, %v585
      %v2377 = vcombine.low %v593, %v592
      %v2379 = vunpack.c.l.s4 1983009808
      %v2380 = vunpack.c.0.s8 %v2379
      %v2381 = vlaneseq
      %v2382 = vshrl.u32 %v2381, 7
      %v2383 = vsub.s32 %v2380, %v2382
      %v2384 = vrot.slane %v2376, %v2383
      %v2386 = vunpack.c.l.s4 1983009808
      %v2387 = vunpack.c.0.s8 %v2386
      %v2388 = vlaneseq
      %v2389 = vshrl.u32 %v2388, 7
      %v2390 = vsub.s32 %v2387, %v2389
      %v2391 = vrot.slane %v2377, %v2390
      %v2392 = vcombine.low %v2384, %v2391
      %v2393 = vcombine.low %v703, %v609
      %v2394 = vcombine.low %v608, %v610
      %v2396 = vunpack.c.l.s4 1983009808
      %v2397 = vunpack.c.0.s8 %v2396
      %v2398 = vlaneseq
      %v2399 = vshrl.u32 %v2398, 7
      %v2400 = vsub.s32 %v2397, %v2399
      %v2401 = vrot.slane %v2393, %v2400
      %v2403 = vunpack.c.l.s4 1983009808
      %v2404 = vunpack.c.0.s8 %v2403
      %v2405 = vlaneseq
      %v2406 = vshrl.u32 %v2405, 7
      %v2407 = vsub.s32 %v2404, %v2406
      %v2408 = vrot.slane %v2394, %v2407
      %v2409 = vcombine.low %v2401, %v2408
      %v2410 = vcombine.low %v618, %v626
      %v2411 = vcombine.low %v625, %v704
      %v2413 = vunpack.c.l.s4 1983009808
      %v2414 = vunpack.c.0.s8 %v2413
      %v2415 = vlaneseq
      %v2416 = vshrl.u32 %v2415, 7
      %v2417 = vsub.s32 %v2414, %v2416
      %v2418 = vrot.slane %v2410, %v2417
      %v2420 = vunpack.c.l.s4 1983009808
      %v2421 = vunpack.c.0.s8 %v2420
      %v2422 = vlaneseq
      %v2423 = vshrl.u32 %v2422, 7
      %v2424 = vsub.s32 %v2421, %v2423
      %v2425 = vrot.slane %v2411, %v2424
      %v2426 = vcombine.low %v2418, %v2425
      %v2427 = vcombine.low %v642, %v641
      %v2428 = vcombine.low %v643, %v651
      %v2430 = vunpack.c.l.s4 1983009808
      %v2431 = vunpack.c.0.s8 %v2430
      %v2432 = vlaneseq
      %v2433 = vshrl.u32 %v2432, 7
      %v2434 = vsub.s32 %v2431, %v2433
      %v2435 = vrot.slane %v2427, %v2434
      %v2437 = vunpack.c.l.s4 1983009808
      %v2438 = vunpack.c.0.s8 %v2437
      %v2439 = vlaneseq
      %v2440 = vshrl.u32 %v2439, 7
      %v2441 = vsub.s32 %v2438, %v2440
      %v2442 = vrot.slane %v2428, %v2441
      %v2443 = vcombine.low %v2435, %v2442
      %v2444 = vcombine.low %v659, %v658
      %v2445 = vcombine.low %v705, %v675
      %v2447 = vunpack.c.l.s4 1983009808
      %v2448 = vunpack.c.0.s8 %v2447
      %v2449 = vlaneseq
      %v2450 = vshrl.u32 %v2449, 7
      %v2451 = vsub.s32 %v2448, %v2450
      %v2452 = vrot.slane %v2444, %v2451
      %v2454 = vunpack.c.l.s4 1983009808
      %v2455 = vunpack.c.0.s8 %v2454
      %v2456 = vlaneseq
      %v2457 = vshrl.u32 %v2456, 7
      %v2458 = vsub.s32 %v2455, %v2457
      %v2459 = vrot.slane %v2445, %v2458
      %v2460 = vcombine.low %v2452, %v2459
      %v2461 = vcombine.low %v674, %v676
      %v2462 = vcombine.low %v684, %v692
      %v2464 = vunpack.c.l.s4 1983009808
      %v2465 = vunpack.c.0.s8 %v2464
      %v2466 = vlaneseq
      %v2467 = vshrl.u32 %v2466, 7
      %v2468 = vsub.s32 %v2465, %v2467
      %v2469 = vrot.slane %v2461, %v2468
      %v2471 = vunpack.c.l.s4 1983009808
      %v2472 = vunpack.c.0.s8 %v2471
      %v2473 = vlaneseq
      %v2474 = vshrl.u32 %v2473, 7
      %v2475 = vsub.s32 %v2472, %v2474
      %v2476 = vrot.slane %v2462, %v2475
      %v2477 = vcombine.low %v2469, %v2476
      %v2478 = vcombine.low %v691, %v706
      %v2480 = vunpack.c.l.s4 1983009808
      %v2481 = vunpack.c.0.s8 %v2480
      %v2482 = vlaneseq
      %v2483 = vshrl.u32 %v2482, 7
      %v2484 = vsub.s32 %v2481, %v2483
      %v2485 = vrot.slane %v2478, %v2484
      %2486 = vrot.lane.b32.xlu0 %v2086, 6
      %v2487 = vpop.permute.xlu0 %2486
      %2488 = vrot.lane.b32.xlu0 %v2103, 6
      %v2489 = vpop.permute.xlu0 %2488
      %2490 = vrot.lane.b32.xlu0 %v2120, 6
      %v2491 = vpop.permute.xlu0 %2490
      %2492 = vrot.lane.b32.xlu0 %v2137, 6
      %v2493 = vpop.permute.xlu0 %2492
      %2494 = vrot.lane.b32.xlu0 %v2154, 6
      %v2495 = vpop.permute.xlu0 %2494
      %2496 = vrot.lane.b32.xlu0 %v2171, 6
      %v2497 = vpop.permute.xlu0 %2496
      %2498 = vrot.lane.b32.xlu0 %v2188, 6
      %v2499 = vpop.permute.xlu0 %2498
      %2500 = vrot.lane.b32.xlu0 %v2205, 6
      %v2501 = vpop.permute.xlu0 %2500
      %2502 = vrot.lane.b32.xlu0 %v2222, 6
      %v2503 = vpop.permute.xlu0 %2502
      %2504 = vrot.lane.b32.xlu0 %v2239, 6
      %v2505 = vpop.permute.xlu0 %2504
      %2506 = vrot.lane.b32.xlu0 %v2256, 6
      %v2507 = vpop.permute.xlu0 %2506
      %2508 = vrot.lane.b32.xlu0 %v2273, 6
      %v2509 = vpop.permute.xlu0 %2508
      %2510 = vrot.lane.b32.xlu0 %v2290, 6
      %v2511 = vpop.permute.xlu0 %2510
      %2512 = vrot.lane.b32.xlu0 %v2307, 6
      %v2513 = vpop.permute.xlu0 %2512
      %2514 = vrot.lane.b32.xlu0 %v2324, 6
      %v2515 = vpop.permute.xlu0 %2514
      %2516 = vrot.lane.b32.xlu0 %v2341, 6
      %v2517 = vpop.permute.xlu0 %2516
      %2518 = vrot.lane.b32.xlu0 %v2358, 6
      %v2519 = vpop.permute.xlu0 %2518
      %2520 = vrot.lane.b32.xlu0 %v2375, 6
      %v2521 = vpop.permute.xlu0 %2520
      %2522 = vrot.lane.b32.xlu0 %v2392, 6
      %v2523 = vpop.permute.xlu0 %2522
      %2524 = vrot.lane.b32.xlu0 %v2409, 6
      %v2525 = vpop.permute.xlu0 %2524
      %2526 = vrot.lane.b32.xlu0 %v2426, 6
      %v2527 = vpop.permute.xlu0 %2526
      %2528 = vrot.lane.b32.xlu0 %v2443, 6
      %v2529 = vpop.permute.xlu0 %2528
      %2530 = vrot.lane.b32.xlu0 %v2460, 6
      %v2531 = vpop.permute.xlu0 %2530
      %2532 = vrot.lane.b32.xlu0 %v2477, 6
      %v2533 = vpop.permute.xlu0 %2532
      %2534 = vrot.lane.b32.xlu0 %v2485, 6
      %v2535 = vpop.permute.xlu0 %2534
      %v2561 = vcombine.low %v271, %v279
      %v2563 = vunpack.c.l.s4 1983009808
      %v2564 = vunpack.c.0.s8 %v2563
      %v2565 = vlaneseq
      %v2566 = vshrl.u32 %v2565, 7
      %v2567 = vsub.s32 %v2564, %v2566
      %v2568 = vrot.slane %v2561, %v2567
      %v2569 = vcombine.low %v2568, %v2112
      %v2570 = vcombine.low %v295, %v304
      %v2572 = vunpack.c.l.s4 1983009808
      %v2573 = vunpack.c.0.s8 %v2572
      %v2574 = vlaneseq
      %v2575 = vshrl.u32 %v2574, 7
      %v2576 = vsub.s32 %v2573, %v2575
      %v2577 = vrot.slane %v2570, %v2576
      %v2578 = vcombine.low %v2119, %v2577
      %v2579 = vcombine.low %v2136, %v2146
      %v2580 = vcombine.low %v337, %v345
      %v2582 = vunpack.c.l.s4 1983009808
      %v2583 = vunpack.c.0.s8 %v2582
      %v2584 = vlaneseq
      %v2585 = vshrl.u32 %v2584, 7
      %v2586 = vsub.s32 %v2583, %v2585
      %v2587 = vrot.slane %v2580, %v2586
      %v2588 = vcombine.low %v2153, %v2587
      %v2589 = vcombine.low %v2170, %v2180
      %v2590 = vcombine.low %v361, %v370
      %v2592 = vunpack.c.l.s4 1983009808
      %v2593 = vunpack.c.0.s8 %v2592
      %v2594 = vlaneseq
      %v2595 = vshrl.u32 %v2594, 7
      %v2596 = vsub.s32 %v2593, %v2595
      %v2597 = vrot.slane %v2590, %v2596
      %v2598 = vcombine.low %v2597, %v2197
      %v2599 = vcombine.low %v2204, %v2214
      %v2600 = vcombine.low %v403, %v411
      %v2602 = vunpack.c.l.s4 1983009808
      %v2603 = vunpack.c.0.s8 %v2602
      %v2604 = vlaneseq
      %v2605 = vshrl.u32 %v2604, 7
      %v2606 = vsub.s32 %v2603, %v2605
      %v2607 = vrot.slane %v2600, %v2606
      %v2608 = vcombine.low %v2607, %v2231
      %v2609 = vcombine.low %v427, %v436
      %v2611 = vunpack.c.l.s4 1983009808
      %v2612 = vunpack.c.0.s8 %v2611
      %v2613 = vlaneseq
      %v2614 = vshrl.u32 %v2613, 7
      %v2615 = vsub.s32 %v2612, %v2614
      %v2616 = vrot.slane %v2609, %v2615
      %v2617 = vcombine.low %v2238, %v2616
      %v2618 = vcombine.low %v2255, %v2265
      %v2619 = vcombine.low %v469, %v477
      %v2621 = vunpack.c.l.s4 1983009808
      %v2622 = vunpack.c.0.s8 %v2621
      %v2623 = vlaneseq
      %v2624 = vshrl.u32 %v2623, 7
      %v2625 = vsub.s32 %v2622, %v2624
      %v2626 = vrot.slane %v2619, %v2625
      %v2627 = vcombine.low %v2272, %v2626
      %v2628 = vcombine.low %v2289, %v2299
      %v2629 = vcombine.low %v493, %v502
      %v2631 = vunpack.c.l.s4 1983009808
      %v2632 = vunpack.c.0.s8 %v2631
      %v2633 = vlaneseq
      %v2634 = vshrl.u32 %v2633, 7
      %v2635 = vsub.s32 %v2632, %v2634
      %v2636 = vrot.slane %v2629, %v2635
      %v2637 = vcombine.low %v2636, %v2316
      %v2638 = vcombine.low %v2323, %v2333
      %v2639 = vcombine.low %v535, %v543
      %v2641 = vunpack.c.l.s4 1983009808
      %v2642 = vunpack.c.0.s8 %v2641
      %v2643 = vlaneseq
      %v2644 = vshrl.u32 %v2643, 7
      %v2645 = vsub.s32 %v2642, %v2644
      %v2646 = vrot.slane %v2639, %v2645
      %v2647 = vcombine.low %v2646, %v2350
      %v2648 = vcombine.low %v559, %v568
      %v2650 = vunpack.c.l.s4 1983009808
      %v2651 = vunpack.c.0.s8 %v2650
      %v2652 = vlaneseq
      %v2653 = vshrl.u32 %v2652, 7
      %v2654 = vsub.s32 %v2651, %v2653
      %v2655 = vrot.slane %v2648, %v2654
      %v2656 = vcombine.low %v2357, %v2655
      %v2657 = vcombine.low %v2374, %v2384
      %v2658 = vcombine.low %v601, %v609
      %v2660 = vunpack.c.l.s4 1983009808
      %v2661 = vunpack.c.0.s8 %v2660
      %v2662 = vlaneseq
      %v2663 = vshrl.u32 %v2662, 7
      %v2664 = vsub.s32 %v2661, %v2663
      %v2665 = vrot.slane %v2658, %v2664
      %v2666 = vcombine.low %v2391, %v2665
      %v2667 = vcombine.low %v2408, %v2418
      %v2668 = vcombine.low %v625, %v634
      %v2670 = vunpack.c.l.s4 1983009808
      %v2671 = vunpack.c.0.s8 %v2670
      %v2672 = vlaneseq
      %v2673 = vshrl.u32 %v2672, 7
      %v2674 = vsub.s32 %v2671, %v2673
      %v2675 = vrot.slane %v2668, %v2674
      %v2676 = vcombine.low %v2675, %v2435
      %v2677 = vcombine.low %v2442, %v2452
      %v2678 = vcombine.low %v667, %v675
      %v2680 = vunpack.c.l.s4 1983009808
      %v2681 = vunpack.c.0.s8 %v2680
      %v2682 = vlaneseq
      %v2683 = vshrl.u32 %v2682, 7
      %v2684 = vsub.s32 %v2681, %v2683
      %v2685 = vrot.slane %v2678, %v2684
      %v2686 = vcombine.low %v2685, %v2469
      %v2687 = vcombine.low %v691, %v1031
      %v2689 = vunpack.c.l.s4 1983009808
      %v2690 = vunpack.c.0.s8 %v2689
      %v2691 = vlaneseq
      %v2692 = vshrl.u32 %v2691, 7
      %v2693 = vsub.s32 %v2690, %v2692
      %v2694 = vrot.slane %v2687, %v2693
      %v2695 = vcombine.low %v2476, %v2694
      %v2696 = vcombine.low %v1039, %v1038
      %v2697 = vcombine.low %v1040, %v1048
      %v2699 = vunpack.c.l.s4 1983009808
      %v2700 = vunpack.c.0.s8 %v2699
      %v2701 = vlaneseq
      %v2702 = vshrl.u32 %v2701, 7
      %v2703 = vsub.s32 %v2700, %v2702
      %v2704 = vrot.slane %v2696, %v2703
      %v2706 = vunpack.c.l.s4 1983009808
      %v2707 = vunpack.c.0.s8 %v2706
      %v2708 = vlaneseq
      %v2709 = vshrl.u32 %v2708, 7
      %v2710 = vsub.s32 %v2707, %v2709
      %v2711 = vrot.slane %v2697, %v2710
      %v2712 = vcombine.low %v2704, %v2711
      %v2713 = vcombine.low %v1056, %v1055
      %v2715 = vunpack.c.l.s4 1983009808
      %v2716 = vunpack.c.0.s8 %v2715
      %v2717 = vlaneseq
      %v2718 = vshrl.u32 %v2717, 7
      %v2719 = vsub.s32 %v2716, %v2718
      %v2720 = vrot.slane %v2713, %v2719
      %2721 = vrot.lane.b32.xlu0 %v2569, 9
      %v2722 = vpop.permute.xlu0 %2721
      %2723 = vrot.lane.b32.xlu0 %v2578, 9
      %v2724 = vpop.permute.xlu0 %2723
      %2725 = vrot.lane.b32.xlu0 %v2579, 9
      %v2726 = vpop.permute.xlu0 %2725
      %2727 = vrot.lane.b32.xlu0 %v2588, 9
      %v2728 = vpop.permute.xlu0 %2727
      %2729 = vrot.lane.b32.xlu0 %v2589, 9
      %v2730 = vpop.permute.xlu0 %2729
      %2731 = vrot.lane.b32.xlu0 %v2598, 9
      %v2732 = vpop.permute.xlu0 %2731
      %2733 = vrot.lane.b32.xlu0 %v2599, 9
      %v2734 = vpop.permute.xlu0 %2733
      %2735 = vrot.lane.b32.xlu0 %v2608, 9
      %v2736 = vpop.permute.xlu0 %2735
      %2737 = vrot.lane.b32.xlu0 %v2617, 9
      %v2738 = vpop.permute.xlu0 %2737
      %2739 = vrot.lane.b32.xlu0 %v2618, 9
      %v2740 = vpop.permute.xlu0 %2739
      %2741 = vrot.lane.b32.xlu0 %v2627, 9
      %v2742 = vpop.permute.xlu0 %2741
      %2743 = vrot.lane.b32.xlu0 %v2628, 9
      %v2744 = vpop.permute.xlu0 %2743
      %2745 = vrot.lane.b32.xlu0 %v2637, 9
      %v2746 = vpop.permute.xlu0 %2745
      %2747 = vrot.lane.b32.xlu0 %v2638, 9
      %v2748 = vpop.permute.xlu0 %2747
      %2749 = vrot.lane.b32.xlu0 %v2647, 9
      %v2750 = vpop.permute.xlu0 %2749
      %2751 = vrot.lane.b32.xlu0 %v2656, 9
      %v2752 = vpop.permute.xlu0 %2751
      %2753 = vrot.lane.b32.xlu0 %v2657, 9
      %v2754 = vpop.permute.xlu0 %2753
      %2755 = vrot.lane.b32.xlu0 %v2666, 9
      %v2756 = vpop.permute.xlu0 %2755
      %2757 = vrot.lane.b32.xlu0 %v2667, 9
      %v2758 = vpop.permute.xlu0 %2757
      %2759 = vrot.lane.b32.xlu0 %v2676, 9
      %v2760 = vpop.permute.xlu0 %2759
      %2761 = vrot.lane.b32.xlu0 %v2677, 9
      %v2762 = vpop.permute.xlu0 %2761
      %2763 = vrot.lane.b32.xlu0 %v2686, 9
      %v2764 = vpop.permute.xlu0 %2763
      %2765 = vrot.lane.b32.xlu0 %v2695, 9
      %v2766 = vpop.permute.xlu0 %2765
      %2767 = vrot.lane.b32.xlu0 %v2712, 9
      %v2768 = vpop.permute.xlu0 %2767
      %2769 = vrot.lane.b32.xlu0 %v2720, 9
      %v2770 = vpop.permute.xlu0 %2769
      %v2796 = vcombine.low %v739, %v742
      %v2797 = vcombine.low %v745, %v748
      %v2799 = vunpack.c.l.s4 1983009808
      %v2800 = vunpack.c.0.s8 %v2799
      %v2801 = vlaneseq
      %v2802 = vshrl.u32 %v2801, 7
      %v2803 = vsub.s32 %v2800, %v2802
      %v2804 = vrot.slane %v2796, %v2803
      %v2806 = vunpack.c.l.s4 1983009808
      %v2807 = vunpack.c.0.s8 %v2806
      %v2808 = vlaneseq
      %v2809 = vshrl.u32 %v2808, 7
      %v2810 = vsub.s32 %v2807, %v2809
      %v2811 = vrot.slane %v2797, %v2810
      %v2812 = vcombine.low %v2804, %v2811
      %v2813 = vcombine.low %v751, %v754
      %v2814 = vcombine.low %v757, %v761
      %v2816 = vunpack.c.l.s4 1983009808
      %v2817 = vunpack.c.0.s8 %v2816
      %v2818 = vlaneseq
      %v2819 = vshrl.u32 %v2818, 7
      %v2820 = vsub.s32 %v2817, %v2819
      %v2821 = vrot.slane %v2813, %v2820
      %v2823 = vunpack.c.l.s4 1983009808
      %v2824 = vunpack.c.0.s8 %v2823
      %v2825 = vlaneseq
      %v2826 = vshrl.u32 %v2825, 7
      %v2827 = vsub.s32 %v2824, %v2826
      %v2828 = vrot.slane %v2814, %v2827
      %v2829 = vcombine.low %v2821, %v2828
      %v2830 = vcombine.low %v764, %v767
      %v2831 = vcombine.low %v770, %v773
      %v2833 = vunpack.c.l.s4 1983009808
      %v2834 = vunpack.c.0.s8 %v2833
      %v2835 = vlaneseq
      %v2836 = vshrl.u32 %v2835, 7
      %v2837 = vsub.s32 %v2834, %v2836
      %v2838 = vrot.slane %v2830, %v2837
      %v2840 = vunpack.c.l.s4 1983009808
      %v2841 = vunpack.c.0.s8 %v2840
      %v2842 = vlaneseq
      %v2843 = vshrl.u32 %v2842, 7
      %v2844 = vsub.s32 %v2841, %v2843
      %v2845 = vrot.slane %v2831, %v2844
      %v2846 = vcombine.low %v2838, %v2845
      %v2847 = vcombine.low %v776, %v779
      %v2848 = vcombine.low %v783, %v786
      %v2850 = vunpack.c.l.s4 1983009808
      %v2851 = vunpack.c.0.s8 %v2850
      %v2852 = vlaneseq
      %v2853 = vshrl.u32 %v2852, 7
      %v2854 = vsub.s32 %v2851, %v2853
      %v2855 = vrot.slane %v2847, %v2854
      %v2857 = vunpack.c.l.s4 1983009808
      %v2858 = vunpack.c.0.s8 %v2857
      %v2859 = vlaneseq
      %v2860 = vshrl.u32 %v2859, 7
      %v2861 = vsub.s32 %v2858, %v2860
      %v2862 = vrot.slane %v2848, %v2861
      %v2863 = vcombine.low %v2855, %v2862
      %v2864 = vcombine.low %v789, %v792
      %v2865 = vcombine.low %v795, %v798
      %v2867 = vunpack.c.l.s4 1983009808
      %v2868 = vunpack.c.0.s8 %v2867
      %v2869 = vlaneseq
      %v2870 = vshrl.u32 %v2869, 7
      %v2871 = vsub.s32 %v2868, %v2870
      %v2872 = vrot.slane %v2864, %v2871
      %v2874 = vunpack.c.l.s4 1983009808
      %v2875 = vunpack.c.0.s8 %v2874
      %v2876 = vlaneseq
      %v2877 = vshrl.u32 %v2876, 7
      %v2878 = vsub.s32 %v2875, %v2877
      %v2879 = vrot.slane %v2865, %v2878
      %v2880 = vcombine.low %v2872, %v2879
      %v2881 = vcombine.low %v801, %v805
      %v2882 = vcombine.low %v808, %v811
      %v2884 = vunpack.c.l.s4 1983009808
      %v2885 = vunpack.c.0.s8 %v2884
      %v2886 = vlaneseq
      %v2887 = vshrl.u32 %v2886, 7
      %v2888 = vsub.s32 %v2885, %v2887
      %v2889 = vrot.slane %v2881, %v2888
      %v2891 = vunpack.c.l.s4 1983009808
      %v2892 = vunpack.c.0.s8 %v2891
      %v2893 = vlaneseq
      %v2894 = vshrl.u32 %v2893, 7
      %v2895 = vsub.s32 %v2892, %v2894
      %v2896 = vrot.slane %v2882, %v2895
      %v2897 = vcombine.low %v2889, %v2896
      %v2898 = vcombine.low %v814, %v817
      %v2899 = vcombine.low %v820, %v823
      %v2901 = vunpack.c.l.s4 1983009808
      %v2902 = vunpack.c.0.s8 %v2901
      %v2903 = vlaneseq
      %v2904 = vshrl.u32 %v2903, 7
      %v2905 = vsub.s32 %v2902, %v2904
      %v2906 = vrot.slane %v2898, %v2905
      %v2908 = vunpack.c.l.s4 1983009808
      %v2909 = vunpack.c.0.s8 %v2908
      %v2910 = vlaneseq
      %v2911 = vshrl.u32 %v2910, 7
      %v2912 = vsub.s32 %v2909, %v2911
      %v2913 = vrot.slane %v2899, %v2912
      %v2914 = vcombine.low %v2906, %v2913
      %v2915 = vcombine.low %v827, %v830
      %v2916 = vcombine.low %v833, %v836
      %v2918 = vunpack.c.l.s4 1983009808
      %v2919 = vunpack.c.0.s8 %v2918
      %v2920 = vlaneseq
      %v2921 = vshrl.u32 %v2920, 7
      %v2922 = vsub.s32 %v2919, %v2921
      %v2923 = vrot.slane %v2915, %v2922
      %v2925 = vunpack.c.l.s4 1983009808
      %v2926 = vunpack.c.0.s8 %v2925
      %v2927 = vlaneseq
      %v2928 = vshrl.u32 %v2927, 7
      %v2929 = vsub.s32 %v2926, %v2928
      %v2930 = vrot.slane %v2916, %v2929
      %v2931 = vcombine.low %v2923, %v2930
      %v2932 = vcombine.low %v839, %v842
      %v2933 = vcombine.low %v845, %v849
      %v2935 = vunpack.c.l.s4 1983009808
      %v2936 = vunpack.c.0.s8 %v2935
      %v2937 = vlaneseq
      %v2938 = vshrl.u32 %v2937, 7
      %v2939 = vsub.s32 %v2936, %v2938
      %v2940 = vrot.slane %v2932, %v2939
      %v2942 = vunpack.c.l.s4 1983009808
      %v2943 = vunpack.c.0.s8 %v2942
      %v2944 = vlaneseq
      %v2945 = vshrl.u32 %v2944, 7
      %v2946 = vsub.s32 %v2943, %v2945
      %v2947 = vrot.slane %v2933, %v2946
      %v2948 = vcombine.low %v2940, %v2947
      %v2949 = vcombine.low %v852, %v855
      %v2950 = vcombine.low %v858, %v861
      %v2952 = vunpack.c.l.s4 1983009808
      %v2953 = vunpack.c.0.s8 %v2952
      %v2954 = vlaneseq
      %v2955 = vshrl.u32 %v2954, 7
      %v2956 = vsub.s32 %v2953, %v2955
      %v2957 = vrot.slane %v2949, %v2956
      %v2959 = vunpack.c.l.s4 1983009808
      %v2960 = vunpack.c.0.s8 %v2959
      %v2961 = vlaneseq
      %v2962 = vshrl.u32 %v2961, 7
      %v2963 = vsub.s32 %v2960, %v2962
      %v2964 = vrot.slane %v2950, %v2963
      %v2965 = vcombine.low %v2957, %v2964
      %v2966 = vcombine.low %v864, %v867
      %v2967 = vcombine.low %v871, %v874
      %v2969 = vunpack.c.l.s4 1983009808
      %v2970 = vunpack.c.0.s8 %v2969
      %v2971 = vlaneseq
      %v2972 = vshrl.u32 %v2971, 7
      %v2973 = vsub.s32 %v2970, %v2972
      %v2974 = vrot.slane %v2966, %v2973
      %v2976 = vunpack.c.l.s4 1983009808
      %v2977 = vunpack.c.0.s8 %v2976
      %v2978 = vlaneseq
      %v2979 = vshrl.u32 %v2978, 7
      %v2980 = vsub.s32 %v2977, %v2979
      %v2981 = vrot.slane %v2967, %v2980
      %v2982 = vcombine.low %v2974, %v2981
      %v2983 = vcombine.low %v877, %v880
      %v2984 = vcombine.low %v883, %v886
      %v2986 = vunpack.c.l.s4 1983009808
      %v2987 = vunpack.c.0.s8 %v2986
      %v2988 = vlaneseq
      %v2989 = vshrl.u32 %v2988, 7
      %v2990 = vsub.s32 %v2987, %v2989
      %v2991 = vrot.slane %v2983, %v2990
      %v2993 = vunpack.c.l.s4 1983009808
      %v2994 = vunpack.c.0.s8 %v2993
      %v2995 = vlaneseq
      %v2996 = vshrl.u32 %v2995, 7
      %v2997 = vsub.s32 %v2994, %v2996
      %v2998 = vrot.slane %v2984, %v2997
      %v2999 = vcombine.low %v2991, %v2998
      %v3000 = vcombine.low %v889, %v893
      %v3001 = vcombine.low %v896, %v899
      %v3003 = vunpack.c.l.s4 1983009808
      %v3004 = vunpack.c.0.s8 %v3003
      %v3005 = vlaneseq
      %v3006 = vshrl.u32 %v3005, 7
      %v3007 = vsub.s32 %v3004, %v3006
      %v3008 = vrot.slane %v3000, %v3007
      %v3010 = vunpack.c.l.s4 1983009808
      %v3011 = vunpack.c.0.s8 %v3010
      %v3012 = vlaneseq
      %v3013 = vshrl.u32 %v3012, 7
      %v3014 = vsub.s32 %v3011, %v3013
      %v3015 = vrot.slane %v3001, %v3014
      %v3016 = vcombine.low %v3008, %v3015
      %v3017 = vcombine.low %v902, %v905
      %v3018 = vcombine.low %v908, %v911
      %v3020 = vunpack.c.l.s4 1983009808
      %v3021 = vunpack.c.0.s8 %v3020
      %v3022 = vlaneseq
      %v3023 = vshrl.u32 %v3022, 7
      %v3024 = vsub.s32 %v3021, %v3023
      %v3025 = vrot.slane %v3017, %v3024
      %v3027 = vunpack.c.l.s4 1983009808
      %v3028 = vunpack.c.0.s8 %v3027
      %v3029 = vlaneseq
      %v3030 = vshrl.u32 %v3029, 7
      %v3031 = vsub.s32 %v3028, %v3030
      %v3032 = vrot.slane %v3018, %v3031
      %v3033 = vcombine.low %v3025, %v3032
      %v3034 = vcombine.low %v915, %v918
      %v3035 = vcombine.low %v921, %v924
      %v3037 = vunpack.c.l.s4 1983009808
      %v3038 = vunpack.c.0.s8 %v3037
      %v3039 = vlaneseq
      %v3040 = vshrl.u32 %v3039, 7
      %v3041 = vsub.s32 %v3038, %v3040
      %v3042 = vrot.slane %v3034, %v3041
      %v3044 = vunpack.c.l.s4 1983009808
      %v3045 = vunpack.c.0.s8 %v3044
      %v3046 = vlaneseq
      %v3047 = vshrl.u32 %v3046, 7
      %v3048 = vsub.s32 %v3045, %v3047
      %v3049 = vrot.slane %v3035, %v3048
      %v3050 = vcombine.low %v3042, %v3049
      %v3051 = vcombine.low %v927, %v930
      %v3052 = vcombine.low %v933, %v937
      %v3054 = vunpack.c.l.s4 1983009808
      %v3055 = vunpack.c.0.s8 %v3054
      %v3056 = vlaneseq
      %v3057 = vshrl.u32 %v3056, 7
      %v3058 = vsub.s32 %v3055, %v3057
      %v3059 = vrot.slane %v3051, %v3058
      %v3061 = vunpack.c.l.s4 1983009808
      %v3062 = vunpack.c.0.s8 %v3061
      %v3063 = vlaneseq
      %v3064 = vshrl.u32 %v3063, 7
      %v3065 = vsub.s32 %v3062, %v3064
      %v3066 = vrot.slane %v3052, %v3065
      %v3067 = vcombine.low %v3059, %v3066
      %v3068 = vcombine.low %v940, %v943
      %v3069 = vcombine.low %v946, %v949
      %v3071 = vunpack.c.l.s4 1983009808
      %v3072 = vunpack.c.0.s8 %v3071
      %v3073 = vlaneseq
      %v3074 = vshrl.u32 %v3073, 7
      %v3075 = vsub.s32 %v3072, %v3074
      %v3076 = vrot.slane %v3068, %v3075
      %v3078 = vunpack.c.l.s4 1983009808
      %v3079 = vunpack.c.0.s8 %v3078
      %v3080 = vlaneseq
      %v3081 = vshrl.u32 %v3080, 7
      %v3082 = vsub.s32 %v3079, %v3081
      %v3083 = vrot.slane %v3069, %v3082
      %v3084 = vcombine.low %v3076, %v3083
      %v3085 = vcombine.low %v952, %v955
      %v3086 = vcombine.low %v959, %v962
      %v3088 = vunpack.c.l.s4 1983009808
      %v3089 = vunpack.c.0.s8 %v3088
      %v3090 = vlaneseq
      %v3091 = vshrl.u32 %v3090, 7
      %v3092 = vsub.s32 %v3089, %v3091
      %v3093 = vrot.slane %v3085, %v3092
      %v3095 = vunpack.c.l.s4 1983009808
      %v3096 = vunpack.c.0.s8 %v3095
      %v3097 = vlaneseq
      %v3098 = vshrl.u32 %v3097, 7
      %v3099 = vsub.s32 %v3096, %v3098
      %v3100 = vrot.slane %v3086, %v3099
      %v3101 = vcombine.low %v3093, %v3100
      %v3102 = vcombine.low %v965, %v968
      %v3103 = vcombine.low %v971, %v974
      %v3105 = vunpack.c.l.s4 1983009808
      %v3106 = vunpack.c.0.s8 %v3105
      %v3107 = vlaneseq
      %v3108 = vshrl.u32 %v3107, 7
      %v3109 = vsub.s32 %v3106, %v3108
      %v3110 = vrot.slane %v3102, %v3109
      %v3112 = vunpack.c.l.s4 1983009808
      %v3113 = vunpack.c.0.s8 %v3112
      %v3114 = vlaneseq
      %v3115 = vshrl.u32 %v3114, 7
      %v3116 = vsub.s32 %v3113, %v3115
      %v3117 = vrot.slane %v3103, %v3116
      %v3118 = vcombine.low %v3110, %v3117
      %v3119 = vcombine.low %v977, %v981
      %v3120 = vcombine.low %v984, %v987
      %v3122 = vunpack.c.l.s4 1983009808
      %v3123 = vunpack.c.0.s8 %v3122
      %v3124 = vlaneseq
      %v3125 = vshrl.u32 %v3124, 7
      %v3126 = vsub.s32 %v3123, %v3125
      %v3127 = vrot.slane %v3119, %v3126
      %v3129 = vunpack.c.l.s4 1983009808
      %v3130 = vunpack.c.0.s8 %v3129
      %v3131 = vlaneseq
      %v3132 = vshrl.u32 %v3131, 7
      %v3133 = vsub.s32 %v3130, %v3132
      %v3134 = vrot.slane %v3120, %v3133
      %v3135 = vcombine.low %v3127, %v3134
      %v3136 = vcombine.low %v990, %v993
      %v3137 = vcombine.low %v996, %v999
      %v3139 = vunpack.c.l.s4 1983009808
      %v3140 = vunpack.c.0.s8 %v3139
      %v3141 = vlaneseq
      %v3142 = vshrl.u32 %v3141, 7
      %v3143 = vsub.s32 %v3140, %v3142
      %v3144 = vrot.slane %v3136, %v3143
      %v3146 = vunpack.c.l.s4 1983009808
      %v3147 = vunpack.c.0.s8 %v3146
      %v3148 = vlaneseq
      %v3149 = vshrl.u32 %v3148, 7
      %v3150 = vsub.s32 %v3147, %v3149
      %v3151 = vrot.slane %v3137, %v3150
      %v3152 = vcombine.low %v3144, %v3151
      %v3153 = vcombine.low %v1003, %v1006
      %v3154 = vcombine.low %v1009, %v1012
      %v3156 = vunpack.c.l.s4 1983009808
      %v3157 = vunpack.c.0.s8 %v3156
      %v3158 = vlaneseq
      %v3159 = vshrl.u32 %v3158, 7
      %v3160 = vsub.s32 %v3157, %v3159
      %v3161 = vrot.slane %v3153, %v3160
      %v3163 = vunpack.c.l.s4 1983009808
      %v3164 = vunpack.c.0.s8 %v3163
      %v3165 = vlaneseq
      %v3166 = vshrl.u32 %v3165, 7
      %v3167 = vsub.s32 %v3164, %v3166
      %v3168 = vrot.slane %v3154, %v3167
      %v3169 = vcombine.low %v3161, %v3168
      %v3170 = vcombine.low %v1015, %v1018
      %v3171 = vcombine.low %v1021, %v1061
      %v3173 = vunpack.c.l.s4 1983009808
      %v3174 = vunpack.c.0.s8 %v3173
      %v3175 = vlaneseq
      %v3176 = vshrl.u32 %v3175, 7
      %v3177 = vsub.s32 %v3174, %v3176
      %v3178 = vrot.slane %v3170, %v3177
      %v3180 = vunpack.c.l.s4 1983009808
      %v3181 = vunpack.c.0.s8 %v3180
      %v3182 = vlaneseq
      %v3183 = vshrl.u32 %v3182, 7
      %v3184 = vsub.s32 %v3181, %v3183
      %v3185 = vrot.slane %v3171, %v3184
      %v3186 = vcombine.low %v3178, %v3185
      %v3187 = vcombine.low %v1064, %v1067
      %v3188 = vcombine.low %v1070, %v1073
      %v3190 = vunpack.c.l.s4 1983009808
      %v3191 = vunpack.c.0.s8 %v3190
      %v3192 = vlaneseq
      %v3193 = vshrl.u32 %v3192, 7
      %v3194 = vsub.s32 %v3191, %v3193
      %v3195 = vrot.slane %v3187, %v3194
      %v3197 = vunpack.c.l.s4 1983009808
      %v3198 = vunpack.c.0.s8 %v3197
      %v3199 = vlaneseq
      %v3200 = vshrl.u32 %v3199, 7
      %v3201 = vsub.s32 %v3198, %v3200
      %v3202 = vrot.slane %v3188, %v3201
      %v3203 = vcombine.low %v3195, %v3202
      %v3204 = vcombine.low %v1076, %v1079
      %v3206 = vunpack.c.l.s4 1983009808
      %v3207 = vunpack.c.0.s8 %v3206
      %v3208 = vlaneseq
      %v3209 = vshrl.u32 %v3208, 7
      %v3210 = vsub.s32 %v3207, %v3209
      %v3211 = vrot.slane %v3204, %v3210
      %3212 = vrot.lane.b32.xlu0 %v2812, 12
      %v3213 = vpop.permute.xlu0 %3212
      %3214 = vrot.lane.b32.xlu0 %v2829, 12
      %v3215 = vpop.permute.xlu0 %3214
      %3216 = vrot.lane.b32.xlu0 %v2846, 12
      %v3217 = vpop.permute.xlu0 %3216
      %3218 = vrot.lane.b32.xlu0 %v2863, 12
      %v3219 = vpop.permute.xlu0 %3218
      %3220 = vrot.lane.b32.xlu0 %v2880, 12
      %v3221 = vpop.permute.xlu0 %3220
      %3222 = vrot.lane.b32.xlu0 %v2897, 12
      %v3223 = vpop.permute.xlu0 %3222
      %3224 = vrot.lane.b32.xlu0 %v2914, 12
      %v3225 = vpop.permute.xlu0 %3224
      %3226 = vrot.lane.b32.xlu0 %v2931, 12
      %v3227 = vpop.permute.xlu0 %3226
      %3228 = vrot.lane.b32.xlu0 %v2948, 12
      %v3229 = vpop.permute.xlu0 %3228
      %3230 = vrot.lane.b32.xlu0 %v2965, 12
      %v3231 = vpop.permute.xlu0 %3230
      %3232 = vrot.lane.b32.xlu0 %v2982, 12
      %v3233 = vpop.permute.xlu0 %3232
      %3234 = vrot.lane.b32.xlu0 %v2999, 12
      %v3235 = vpop.permute.xlu0 %3234
      %3236 = vrot.lane.b32.xlu0 %v3016, 12
      %v3237 = vpop.permute.xlu0 %3236
      %3238 = vrot.lane.b32.xlu0 %v3033, 12
      %v3239 = vpop.permute.xlu0 %3238
      %3240 = vrot.lane.b32.xlu0 %v3050, 12
      %v3241 = vpop.permute.xlu0 %3240
      %3242 = vrot.lane.b32.xlu0 %v3067, 12
      %v3243 = vpop.permute.xlu0 %3242
      %3244 = vrot.lane.b32.xlu0 %v3084, 12
      %v3245 = vpop.permute.xlu0 %3244
      %3246 = vrot.lane.b32.xlu0 %v3101, 12
      %v3247 = vpop.permute.xlu0 %3246
      %3248 = vrot.lane.b32.xlu0 %v3118, 12
      %v3249 = vpop.permute.xlu0 %3248
      %3250 = vrot.lane.b32.xlu0 %v3135, 12
      %v3251 = vpop.permute.xlu0 %3250
      %3252 = vrot.lane.b32.xlu0 %v3152, 12
      %v3253 = vpop.permute.xlu0 %3252
      %3254 = vrot.lane.b32.xlu0 %v3169, 12
      %v3255 = vpop.permute.xlu0 %3254
      %3256 = vrot.lane.b32.xlu0 %v3186, 12
      %v3257 = vpop.permute.xlu0 %3256
      %3258 = vrot.lane.b32.xlu0 %v3203, 12
      %v3259 = vpop.permute.xlu0 %3258
      %3260 = vrot.lane.b32.xlu0 %v3211, 12
      %v3261 = vpop.permute.xlu0 %3260
      %v3287 = vcombine.low %v694, %v312
      %v3289 = vunpack.c.l.s4 1983009808
      %v3290 = vunpack.c.0.s8 %v3289
      %v3291 = vlaneseq
      %v3292 = vshrl.u32 %v3291, 7
      %v3293 = vsub.s32 %v3290, %v3292
      %v3294 = vrot.slane %v3287, %v3293
      %v3295 = vcombine.low %v1197, %v3294
      %v3296 = vcombine.low %v328, %v695
      %v3298 = vunpack.c.l.s4 1983009808
      %v3299 = vunpack.c.0.s8 %v3298
      %v3300 = vlaneseq
      %v3301 = vshrl.u32 %v3300, 7
      %v3302 = vsub.s32 %v3299, %v3301
      %v3303 = vrot.slane %v3296, %v3302
      %v3304 = vcombine.low %v3303, %v1238
      %v3305 = vcombine.low %v696, %v378
      %v3307 = vunpack.c.l.s4 1983009808
      %v3308 = vunpack.c.0.s8 %v3307
      %v3309 = vlaneseq
      %v3310 = vshrl.u32 %v3309, 7
      %v3311 = vsub.s32 %v3308, %v3310
      %v3312 = vrot.slane %v3305, %v3311
      %v3313 = vcombine.low %v3312, %v1272
      %v3314 = vcombine.low %v394, %v697
      %v3316 = vunpack.c.l.s4 1983009808
      %v3317 = vunpack.c.0.s8 %v3316
      %v3318 = vlaneseq
      %v3319 = vshrl.u32 %v3318, 7
      %v3320 = vsub.s32 %v3317, %v3319
      %v3321 = vrot.slane %v3314, %v3320
      %v3322 = vcombine.low %v1282, %v3321
      %v3323 = vcombine.low %v698, %v444
      %v3325 = vunpack.c.l.s4 1983009808
      %v3326 = vunpack.c.0.s8 %v3325
      %v3327 = vlaneseq
      %v3328 = vshrl.u32 %v3327, 7
      %v3329 = vsub.s32 %v3326, %v3328
      %v3330 = vrot.slane %v3323, %v3329
      %v3331 = vcombine.low %v1316, %v3330
      %v3332 = vcombine.low %v460, %v699
      %v3334 = vunpack.c.l.s4 1983009808
      %v3335 = vunpack.c.0.s8 %v3334
      %v3336 = vlaneseq
      %v3337 = vshrl.u32 %v3336, 7
      %v3338 = vsub.s32 %v3335, %v3337
      %v3339 = vrot.slane %v3332, %v3338
      %v3340 = vcombine.low %v3339, %v1357
      %v3341 = vcombine.low %v700, %v510
      %v3343 = vunpack.c.l.s4 1983009808
      %v3344 = vunpack.c.0.s8 %v3343
      %v3345 = vlaneseq
      %v3346 = vshrl.u32 %v3345, 7
      %v3347 = vsub.s32 %v3344, %v3346
      %v3348 = vrot.slane %v3341, %v3347
      %v3349 = vcombine.low %v3348, %v1391
      %v3350 = vcombine.low %v526, %v701
      %v3352 = vunpack.c.l.s4 1983009808
      %v3353 = vunpack.c.0.s8 %v3352
      %v3354 = vlaneseq
      %v3355 = vshrl.u32 %v3354, 7
      %v3356 = vsub.s32 %v3353, %v3355
      %v3357 = vrot.slane %v3350, %v3356
      %v3358 = vcombine.low %v1401, %v3357
      %v3359 = vcombine.low %v702, %v576
      %v3361 = vunpack.c.l.s4 1983009808
      %v3362 = vunpack.c.0.s8 %v3361
      %v3363 = vlaneseq
      %v3364 = vshrl.u32 %v3363, 7
      %v3365 = vsub.s32 %v3362, %v3364
      %v3366 = vrot.slane %v3359, %v3365
      %v3367 = vcombine.low %v1435, %v3366
      %v3368 = vcombine.low %v592, %v703
      %v3370 = vunpack.c.l.s4 1983009808
      %v3371 = vunpack.c.0.s8 %v3370
      %v3372 = vlaneseq
      %v3373 = vshrl.u32 %v3372, 7
      %v3374 = vsub.s32 %v3371, %v3373
      %v3375 = vrot.slane %v3368, %v3374
      %v3376 = vcombine.low %v3375, %v1476
      %v3377 = vcombine.low %v704, %v642
      %v3379 = vunpack.c.l.s4 1983009808
      %v3380 = vunpack.c.0.s8 %v3379
      %v3381 = vlaneseq
      %v3382 = vshrl.u32 %v3381, 7
      %v3383 = vsub.s32 %v3380, %v3382
      %v3384 = vrot.slane %v3377, %v3383
      %v3385 = vcombine.low %v3384, %v1510
      %v3386 = vcombine.low %v658, %v705
      %v3388 = vunpack.c.l.s4 1983009808
      %v3389 = vunpack.c.0.s8 %v3388
      %v3390 = vlaneseq
      %v3391 = vshrl.u32 %v3390, 7
      %v3392 = vsub.s32 %v3389, %v3391
      %v3393 = vrot.slane %v3386, %v3392
      %v3394 = vcombine.low %v1520, %v3393
      %v3395 = vcombine.low %v706, %v1039
      %v3397 = vunpack.c.l.s4 1983009808
      %v3398 = vunpack.c.0.s8 %v3397
      %v3399 = vlaneseq
      %v3400 = vshrl.u32 %v3399, 7
      %v3401 = vsub.s32 %v3398, %v3400
      %v3402 = vrot.slane %v3395, %v3401
      %v3403 = vcombine.low %v1553, %v3402
      %v3404 = vcombine.low %v1038, %v1040
      %v3405 = vcombine.low %v1048, %v1056
      %v3407 = vunpack.c.l.s4 1983009808
      %v3408 = vunpack.c.0.s8 %v3407
      %v3409 = vlaneseq
      %v3410 = vshrl.u32 %v3409, 7
      %v3411 = vsub.s32 %v3408, %v3410
      %v3412 = vrot.slane %v3404, %v3411
      %v3414 = vunpack.c.l.s4 1983009808
      %v3415 = vunpack.c.0.s8 %v3414
      %v3416 = vlaneseq
      %v3417 = vshrl.u32 %v3416, 7
      %v3418 = vsub.s32 %v3415, %v3417
      %v3419 = vrot.slane %v3405, %v3418
      %v3420 = vcombine.low %v3412, %v3419
      %v3421 = vcombine.low %v1055, %v1057
      %v3423 = vunpack.c.l.s4 1983009808
      %v3424 = vunpack.c.0.s8 %v3423
      %v3425 = vlaneseq
      %v3426 = vshrl.u32 %v3425, 7
      %v3427 = vsub.s32 %v3424, %v3426
      %v3428 = vrot.slane %v3421, %v3427
      %3429 = vrot.lane.b32.xlu0 %v1188, 15
      %v3430 = vpop.permute.xlu0 %3429
      %3431 = vrot.lane.b32.xlu0 %v3295, 15
      %v3432 = vpop.permute.xlu0 %3431
      %3433 = vrot.lane.b32.xlu0 %v1222, 15
      %v3434 = vpop.permute.xlu0 %3433
      %3435 = vrot.lane.b32.xlu0 %v3304, 15
      %v3436 = vpop.permute.xlu0 %3435
      %3437 = vrot.lane.b32.xlu0 %v1256, 15
      %v3438 = vpop.permute.xlu0 %3437
      %3439 = vrot.lane.b32.xlu0 %v3313, 15
      %v3440 = vpop.permute.xlu0 %3439
      %3441 = vrot.lane.b32.xlu0 %v3322, 15
      %v3442 = vpop.permute.xlu0 %3441
      %3443 = vrot.lane.b32.xlu0 %v1307, 15
      %v3444 = vpop.permute.xlu0 %3443
      %3445 = vrot.lane.b32.xlu0 %v3331, 15
      %v3446 = vpop.permute.xlu0 %3445
      %3447 = vrot.lane.b32.xlu0 %v1341, 15
      %v3448 = vpop.permute.xlu0 %3447
      %3449 = vrot.lane.b32.xlu0 %v3340, 15
      %v3450 = vpop.permute.xlu0 %3449
      %3451 = vrot.lane.b32.xlu0 %v1375, 15
      %v3452 = vpop.permute.xlu0 %3451
      %3453 = vrot.lane.b32.xlu0 %v3349, 15
      %v3454 = vpop.permute.xlu0 %3453
      %3455 = vrot.lane.b32.xlu0 %v3358, 15
      %v3456 = vpop.permute.xlu0 %3455
      %3457 = vrot.lane.b32.xlu0 %v1426, 15
      %v3458 = vpop.permute.xlu0 %3457
      %3459 = vrot.lane.b32.xlu0 %v3367, 15
      %v3460 = vpop.permute.xlu0 %3459
      %3461 = vrot.lane.b32.xlu0 %v1460, 15
      %v3462 = vpop.permute.xlu0 %3461
      %3463 = vrot.lane.b32.xlu0 %v3376, 15
      %v3464 = vpop.permute.xlu0 %3463
      %3465 = vrot.lane.b32.xlu0 %v1494, 15
      %v3466 = vpop.permute.xlu0 %3465
      %3467 = vrot.lane.b32.xlu0 %v3385, 15
      %v3468 = vpop.permute.xlu0 %3467
      %3469 = vrot.lane.b32.xlu0 %v3394, 15
      %v3470 = vpop.permute.xlu0 %3469
      %3471 = vrot.lane.b32.xlu0 %v1545, 15
      %v3472 = vpop.permute.xlu0 %3471
      %3473 = vrot.lane.b32.xlu0 %v3403, 15
      %v3474 = vpop.permute.xlu0 %3473
      %3475 = vrot.lane.b32.xlu0 %v3420, 15
      %v3476 = vpop.permute.xlu0 %3475
      %3477 = vrot.lane.b32.xlu0 %v3428, 15
      %v3478 = vpop.permute.xlu0 %3477
      %v3504 = vcombine.low %v1204, %v1214
      %v3505 = vcombine.low %v1221, %v1231
      %v3506 = vcombine.low %v1238, %v1248
      %v3507 = vcombine.low %v1255, %v1265
      %v3508 = vcombine.low %v1272, %v1282
      %v3509 = vcombine.low %v1289, %v1299
      %v3510 = vcombine.low %v1306, %v1316
      %v3511 = vcombine.low %v1323, %v1333
      %v3512 = vcombine.low %v1340, %v1350
      %v3513 = vcombine.low %v1357, %v1367
      %v3514 = vcombine.low %v1374, %v1384
      %v3515 = vcombine.low %v1391, %v1401
      %v3516 = vcombine.low %v1408, %v1418
      %v3517 = vcombine.low %v1425, %v1435
      %v3518 = vcombine.low %v1442, %v1452
      %v3519 = vcombine.low %v1459, %v1469
      %v3520 = vcombine.low %v1476, %v1486
      %v3521 = vcombine.low %v1493, %v1503
      %v3522 = vcombine.low %v1510, %v1520
      %v3523 = vcombine.low %v1527, %v1537
      %v3524 = vcombine.low %v1544, %v1553
      %v3525 = vcombine.low %v1031, %v1039
      %v3527 = vunpack.c.l.s4 1983009808
      %v3528 = vunpack.c.0.s8 %v3527
      %v3529 = vlaneseq
      %v3530 = vshrl.u32 %v3529, 7
      %v3531 = vsub.s32 %v3528, %v3530
      %v3532 = vrot.slane %v3525, %v3531
      %v3533 = vcombine.low %v3532, %v3412
      %v3534 = vcombine.low %v1055, %v1089
      %v3536 = vunpack.c.l.s4 1983009808
      %v3537 = vunpack.c.0.s8 %v3536
      %v3538 = vlaneseq
      %v3539 = vshrl.u32 %v3538, 7
      %v3540 = vsub.s32 %v3537, %v3539
      %v3541 = vrot.slane %v3534, %v3540
      %v3542 = vcombine.low %v3419, %v3541
      %v3543 = vcombine.low %v1097, %v1096
      %v3544 = vcombine.low %v1098, %v1106
      %v3546 = vunpack.c.l.s4 1983009808
      %v3547 = vunpack.c.0.s8 %v3546
      %v3548 = vlaneseq
      %v3549 = vshrl.u32 %v3548, 7
      %v3550 = vsub.s32 %v3547, %v3549
      %v3551 = vrot.slane %v3543, %v3550
      %v3553 = vunpack.c.l.s4 1983009808
      %v3554 = vunpack.c.0.s8 %v3553
      %v3555 = vlaneseq
      %v3556 = vshrl.u32 %v3555, 7
      %v3557 = vsub.s32 %v3554, %v3556
      %v3558 = vrot.slane %v3544, %v3557
      %v3559 = vcombine.low %v3551, %v3558
      %v3560 = vcombine.low %v1114, %v1113
      %v3562 = vunpack.c.l.s4 1983009808
      %v3563 = vunpack.c.0.s8 %v3562
      %v3564 = vlaneseq
      %v3565 = vshrl.u32 %v3564, 7
      %v3566 = vsub.s32 %v3563, %v3565
      %v3567 = vrot.slane %v3560, %v3566
      %3568 = vrot.lane.b32.xlu0 %v3504, 18
      %v3569 = vpop.permute.xlu0 %3568
      %3570 = vrot.lane.b32.xlu0 %v3505, 18
      %v3571 = vpop.permute.xlu0 %3570
      %3572 = vrot.lane.b32.xlu0 %v3506, 18
      %v3573 = vpop.permute.xlu0 %3572
      %3574 = vrot.lane.b32.xlu0 %v3507, 18
      %v3575 = vpop.permute.xlu0 %3574
      %3576 = vrot.lane.b32.xlu0 %v3508, 18
      %v3577 = vpop.permute.xlu0 %3576
      %3578 = vrot.lane.b32.xlu0 %v3509, 18
      %v3579 = vpop.permute.xlu0 %3578
      %3580 = vrot.lane.b32.xlu0 %v3510, 18
      %v3581 = vpop.permute.xlu0 %3580
      %3582 = vrot.lane.b32.xlu0 %v3511, 18
      %v3583 = vpop.permute.xlu0 %3582
      %3584 = vrot.lane.b32.xlu0 %v3512, 18
      %v3585 = vpop.permute.xlu0 %3584
      %3586 = vrot.lane.b32.xlu0 %v3513, 18
      %v3587 = vpop.permute.xlu0 %3586
      %3588 = vrot.lane.b32.xlu0 %v3514, 18
      %v3589 = vpop.permute.xlu0 %3588
      %3590 = vrot.lane.b32.xlu0 %v3515, 18
      %v3591 = vpop.permute.xlu0 %3590
      %3592 = vrot.lane.b32.xlu0 %v3516, 18
      %v3593 = vpop.permute.xlu0 %3592
      %3594 = vrot.lane.b32.xlu0 %v3517, 18
      %v3595 = vpop.permute.xlu0 %3594
      %3596 = vrot.lane.b32.xlu0 %v3518, 18
      %v3597 = vpop.permute.xlu0 %3596
      %3598 = vrot.lane.b32.xlu0 %v3519, 18
      %v3599 = vpop.permute.xlu0 %3598
      %3600 = vrot.lane.b32.xlu0 %v3520, 18
      %v3601 = vpop.permute.xlu0 %3600
      %3602 = vrot.lane.b32.xlu0 %v3521, 18
      %v3603 = vpop.permute.xlu0 %3602
      %3604 = vrot.lane.b32.xlu0 %v3522, 18
      %v3605 = vpop.permute.xlu0 %3604
      %3606 = vrot.lane.b32.xlu0 %v3523, 18
      %v3607 = vpop.permute.xlu0 %3606
      %3608 = vrot.lane.b32.xlu0 %v3524, 18
      %v3609 = vpop.permute.xlu0 %3608
      %3610 = vrot.lane.b32.xlu0 %v3533, 18
      %v3611 = vpop.permute.xlu0 %3610
      %3612 = vrot.lane.b32.xlu0 %v3542, 18
      %v3613 = vpop.permute.xlu0 %3612
      %3614 = vrot.lane.b32.xlu0 %v3559, 18
      %v3615 = vpop.permute.xlu0 %3614
      %3616 = vrot.lane.b32.xlu0 %v3567, 18
      %v3617 = vpop.permute.xlu0 %3616
      %v3643 = vcombine.low %v1645, %v1655
      %v3644 = vcombine.low %v1662, %v1672
      %v3645 = vcombine.low %v1679, %v1689
      %v3646 = vcombine.low %v1696, %v1706
      %v3647 = vcombine.low %v1713, %v1723
      %v3648 = vcombine.low %v1730, %v1740
      %v3649 = vcombine.low %v1747, %v1757
      %v3650 = vcombine.low %v1764, %v1774
      %v3651 = vcombine.low %v1781, %v1791
      %v3652 = vcombine.low %v1798, %v1808
      %v3653 = vcombine.low %v1815, %v1825
      %v3654 = vcombine.low %v1832, %v1842
      %v3655 = vcombine.low %v1849, %v1859
      %v3656 = vcombine.low %v1866, %v1876
      %v3657 = vcombine.low %v1883, %v1893
      %v3658 = vcombine.low %v1900, %v1910
      %v3659 = vcombine.low %v1917, %v1927
      %v3660 = vcombine.low %v1934, %v1944
      %v3661 = vcombine.low %v1951, %v1961
      %v3662 = vcombine.low %v1968, %v1978
      %v3663 = vcombine.low %v1985, %v1994
      %v3664 = vcombine.low %v1061, %v1064
      %v3665 = vcombine.low %v1067, %v1070
      %v3667 = vunpack.c.l.s4 1983009808
      %v3668 = vunpack.c.0.s8 %v3667
      %v3669 = vlaneseq
      %v3670 = vshrl.u32 %v3669, 7
      %v3671 = vsub.s32 %v3668, %v3670
      %v3672 = vrot.slane %v3664, %v3671
      %v3674 = vunpack.c.l.s4 1983009808
      %v3675 = vunpack.c.0.s8 %v3674
      %v3676 = vlaneseq
      %v3677 = vshrl.u32 %v3676, 7
      %v3678 = vsub.s32 %v3675, %v3677
      %v3679 = vrot.slane %v3665, %v3678
      %v3680 = vcombine.low %v3672, %v3679
      %v3681 = vcombine.low %v1073, %v1076
      %v3682 = vcombine.low %v1079, %v1119
      %v3684 = vunpack.c.l.s4 1983009808
      %v3685 = vunpack.c.0.s8 %v3684
      %v3686 = vlaneseq
      %v3687 = vshrl.u32 %v3686, 7
      %v3688 = vsub.s32 %v3685, %v3687
      %v3689 = vrot.slane %v3681, %v3688
      %v3691 = vunpack.c.l.s4 1983009808
      %v3692 = vunpack.c.0.s8 %v3691
      %v3693 = vlaneseq
      %v3694 = vshrl.u32 %v3693, 7
      %v3695 = vsub.s32 %v3692, %v3694
      %v3696 = vrot.slane %v3682, %v3695
      %v3697 = vcombine.low %v3689, %v3696
      %v3698 = vcombine.low %v1122, %v1125
      %v3699 = vcombine.low %v1128, %v1131
      %v3701 = vunpack.c.l.s4 1983009808
      %v3702 = vunpack.c.0.s8 %v3701
      %v3703 = vlaneseq
      %v3704 = vshrl.u32 %v3703, 7
      %v3705 = vsub.s32 %v3702, %v3704
      %v3706 = vrot.slane %v3698, %v3705
      %v3708 = vunpack.c.l.s4 1983009808
      %v3709 = vunpack.c.0.s8 %v3708
      %v3710 = vlaneseq
      %v3711 = vshrl.u32 %v3710, 7
      %v3712 = vsub.s32 %v3709, %v3711
      %v3713 = vrot.slane %v3699, %v3712
      %v3714 = vcombine.low %v3706, %v3713
      %v3715 = vcombine.low %v1134, %v1137
      %v3717 = vunpack.c.l.s4 1983009808
      %v3718 = vunpack.c.0.s8 %v3717
      %v3719 = vlaneseq
      %v3720 = vshrl.u32 %v3719, 7
      %v3721 = vsub.s32 %v3718, %v3720
      %v3722 = vrot.slane %v3715, %v3721
      %3723 = vrot.lane.b32.xlu0 %v3643, 21
      %v3724 = vpop.permute.xlu0 %3723
      %3725 = vrot.lane.b32.xlu0 %v3644, 21
      %v3726 = vpop.permute.xlu0 %3725
      %3727 = vrot.lane.b32.xlu0 %v3645, 21
      %v3728 = vpop.permute.xlu0 %3727
      %3729 = vrot.lane.b32.xlu0 %v3646, 21
      %v3730 = vpop.permute.xlu0 %3729
      %3731 = vrot.lane.b32.xlu0 %v3647, 21
      %v3732 = vpop.permute.xlu0 %3731
      %3733 = vrot.lane.b32.xlu0 %v3648, 21
      %v3734 = vpop.permute.xlu0 %3733
      %3735 = vrot.lane.b32.xlu0 %v3649, 21
      %v3736 = vpop.permute.xlu0 %3735
      %3737 = vrot.lane.b32.xlu0 %v3650, 21
      %v3738 = vpop.permute.xlu0 %3737
      %3739 = vrot.lane.b32.xlu0 %v3651, 21
      %v3740 = vpop.permute.xlu0 %3739
      %3741 = vrot.lane.b32.xlu0 %v3652, 21
      %v3742 = vpop.permute.xlu0 %3741
      %3743 = vrot.lane.b32.xlu0 %v3653, 21
      %v3744 = vpop.permute.xlu0 %3743
      %3745 = vrot.lane.b32.xlu0 %v3654, 21
      %v3746 = vpop.permute.xlu0 %3745
      %3747 = vrot.lane.b32.xlu0 %v3655, 21
      %v3748 = vpop.permute.xlu0 %3747
      %3749 = vrot.lane.b32.xlu0 %v3656, 21
      %v3750 = vpop.permute.xlu0 %3749
      %3751 = vrot.lane.b32.xlu0 %v3657, 21
      %v3752 = vpop.permute.xlu0 %3751
      %3753 = vrot.lane.b32.xlu0 %v3658, 21
      %v3754 = vpop.permute.xlu0 %3753
      %3755 = vrot.lane.b32.xlu0 %v3659, 21
      %v3756 = vpop.permute.xlu0 %3755
      %3757 = vrot.lane.b32.xlu0 %v3660, 21
      %v3758 = vpop.permute.xlu0 %3757
      %3759 = vrot.lane.b32.xlu0 %v3661, 21
      %v3760 = vpop.permute.xlu0 %3759
      %3761 = vrot.lane.b32.xlu0 %v3662, 21
      %v3762 = vpop.permute.xlu0 %3761
      %3763 = vrot.lane.b32.xlu0 %v3663, 21
      %v3764 = vpop.permute.xlu0 %3763
      %3765 = vrot.lane.b32.xlu0 %v3680, 21
      %v3766 = vpop.permute.xlu0 %3765
      %3767 = vrot.lane.b32.xlu0 %v3697, 21
      %v3768 = vpop.permute.xlu0 %3767
      %3769 = vrot.lane.b32.xlu0 %v3714, 21
      %v3770 = vpop.permute.xlu0 %3769
      %3771 = vrot.lane.b32.xlu0 %v3722, 21
      %v3772 = vpop.permute.xlu0 %3771
      %v3798 = vcombine.low %v2153, %v2163
      %v3799 = vcombine.low %v2187, %v2197
      %v3800 = vcombine.low %v2221, %v2231
      %v3801 = vcombine.low %v2238, %v2248
      %v3802 = vcombine.low %v2272, %v2282
      %v3803 = vcombine.low %v2306, %v2316
      %v3804 = vcombine.low %v2340, %v2350
      %v3805 = vcombine.low %v2357, %v2367
      %v3806 = vcombine.low %v2391, %v2401
      %v3807 = vcombine.low %v2425, %v2435
      %v3808 = vcombine.low %v2459, %v2469
      %v3809 = vcombine.low %v2476, %v2485
      %v3810 = vcombine.low %v1057, %v1097
      %v3812 = vunpack.c.l.s4 1983009808
      %v3813 = vunpack.c.0.s8 %v3812
      %v3814 = vlaneseq
      %v3815 = vshrl.u32 %v3814, 7
      %v3816 = vsub.s32 %v3813, %v3815
      %v3817 = vrot.slane %v3810, %v3816
      %v3818 = vcombine.low %v2720, %v3817
      %v3819 = vcombine.low %v1096, %v1098
      %v3820 = vcombine.low %v1106, %v1114
      %v3822 = vunpack.c.l.s4 1983009808
      %v3823 = vunpack.c.0.s8 %v3822
      %v3824 = vlaneseq
      %v3825 = vshrl.u32 %v3824, 7
      %v3826 = vsub.s32 %v3823, %v3825
      %v3827 = vrot.slane %v3819, %v3826
      %v3829 = vunpack.c.l.s4 1983009808
      %v3830 = vunpack.c.0.s8 %v3829
      %v3831 = vlaneseq
      %v3832 = vshrl.u32 %v3831, 7
      %v3833 = vsub.s32 %v3830, %v3832
      %v3834 = vrot.slane %v3820, %v3833
      %v3835 = vcombine.low %v3827, %v3834
      %v3836 = vcombine.low %v1113, %v1115
      %v3838 = vunpack.c.l.s4 1983009808
      %v3839 = vunpack.c.0.s8 %v3838
      %v3840 = vlaneseq
      %v3841 = vshrl.u32 %v3840, 7
      %v3842 = vsub.s32 %v3839, %v3841
      %v3843 = vrot.slane %v3836, %v3842
      %3844 = vrot.lane.b32.xlu0 %v2579, 24
      %v3845 = vpop.permute.xlu0 %3844
      %3846 = vrot.lane.b32.xlu0 %v3798, 24
      %v3847 = vpop.permute.xlu0 %3846
      %3848 = vrot.lane.b32.xlu0 %v2589, 24
      %v3849 = vpop.permute.xlu0 %3848
      %3850 = vrot.lane.b32.xlu0 %v3799, 24
      %v3851 = vpop.permute.xlu0 %3850
      %3852 = vrot.lane.b32.xlu0 %v2599, 24
      %v3853 = vpop.permute.xlu0 %3852
      %3854 = vrot.lane.b32.xlu0 %v3800, 24
      %v3855 = vpop.permute.xlu0 %3854
      %3856 = vrot.lane.b32.xlu0 %v3801, 24
      %v3857 = vpop.permute.xlu0 %3856
      %3858 = vrot.lane.b32.xlu0 %v2618, 24
      %v3859 = vpop.permute.xlu0 %3858
      %3860 = vrot.lane.b32.xlu0 %v3802, 24
      %v3861 = vpop.permute.xlu0 %3860
      %3862 = vrot.lane.b32.xlu0 %v2628, 24
      %v3863 = vpop.permute.xlu0 %3862
      %3864 = vrot.lane.b32.xlu0 %v3803, 24
      %v3865 = vpop.permute.xlu0 %3864
      %3866 = vrot.lane.b32.xlu0 %v2638, 24
      %v3867 = vpop.permute.xlu0 %3866
      %3868 = vrot.lane.b32.xlu0 %v3804, 24
      %v3869 = vpop.permute.xlu0 %3868
      %3870 = vrot.lane.b32.xlu0 %v3805, 24
      %v3871 = vpop.permute.xlu0 %3870
      %3872 = vrot.lane.b32.xlu0 %v2657, 24
      %v3873 = vpop.permute.xlu0 %3872
      %3874 = vrot.lane.b32.xlu0 %v3806, 24
      %v3875 = vpop.permute.xlu0 %3874
      %3876 = vrot.lane.b32.xlu0 %v2667, 24
      %v3877 = vpop.permute.xlu0 %3876
      %3878 = vrot.lane.b32.xlu0 %v3807, 24
      %v3879 = vpop.permute.xlu0 %3878
      %3880 = vrot.lane.b32.xlu0 %v2677, 24
      %v3881 = vpop.permute.xlu0 %3880
      %3882 = vrot.lane.b32.xlu0 %v3808, 24
      %v3883 = vpop.permute.xlu0 %3882
      %3884 = vrot.lane.b32.xlu0 %v3809, 24
      %v3885 = vpop.permute.xlu0 %3884
      %3886 = vrot.lane.b32.xlu0 %v2712, 24
      %v3887 = vpop.permute.xlu0 %3886
      %3888 = vrot.lane.b32.xlu0 %v3818, 24
      %v3889 = vpop.permute.xlu0 %3888
      %3890 = vrot.lane.b32.xlu0 %v3835, 24
      %v3891 = vpop.permute.xlu0 %3890
      %3892 = vrot.lane.b32.xlu0 %v3843, 24
      %v3893 = vpop.permute.xlu0 %3892
      %vm3919 = vcmask 23552
      %v3920 = vsel %vm3919, %v1154, %v1996
      %v3921 = vsel %vm3919, %v1171, %v1998
      %v3922 = vsel %vm3919, %v1188, %v2000
      %v3923 = vsel %vm3919, %v1205, %v2002
      %v3924 = vsel %vm3919, %v1222, %v2004
      %v3925 = vsel %vm3919, %v1239, %v2006
      %v3926 = vsel %vm3919, %v1256, %v2008
      %v3927 = vsel %vm3919, %v1273, %v2010
      %v3928 = vsel %vm3919, %v1290, %v2012
      %v3929 = vsel %vm3919, %v1307, %v2014
      %v3930 = vsel %vm3919, %v1324, %v2016
      %v3931 = vsel %vm3919, %v1341, %v2018
      %v3932 = vsel %vm3919, %v1358, %v2020
      %v3933 = vsel %vm3919, %v1375, %v2022
      %v3934 = vsel %vm3919, %v1392, %v2024
      %v3935 = vsel %vm3919, %v1409, %v2026
      %v3936 = vsel %vm3919, %v1426, %v2028
      %v3937 = vsel %vm3919, %v1443, %v2030
      %v3938 = vsel %vm3919, %v1460, %v2032
      %v3939 = vsel %vm3919, %v1477, %v2034
      %v3940 = vsel %vm3919, %v1494, %v2036
      %v3941 = vsel %vm3919, %v1511, %v2038
      %v3942 = vsel %vm3919, %v1528, %v2040
      %v3943 = vsel %vm3919, %v1545, %v2042
      %v3944 = vsel %vm3919, %v1553, %v2044
      %vm3945 = vcmask 48128
      %v3946 = vsel %vm3945, %v3920, %v2487
      %v3947 = vsel %vm3945, %v3921, %v2489
      %v3948 = vsel %vm3945, %v3922, %v2491
      %v3949 = vsel %vm3945, %v3923, %v2493
      %v3950 = vsel %vm3945, %v3924, %v2495
      %v3951 = vsel %vm3945, %v3925, %v2497
      %v3952 = vsel %vm3945, %v3926, %v2499
      %v3953 = vsel %vm3945, %v3927, %v2501
      %v3954 = vsel %vm3945, %v3928, %v2503
      %v3955 = vsel %vm3945, %v3929, %v2505
      %v3956 = vsel %vm3945, %v3930, %v2507
      %v3957 = vsel %vm3945, %v3931, %v2509
      %v3958 = vsel %vm3945, %v3932, %v2511
      %v3959 = vsel %vm3945, %v3933, %v2513
      %v3960 = vsel %vm3945, %v3934, %v2515
      %v3961 = vsel %vm3945, %v3935, %v2517
      %v3962 = vsel %vm3945, %v3936, %v2519
      %v3963 = vsel %vm3945, %v3937, %v2521
      %v3964 = vsel %vm3945, %v3938, %v2523
      %v3965 = vsel %vm3945, %v3939, %v2525
      %v3966 = vsel %vm3945, %v3940, %v2527
      %v3967 = vsel %vm3945, %v3941, %v2529
      %v3968 = vsel %vm3945, %v3942, %v2531
      %v3969 = vsel %vm3945, %v3943, %v2533
      %v3970 = vsel %vm3945, %v3944, %v2535
      %vm3971 = vcmask 72704
      %v3972 = vsel %vm3971, %v3946, %v2722
      %v3973 = vsel %vm3971, %v3947, %v2724
      %v3974 = vsel %vm3971, %v3948, %v2726
      %v3975 = vsel %vm3971, %v3949, %v2728
      %v3976 = vsel %vm3971, %v3950, %v2730
      %v3977 = vsel %vm3971, %v3951, %v2732
      %v3978 = vsel %vm3971, %v3952, %v2734
      %v3979 = vsel %vm3971, %v3953, %v2736
      %v3980 = vsel %vm3971, %v3954, %v2738
      %v3981 = vsel %vm3971, %v3955, %v2740
      %v3982 = vsel %vm3971, %v3956, %v2742
      %v3983 = vsel %vm3971, %v3957, %v2744
      %v3984 = vsel %vm3971, %v3958, %v2746
      %v3985 = vsel %vm3971, %v3959, %v2748
      %v3986 = vsel %vm3971, %v3960, %v2750
      %v3987 = vsel %vm3971, %v3961, %v2752
      %v3988 = vsel %vm3971, %v3962, %v2754
      %v3989 = vsel %vm3971, %v3963, %v2756
      %v3990 = vsel %vm3971, %v3964, %v2758
      %v3991 = vsel %vm3971, %v3965, %v2760
      %v3992 = vsel %vm3971, %v3966, %v2762
      %v3993 = vsel %vm3971, %v3967, %v2764
      %v3994 = vsel %vm3971, %v3968, %v2766
      %v3995 = vsel %vm3971, %v3969, %v2768
      %v3996 = vsel %vm3971, %v3970, %v2770
      %vm3997 = vcmask 97280
      %v3998 = vsel %vm3997, %v3972, %v3213
      %v3999 = vsel %vm3997, %v3973, %v3215
      %v4000 = vsel %vm3997, %v3974, %v3217
      %v4001 = vsel %vm3997, %v3975, %v3219
      %v4002 = vsel %vm3997, %v3976, %v3221
      %v4003 = vsel %vm3997, %v3977, %v3223
      %v4004 = vsel %vm3997, %v3978, %v3225
      %v4005 = vsel %vm3997, %v3979, %v3227
      %v4006 = vsel %vm3997, %v3980, %v3229
      %v4007 = vsel %vm3997, %v3981, %v3231
      %v4008 = vsel %vm3997, %v3982, %v3233
      %v4009 = vsel %vm3997, %v3983, %v3235
      %v4010 = vsel %vm3997, %v3984, %v3237
      %v4011 = vsel %vm3997, %v3985, %v3239
      %v4012 = vsel %vm3997, %v3986, %v3241
      %v4013 = vsel %vm3997, %v3987, %v3243
      %v4014 = vsel %vm3997, %v3988, %v3245
      %v4015 = vsel %vm3997, %v3989, %v3247
      %v4016 = vsel %vm3997, %v3990, %v3249
      %v4017 = vsel %vm3997, %v3991, %v3251
      %v4018 = vsel %vm3997, %v3992, %v3253
      %v4019 = vsel %vm3997, %v3993, %v3255
      %v4020 = vsel %vm3997, %v3994, %v3257
      %v4021 = vsel %vm3997, %v3995, %v3259
      %v4022 = vsel %vm3997, %v3996, %v3261
      %vm4023 = vcmask 121856
      %v4024 = vsel %vm4023, %v3998, %v3430
      %v4025 = vsel %vm4023, %v3999, %v3432
      %v4026 = vsel %vm4023, %v4000, %v3434
      %v4027 = vsel %vm4023, %v4001, %v3436
      %v4028 = vsel %vm4023, %v4002, %v3438
      %v4029 = vsel %vm4023, %v4003, %v3440
      %v4030 = vsel %vm4023, %v4004, %v3442
      %v4031 = vsel %vm4023, %v4005, %v3444
      %v4032 = vsel %vm4023, %v4006, %v3446
      %v4033 = vsel %vm4023, %v4007, %v3448
      %v4034 = vsel %vm4023, %v4008, %v3450
      %v4035 = vsel %vm4023, %v4009, %v3452
      %v4036 = vsel %vm4023, %v4010, %v3454
      %v4037 = vsel %vm4023, %v4011, %v3456
      %v4038 = vsel %vm4023, %v4012, %v3458
      %v4039 = vsel %vm4023, %v4013, %v3460
      %v4040 = vsel %vm4023, %v4014, %v3462
      %v4041 = vsel %vm4023, %v4015, %v3464
      %v4042 = vsel %vm4023, %v4016, %v3466
      %v4043 = vsel %vm4023, %v4017, %v3468
      %v4044 = vsel %vm4023, %v4018, %v3470
      %v4045 = vsel %vm4023, %v4019, %v3472
      %v4046 = vsel %vm4023, %v4020, %v3474
      %v4047 = vsel %vm4023, %v4021, %v3476
      %v4048 = vsel %vm4023, %v4022, %v3478
      %vm4049 = vcmask 146432
      %v4050 = vsel %vm4049, %v4024, %v3569
      %v4051 = vsel %vm4049, %v4025, %v3571
      %v4052 = vsel %vm4049, %v4026, %v3573
      %v4053 = vsel %vm4049, %v4027, %v3575
      %v4054 = vsel %vm4049, %v4028, %v3577
      %v4055 = vsel %vm4049, %v4029, %v3579
      %v4056 = vsel %vm4049, %v4030, %v3581
      %v4057 = vsel %vm4049, %v4031, %v3583
      %v4058 = vsel %vm4049, %v4032, %v3585
      %v4059 = vsel %vm4049, %v4033, %v3587
      %v4060 = vsel %vm4049, %v4034, %v3589
      %v4061 = vsel %vm4049, %v4035, %v3591
      %v4062 = vsel %vm4049, %v4036, %v3593
      %v4063 = vsel %vm4049, %v4037, %v3595
      %v4064 = vsel %vm4049, %v4038, %v3597
      %v4065 = vsel %vm4049, %v4039, %v3599
      %v4066 = vsel %vm4049, %v4040, %v3601
      %v4067 = vsel %vm4049, %v4041, %v3603
      %v4068 = vsel %vm4049, %v4042, %v3605
      %v4069 = vsel %vm4049, %v4043, %v3607
      %v4070 = vsel %vm4049, %v4044, %v3609
      %v4071 = vsel %vm4049, %v4045, %v3611
      %v4072 = vsel %vm4049, %v4046, %v3613
      %v4073 = vsel %vm4049, %v4047, %v3615
      %v4074 = vsel %vm4049, %v4048, %v3617
      %vm4075 = vcmask 171008
      %v4076 = vsel %vm4075, %v4050, %v3724
      %v4077 = vsel %vm4075, %v4051, %v3726
      %v4078 = vsel %vm4075, %v4052, %v3728
      %v4079 = vsel %vm4075, %v4053, %v3730
      %v4080 = vsel %vm4075, %v4054, %v3732
      %v4081 = vsel %vm4075, %v4055, %v3734
      %v4082 = vsel %vm4075, %v4056, %v3736
      %v4083 = vsel %vm4075, %v4057, %v3738
      %v4084 = vsel %vm4075, %v4058, %v3740
      %v4085 = vsel %vm4075, %v4059, %v3742
      %v4086 = vsel %vm4075, %v4060, %v3744
      %v4087 = vsel %vm4075, %v4061, %v3746
      %v4088 = vsel %vm4075, %v4062, %v3748
      %v4089 = vsel %vm4075, %v4063, %v3750
      %v4090 = vsel %vm4075, %v4064, %v3752
      %v4091 = vsel %vm4075, %v4065, %v3754
      %v4092 = vsel %vm4075, %v4066, %v3756
      %v4093 = vsel %vm4075, %v4067, %v3758
      %v4094 = vsel %vm4075, %v4068, %v3760
      %v4095 = vsel %vm4075, %v4069, %v3762
      %v4096 = vsel %vm4075, %v4070, %v3764
      %v4097 = vsel %vm4075, %v4071, %v3766
      %v4098 = vsel %vm4075, %v4072, %v3768
      %v4099 = vsel %vm4075, %v4073, %v3770
      %v4100 = vsel %vm4075, %v4074, %v3772
      %vm4101 = vcmask 195584
      %v4102 = vsel %vm4101, %v4076, %v3845
      %v4103 = vsel %vm4101, %v4077, %v3847
      %v4104 = vsel %vm4101, %v4078, %v3849
      %v4105 = vsel %vm4101, %v4079, %v3851
      %v4106 = vsel %vm4101, %v4080, %v3853
      %v4107 = vsel %vm4101, %v4081, %v3855
      %v4108 = vsel %vm4101, %v4082, %v3857
      %v4109 = vsel %vm4101, %v4083, %v3859
      %v4110 = vsel %vm4101, %v4084, %v3861
      %v4111 = vsel %vm4101, %v4085, %v3863
      %v4112 = vsel %vm4101, %v4086, %v3865
      %v4113 = vsel %vm4101, %v4087, %v3867
      %v4114 = vsel %vm4101, %v4088, %v3869
      %v4115 = vsel %vm4101, %v4089, %v3871
      %v4116 = vsel %vm4101, %v4090, %v3873
      %v4117 = vsel %vm4101, %v4091, %v3875
      %v4118 = vsel %vm4101, %v4092, %v3877
      %v4119 = vsel %vm4101, %v4093, %v3879
      %v4120 = vsel %vm4101, %v4094, %v3881
      %v4121 = vsel %vm4101, %v4095, %v3883
      %v4122 = vsel %vm4101, %v4096, %v3885
      %v4123 = vsel %vm4101, %v4097, %v3887
      %v4124 = vsel %vm4101, %v4098, %v3889
      %v4125 = vsel %vm4101, %v4099, %v3891
      %v4126 = vsel %vm4101, %v4100, %v3893
      %v4127 = vld [vmem:[%s1] sm:$0x1f]
      %v4128 = vld [vmem:[%s2] sm:$0x1f]
      %4130 = vset.pattern.permute.xlu0 0
      %4131 = vperm.xlu0 %4130, %v4128
      %v4132 = vpop.permute.xlu0 %4131
      %vm4134 = vcmask 220160
      %v4136 = vsel %vm4134, %v4127, 0
      %v4139 = vsel %vm4134, %v4102, 0
      %v4142 = vsel %vm4134, %v4103, 0
      %v4145 = vsel %vm4134, %v4104, 0
      %v4148 = vsel %vm4134, %v4105, 0
      %v4151 = vsel %vm4134, %v4106, 0
      %v4154 = vsel %vm4134, %v4107, 0
      %v4157 = vsel %vm4134, %v4108, 0
      %v4160 = vsel %vm4134, %v4109, 0
      %v4163 = vsel %vm4134, %v4110, 0
      %v4166 = vsel %vm4134, %v4111, 0
      %v4169 = vsel %vm4134, %v4112, 0
      %v4172 = vsel %vm4134, %v4113, 0
      %v4175 = vsel %vm4134, %v4114, 0
      %v4178 = vsel %vm4134, %v4115, 0
      %v4181 = vsel %vm4134, %v4116, 0
      %v4184 = vsel %vm4134, %v4117, 0
      %v4187 = vsel %vm4134, %v4118, 0
      %v4190 = vsel %vm4134, %v4119, 0
      %v4193 = vsel %vm4134, %v4120, 0
      %v4196 = vsel %vm4134, %v4121, 0
      %v4199 = vsel %vm4134, %v4122, 0
      %v4202 = vsel %vm4134, %v4123, 0
      %v4205 = vsel %vm4134, %v4124, 0
      %v4208 = vsel %vm4134, %v4125, 0
      %v4211 = vsel %vm4134, %v4126, 0
      %4213 = vmatprep.subr.mxu0 0.0
      %4214 = vmatpush1.xpose.msra.mxu0 %v4184
      %4215 = vmatprep.subr.mxu0 0.0
      %4216 = vmatpush1.xpose.msra.mxu0 %v4181
      %4217 = vmatprep.subr.mxu0 0.0
      %4218 = vmatpush1.xpose.msra.mxu0 %v4178
      %4219 = vmatprep.subr.mxu0 0.0
      %4220 = vmatpush1.xpose.msra.mxu0 %v4175
      %4221 = vmatprep.subr.mxu0 0.0
      %4222 = vmatpush1.xpose.msra.mxu0 %v4172
      %4223 = vmatprep.subr.mxu0 0.0
      %4224 = vmatpush1.xpose.msra.mxu0 %v4169
      %4225 = vmatprep.subr.mxu0 0.0
      %4226 = vmatpush1.xpose.msra.mxu0 %v4166
      %4227 = vmatprep.subr.mxu0 0.0
      %4228 = vmatpush1.xpose.msra.mxu0 %v4163
      %4229 = vmatprep.subr.mxu0 0.0
      %4230 = vmatpush1.xpose.msra.mxu0 %v4160
      %4231 = vmatprep.subr.mxu0 0.0
      %4232 = vmatpush1.xpose.msra.mxu0 %v4157
      %4233 = vmatprep.subr.mxu0 0.0
      %4234 = vmatpush1.xpose.msra.mxu0 %v4154
      %4235 = vmatprep.subr.mxu0 0.0
      %4236 = vmatpush1.xpose.msra.mxu0 %v4151
      %4237 = vmatprep.subr.mxu0 0.0
      %4238 = vmatpush1.xpose.msra.mxu0 %v4148
      %4239 = vmatprep.subr.mxu0 0.0
      %4240 = vmatpush1.xpose.msra.mxu0 %v4145
      %4241 = vmatprep.subr.mxu0 0.0
      %4242 = vmatpush1.xpose.msra.mxu0 %v4142
      %4243 = vmatprep.subr.mxu0 0.0
      %4244 = vmatpush1.xpose.msra.mxu0 %v4139
      %4245 = vmatprep.subr.mxu0 0.0
      %4246 = vmatpush2.xpose.msra.mxu0 0.0
      %4247 = vmatprep.subr.mxu0 0.0
      %4248 = vmatpush2.xpose.msra.mxu0 0.0
      %4249 = vmatprep.subr.mxu0 0.0
      %4250 = vmatpush2.xpose.msra.mxu0 0.0
      %4251 = vmatprep.subr.mxu0 0.0
      %4252 = vmatpush2.xpose.msra.mxu0 0.0
      %4253 = vmatprep.subr.mxu0 0.0
      %4254 = vmatpush2.xpose.msra.mxu0 0.0
      %4255 = vmatprep.subr.mxu0 0.0
      %4256 = vmatpush2.xpose.msra.mxu0 0.0
      %4257 = vmatprep.subr.mxu0 0.0
      %4258 = vmatpush2.xpose.msra.mxu0 0.0
      %4259 = vmatprep.subr.mxu0 0.0
      %4260 = vmatpush2.xpose.msra.mxu0 %v4211
      %4261 = vmatprep.subr.mxu0 0.0
      %4262 = vmatpush2.xpose.msra.mxu0 %v4208
      %4263 = vmatprep.subr.mxu0 0.0
      %4264 = vmatpush2.xpose.msra.mxu0 %v4205
      %4265 = vmatprep.subr.mxu0 0.0
      %4266 = vmatpush2.xpose.msra.mxu0 %v4202
      %4267 = vmatprep.subr.mxu0 0.0
      %4268 = vmatpush2.xpose.msra.mxu0 %v4199
      %4269 = vmatprep.subr.mxu0 0.0
      %4270 = vmatpush2.xpose.msra.mxu0 %v4196
      %4271 = vmatprep.subr.mxu0 0.0
      %4272 = vmatpush2.xpose.msra.mxu0 %v4193
      %4273 = vmatprep.subr.mxu0 0.0
      %4274 = vmatpush2.xpose.msra.mxu0 %v4190
      %4275 = vmatprep.subr.mxu0 0.0
      %4276 = vmatpush2.xpose.msra.mxu0 %v4187
      %4277 = vmatprep.mubr.f32.mxu0 0.0
      %4278 = vmatmul.mubr.f32.gmra.mxu0 %v4136
      %v4279 = vpop.f32.mrf.mxu0
      %v4280 = vadd.f32 %v4132, %v4279
      %v4281 = vpop.f32.mrf.mxu0
      %v4282 = vadd.f32 %v4132, %v4281
      %4283 = vdwg.mxu0
      %4284 = vst [vmem:[%s170] sm:$0x1f] %v4280
      %vm4285 = vcmask 552960
      %4286 = vst.msk [vmem:[%s170 + $0x8] sm:$0x1f] %vm4285, %v4282
      %p4287 = scmp.lt.s32.totalorder %s14, 1
      %s4288 = scalar_select %p4287, %s14, 1
      %s4289 = smul.addr %s4288, 2
      %s4290 = smul.addr %s4289, 8
      %s4291 = scalar_lea.vmem %s3, %s4290
      // Predicated region
      $region33: #{conv2d_pallas.1} parent=31 // pred_check
        %p4292 = pneg %p100
      $region34: #{conv2d_pallas.1} parent=31 // pred_check_branch
        %4294 = sbr.rel (%p4292) target = $region36
      $region35: #{conv2d_pallas.1} parent=31 // pred_region
        _
      $region36: #{conv2d_pallas.1} parent=31 // pred_fallthru
        _
    $region32: #{conv2d_pallas.1} parent=5 // pred_fallthru
      _
    %p4295 = scmp.le.s32.totalorder 2, %s9
    // Predicated region
    $region37: #{conv2d_pallas.1} parent=5 // pred_check
      %p4296 = pneg %p4295
    $region38: #{conv2d_pallas.1} parent=5 // pred_check_branch
      %4298 = sbr.rel (%p4296) target = $region40
    $region39: #{conv2d_pallas.1} parent=5 // pred_region
      %s4299 = ssub.s32 %s9, 2
      // Predicated region
      $region41: #{conv2d_pallas.1} parent=39 // pred_check
        %p4300 = pneg %p106
      $region42: #{conv2d_pallas.1} parent=39 // pred_check_branch
        %4302 = sbr.rel (%p4300) target = $region44
      $region43: #{conv2d_pallas.1} parent=39 // pred_region
        %p4303 = scmp.lt.s32.totalorder %s15, 1
        %s4304 = scalar_select %p4303, %s15, 1
        %s4305 = smul.addr %s4304, 2
        %s4306 = smul.addr %s4305, 8
        %s4307 = scalar_lea.vmem %s3, %s4306
      $region44: #{conv2d_pallas.1} parent=39 // pred_fallthru
        _
    $region40: #{conv2d_pallas.1} parent=5 // pred_fallthru
      _
  $region6: #{conv2d_pallas.1} parent=0 // loop_footer
    %s13 = sadd.s32 1, %s9
  $region7: #{conv2d_pallas.1} parent=0 // loop_footer_branch
    %8 = sbr.rel target = $region3
  $region8: #{conv2d_pallas.1} parent=0 // loop_exit
    _

</llo_original>
